<compile_context>
chip_gen: v7x
topology: tpu7x:2x2x1
jax: 0.10.0
libtpu: 0.0.40
codegen_flags: <defaults>
</compile_context>

<pallas_src>
import functools

import jax
import jax.numpy as jnp
from jax.experimental import pallas as pl
from jax.experimental.pallas import tpu as pltpu


_RANK_COUNT_MAX_HW = 32  # below this, O(HW) rank passes beat the 32 bit passes


def _median_rank_count(x, k):
    """Lower median via direct rank counting (tiny HW only).

    x: (Bt, C, HW) f32. Returns (Bt, C) f32.
    Element c is the k-th smallest iff count(< c) <= k < count(<= c).
    Both counts are fused into one int32 reduction (lt low 16 bits, le high).
    """
    cand = x[:, :, :, None]       # (Bt, C, HW, 1)   candidates
    basis = x[:, :, None, :]      # (Bt, C, 1, HW)   comparison basis
    fused = jnp.sum(
        (basis < cand).astype(jnp.int32)
        + ((basis <= cand).astype(jnp.int32) << 16),
        axis=-1)                  # (Bt, C, HW)
    lt = fused & 0xFFFF
    le = fused >> 16
    is_med = jnp.logical_and(lt <= k, k < le)
    return jnp.max(jnp.where(is_med, x, -jnp.inf), axis=-1)


def _median_bit_select(x, k):
    """Lower median via 32-pass bit-select (radix select) on monotone int keys.

    x: (Bt, C, HW) f32. Returns (Bt, C) f32.

    key = bits                      for x >= 0
        = bits ^ 0x7FFFFFFF         for x <  0
    is a monotone signed-int32 image of the float order. The k-th smallest key
    V satisfies:  t <= V  <=>  count(key < t) <= k, so V is built greedily from
    the sign bit down with one O(HW) count per bit. The float value is then
    recovered by selecting the element whose key equals V (key<->value is a
    bijection), avoiding an int->float bitcast on the small result.
    """
    bits = pltpu.bitcast(x, jnp.int32)
    keys = jnp.where(bits < 0, bits ^ jnp.int32(0x7FFFFFFF), bits)

    # Sign bit: is the k-th smallest key negative?
    neg = jnp.sum((keys < 0).astype(jnp.int32), axis=-1)            # (Bt, C)
    result = jnp.where(neg <= k, jnp.int32(0), jnp.int32(-(2 ** 31)))

    # Remaining 31 magnitude bits, MSB -> LSB (static constants, unrolled;
    # each iteration depends on the previous through `result`).
    for b in range(30, -1, -1):
        t = result | jnp.int32(1 << b)                               # (Bt, C)
        c = jnp.sum((keys < t[:, :, None]).astype(jnp.int32), axis=-1)
        result = jnp.where(c <= k, t, result)

    return jnp.max(jnp.where(keys == result[:, :, None], x, -jnp.inf), axis=-1)


def _channel_attention_kernel(x_ref, w1t_ref, b1_ref, w2t_ref, b2_ref, o_ref,
                              *, HW):
    x = x_ref[...].astype(jnp.float32)                # (Bt, C, HW) f32 math

    # ---- global pools, lane-dense on C ----
    avg = jnp.mean(x, axis=-1)                        # (Bt, C)
    mx = jnp.max(x, axis=-1)                          # (Bt, C)

    k = (HW - 1) // 2                                 # torch.median lower median
    if HW <= _RANK_COUNT_MAX_HW:
        med = _median_rank_count(x, k)
    else:
        med = _median_bit_select(x, k)                # (Bt, C)

    # ---- fc(avg) + fc(max) + fc(med); the second conv is linear, so the W2
    # matmul and its bias are fused (out = W2 @ (sum of relus) + 3*b2). Three
    # separate tiny W1 matmuls avoid sublane-misaligned concat/slice.
    w1t = w1t_ref[...]
    b1 = b1_ref[...]

    def branch(v):
        return jnp.maximum(
            jnp.dot(v, w1t, preferred_element_type=jnp.float32) + b1, 0.0)

    h = branch(avg) + branch(mx) + branch(med)                        # (Bt, Cr)
    out = jnp.dot(h, w2t_ref[...], preferred_element_type=jnp.float32)
    out = jax.nn.sigmoid(out + 3.0 * b2_ref[...])                     # (Bt, C)

    o_ref[:, 0, :] = out.astype(o_ref.dtype)


def channel_attention(x, w1, b1, w2, b2):
    """x: (B, C, H, W); w1: (Cr, C); b1: (Cr,); w2: (C, Cr); b2: (C,).

    Returns (B, C, 1, 1) float32, matching the PyTorch module output.
    """
    B, C, H, W = x.shape
    HW = H * W
    Cr = w1.shape[0]

    xf = x.reshape(B, C, HW)                  # keep native dtype (bf16 stays bf16)
    itemsize = jnp.dtype(x.dtype).itemsize

    # ---- VMEM accounting (v7x: 64 MiB per core; v5e/v6e: 128 MiB) ----
    try:
        vmem_cap = int(pltpu.get_tpu_info().vmem_capacity_bytes)
    except Exception:
        vmem_cap = 64 << 20                   # assume the smallest (v7x per-TC)
    vmem_limit = max(16 << 20, min(int(vmem_cap * 0.8), 100 << 20))

    # Per batch-row working set: double-buffered native tile + f32 copy +
    # int32 keys + one live per-pass compare/select intermediate (+ slack).
    row_bytes = C * HW * (2 * itemsize + 16)
    budget = vmem_limit // 2                  # headroom for compiler temps
    Bt = max(1, min(B, budget // max(row_bytes, 1)))
    gB = int(pl.cdiv(B, Bt))

    # If we have to split anyway, prefer an even number of grid steps so the
    # two v7x TensorCores get balanced work (best effort; no split is forced
    # on single-TensorCore chips when everything fits in one tile).
    if gB > 1 and gB % 2 == 1:
        Bt2 = int(pl.cdiv(B, gB + 1))
        if Bt2 >= 1 and int(pl.cdiv(B, Bt2)) % 2 == 0:
            Bt = Bt2
            gB = int(pl.cdiv(B, Bt))

    Bp = gB * Bt
    if Bp != B:                               # pad batch so blocks tile exactly
        xf = jnp.pad(xf, ((0, Bp - B), (0, 0), (0, 0)))

    # Lane-oriented weights: (C, Cr) and (Cr, C); biases as broadcast rows.
    w1t = jnp.asarray(w1, jnp.float32).T      # (C, Cr)
    w2t = jnp.asarray(w2, jnp.float32).T      # (Cr, C)
    b1r = jnp.asarray(b1, jnp.float32).reshape(1, Cr)
    b2r = jnp.asarray(b2, jnp.float32).reshape(1, C)

    kernel = functools.partial(_channel_attention_kernel, HW=HW)

    out = pl.pallas_call(
        kernel,
        out_shape=jax.ShapeDtypeStruct((Bp, 1, C), jnp.float32),
        grid_spec=pltpu.PrefetchScalarGridSpec(
            num_scalar_prefetch=0,
            grid=(gB,),
            in_specs=[
                pl.BlockSpec((Bt, C, HW), lambda b: (b, 0, 0)),   # x batch tile
                pl.BlockSpec((C, Cr), lambda b: (0, 0)),          # W1^T
                pl.BlockSpec((1, Cr), lambda b: (0, 0)),          # b1 row
                pl.BlockSpec((Cr, C), lambda b: (0, 0)),          # W2^T
                pl.BlockSpec((1, C), lambda b: (0, 0)),           # b2 row
            ],
            out_specs=pl.BlockSpec((Bt, 1, C), lambda b: (b, 0, 0)),  # lane-dense C
        ),
        compiler_params=pltpu.CompilerParams(
            dimension_semantics=("parallel",),
            vmem_limit_bytes=int(vmem_limit),
        ),
    )(xf, w1t, b1r, w2t, b2r)

    return out.reshape(Bp, C)[:B].reshape(B, C, 1, 1)


if __name__ == "__main__":
    # Small shapes consistent with the module (channels >= reduction).
    B, C, H, W = 2, 32, 16, 16
    reduction = 16
    Cr = C // reduction  # = 2

    key = jax.random.PRNGKey(0)
    kx, k1, kb1, k2, kb2 = jax.random.split(key, 5)
    x = jax.random.normal(kx, (B, C, H, W), jnp.float32)
    w1 = 0.1 * jax.random.normal(k1, (Cr, C), jnp.float32)   # Conv2d(C, Cr, 1) weight
    b1 = 0.1 * jax.random.normal(kb1, (Cr,), jnp.float32)
    w2 = 0.1 * jax.random.normal(k2, (C, Cr), jnp.float32)   # Conv2d(Cr, C, 1) weight
    b2 = 0.1 * jax.random.normal(kb2, (C,), jnp.float32)

    def reference(xr_in):
        xr = xr_in.reshape(xr_in.shape[0], xr_in.shape[1], -1)
        avg = xr.mean(-1)
        mx = xr.max(-1)
        med = jnp.sort(xr, axis=-1)[..., (xr.shape[-1] - 1) // 2]  # lower median

        def fc(v):  # v: (B, C)
            return jnp.maximum(v @ w1.T + b1, 0.0) @ w2.T + b2

        return jax.nn.sigmoid(fc(avg) + fc(mx) + fc(med)).reshape(
            xr_in.shape[0], xr_in.shape[1], 1, 1)

    # Main path: 16x16 spatial -> 32-pass bit-select median.
    out = jax.block_until_ready(channel_attention(x, w1, b1, w2, b2))
    ref = reference(x)
    assert out.shape == (B, C, 1, 1)
    assert jnp.allclose(out, ref, atol=1e-5, rtol=1e-5), "mismatch vs reference"

    # Tiny-HW fallback path: 5x5 spatial -> direct rank-count median.
    xs = jax.random.normal(jax.random.PRNGKey(1), (B, C, 5, 5), jnp.float32)
    out_s = jax.block_until_ready(channel_attention(xs, w1, b1, w2, b2))
    assert jnp.allclose(out_s, reference(xs), atol=1e-5, rtol=1e-5), \
        "mismatch vs reference (tiny-HW path)"

    print("KERNEL_OK")
</pallas_src>

<mosaic_0001>
module attributes {stable_mosaic.version = 11 : i64} {
  func.func @_channel_attention_kernel(%arg0: i32, %arg1: memref<2x32x256xf32, #tpu.memory_space<vmem>>, %arg2: memref<32x2xf32, #tpu.memory_space<vmem>>, %arg3: memref<1x2xf32, #tpu.memory_space<vmem>>, %arg4: memref<2x32xf32, #tpu.memory_space<vmem>>, %arg5: memref<1x32xf32, #tpu.memory_space<vmem>>, %arg6: memref<2x1x32xf32, #tpu.memory_space<vmem>>) attributes {dimension_semantics = [#tpu.dimension_semantics<parallel>], iteration_bounds = array<i64: 1>, scalar_prefetch = 0 : i64, scratch_operands = 0 : i64, tpu.core_type = #tpu.core_type<tc>, window_params = [{transform_indices = @transform_0, window_bounds = array<i64: 2, 32, 256>}, {pipeline_mode = #tpu.pipeline_mode<synchronous>, transform_indices = @transform_1, window_bounds = array<i64: 32, 2>}, {pipeline_mode = #tpu.pipeline_mode<synchronous>, transform_indices = @transform_2, window_bounds = array<i64: 1, 2>}, {pipeline_mode = #tpu.pipeline_mode<synchronous>, transform_indices = @transform_3, window_bounds = array<i64: 2, 32>}, {pipeline_mode = #tpu.pipeline_mode<synchronous>, transform_indices = @transform_4, window_bounds = array<i64: 1, 32>}, {transform_indices = @transform_5, window_bounds = array<i64: 2, 1, 32>}]} {
    %c0 = arith.constant 0 : index
    %c0_0 = arith.constant 0 : index
    %c0_1 = arith.constant 0 : index
    %0 = vector.load %arg1[%c0, %c0_0, %c0_1] : memref<2x32x256xf32, #tpu.memory_space<vmem>>, vector<2x32x256xf32>
    %cst = arith.constant dense<0.000000e+00> : vector<2x32xf32>
    %1 = vector.multi_reduction <add>, %0, %cst [2] : vector<2x32x256xf32> to vector<2x32xf32>
    %cst_2 = arith.constant 2.560000e+02 : f32
    %2 = vector.broadcast %cst_2 : f32 to vector<2x32xf32>
    %3 = arith.divf %1, %2 : vector<2x32xf32>
    %cst_3 = arith.constant dense<0xFF800000> : vector<2x32xf32>
    %4 = vector.multi_reduction <maximumf>, %0, %cst_3 [2] : vector<2x32x256xf32> to vector<2x32xf32>
    %5 = tpu.bitcast %0 : vector<2x32x256xf32> -> vector<2x32x256xi32>
    %c0_i32 = arith.constant 0 : i32
    %6 = vector.broadcast %c0_i32 : i32 to vector<2x32x256xi32>
    %7 = arith.cmpi slt, %5, %6 : vector<2x32x256xi32>
    %c2147483647_i32 = arith.constant 2147483647 : i32
    %8 = vector.broadcast %c2147483647_i32 : i32 to vector<2x32x256xi32>
    %9 = arith.xori %5, %8 : vector<2x32x256xi32>
    %10 = arith.select %7, %9, %5 : vector<2x32x256xi1>, vector<2x32x256xi32>
    %c0_i32_4 = arith.constant 0 : i32
    %11 = vector.broadcast %c0_i32_4 : i32 to vector<2x32x256xi32>
    %12 = arith.cmpi slt, %10, %11 : vector<2x32x256xi32>
    %13 = arith.extui %12 : vector<2x32x256xi1> to vector<2x32x256xi32>
    %cst_5 = arith.constant dense<0> : vector<2x32xi32>
    %14 = vector.multi_reduction <add>, %13, %cst_5 [2] : vector<2x32x256xi32> to vector<2x32xi32>
    %c127_i32 = arith.constant 127 : i32
    %15 = vector.broadcast %c127_i32 : i32 to vector<2x32xi32>
    %16 = arith.cmpi sle, %14, %15 : vector<2x32xi32>
    %c0_i32_6 = arith.constant 0 : i32
    %c-2147483648_i32 = arith.constant -2147483648 : i32
    %17 = vector.broadcast %c0_i32_6 : i32 to vector<2x32xi32>
    %18 = vector.broadcast %c-2147483648_i32 : i32 to vector<2x32xi32>
    %19 = arith.select %16, %17, %18 : vector<2x32xi1>, vector<2x32xi32>
    %c1073741824_i32 = arith.constant 1073741824 : i32
    %20 = vector.broadcast %c1073741824_i32 : i32 to vector<2x32xi32>
    %21 = arith.ori %19, %20 : vector<2x32xi32>
    %22 = vector.shape_cast %21 : vector<2x32xi32> to vector<2x32x1xi32>
    %23 = vector.broadcast %22 : vector<2x32x1xi32> to vector<2x32x256xi32>
    %24 = arith.cmpi slt, %10, %23 : vector<2x32x256xi32>
    %25 = arith.extui %24 : vector<2x32x256xi1> to vector<2x32x256xi32>
    %cst_7 = arith.constant dense<0> : vector<2x32xi32>
    %26 = vector.multi_reduction <add>, %25, %cst_7 [2] : vector<2x32x256xi32> to vector<2x32xi32>
    %c127_i32_8 = arith.constant 127 : i32
    %27 = vector.broadcast %c127_i32_8 : i32 to vector<2x32xi32>
    %28 = arith.cmpi sle, %26, %27 : vector<2x32xi32>
    %29 = arith.select %28, %21, %19 : vector<2x32xi1>, vector<2x32xi32>
    %c536870912_i32 = arith.constant 536870912 : i32
    %30 = vector.broadcast %c536870912_i32 : i32 to vector<2x32xi32>
    %31 = arith.ori %29, %30 : vector<2x32xi32>
    %32 = vector.shape_cast %31 : vector<2x32xi32> to vector<2x32x1xi32>
    %33 = vector.broadcast %32 : vector<2x32x1xi32> to vector<2x32x256xi32>
    %34 = arith.cmpi slt, %10, %33 : vector<2x32x256xi32>
    %35 = arith.extui %34 : vector<2x32x256xi1> to vector<2x32x256xi32>
    %cst_9 = arith.constant dense<0> : vector<2x32xi32>
    %36 = vector.multi_reduction <add>, %35, %cst_9 [2] : vector<2x32x256xi32> to vector<2x32xi32>
    %c127_i32_10 = arith.constant 127 : i32
    %37 = vector.broadcast %c127_i32_10 : i32 to vector<2x32xi32>
    %38 = arith.cmpi sle, %36, %37 : vector<2x32xi32>
    %39 = arith.select %38, %31, %29 : vector<2x32xi1>, vector<2x32xi32>
    %c268435456_i32 = arith.constant 268435456 : i32
    %40 = vector.broadcast %c268435456_i32 : i32 to vector<2x32xi32>
    %41 = arith.ori %39, %40 : vector<2x32xi32>
    %42 = vector.shape_cast %41 : vector<2x32xi32> to vector<2x32x1xi32>
    %43 = vector.broadcast %42 : vector<2x32x1xi32> to vector<2x32x256xi32>
    %44 = arith.cmpi slt, %10, %43 : vector<2x32x256xi32>
    %45 = arith.extui %44 : vector<2x32x256xi1> to vector<2x32x256xi32>
    %cst_11 = arith.constant dense<0> : vector<2x32xi32>
    %46 = vector.multi_reduction <add>, %45, %cst_11 [2] : vector<2x32x256xi32> to vector<2x32xi32>
    %c127_i32_12 = arith.constant 127 : i32
    %47 = vector.broadcast %c127_i32_12 : i32 to vector<2x32xi32>
    %48 = arith.cmpi sle, %46, %47 : vector<2x32xi32>
    %49 = arith.select %48, %41, %39 : vector<2x32xi1>, vector<2x32xi32>
    %c134217728_i32 = arith.constant 134217728 : i32
    %50 = vector.broadcast %c134217728_i32 : i32 to vector<2x32xi32>
    %51 = arith.ori %49, %50 : vector<2x32xi32>
    %52 = vector.shape_cast %51 : vector<2x32xi32> to vector<2x32x1xi32>
    %53 = vector.broadcast %52 : vector<2x32x1xi32> to vector<2x32x256xi32>
    %54 = arith.cmpi slt, %10, %53 : vector<2x32x256xi32>
    %55 = arith.extui %54 : vector<2x32x256xi1> to vector<2x32x256xi32>
    %cst_13 = arith.constant dense<0> : vector<2x32xi32>
    %56 = vector.multi_reduction <add>, %55, %cst_13 [2] : vector<2x32x256xi32> to vector<2x32xi32>
    %c127_i32_14 = arith.constant 127 : i32
    %57 = vector.broadcast %c127_i32_14 : i32 to vector<2x32xi32>
    %58 = arith.cmpi sle, %56, %57 : vector<2x32xi32>
    %59 = arith.select %58, %51, %49 : vector<2x32xi1>, vector<2x32xi32>
    %c67108864_i32 = arith.constant 67108864 : i32
    %60 = vector.broadcast %c67108864_i32 : i32 to vector<2x32xi32>
    %61 = arith.ori %59, %60 : vector<2x32xi32>
    %62 = vector.shape_cast %61 : vector<2x32xi32> to vector<2x32x1xi32>
    %63 = vector.broadcast %62 : vector<2x32x1xi32> to vector<2x32x256xi32>
    %64 = arith.cmpi slt, %10, %63 : vector<2x32x256xi32>
    %65 = arith.extui %64 : vector<2x32x256xi1> to vector<2x32x256xi32>
    %cst_15 = arith.constant dense<0> : vector<2x32xi32>
    %66 = vector.multi_reduction <add>, %65, %cst_15 [2] : vector<2x32x256xi32> to vector<2x32xi32>
    %c127_i32_16 = arith.constant 127 : i32
    %67 = vector.broadcast %c127_i32_16 : i32 to vector<2x32xi32>
    %68 = arith.cmpi sle, %66, %67 : vector<2x32xi32>
    %69 = arith.select %68, %61, %59 : vector<2x32xi1>, vector<2x32xi32>
    %c33554432_i32 = arith.constant 33554432 : i32
    %70 = vector.broadcast %c33554432_i32 : i32 to vector<2x32xi32>
    %71 = arith.ori %69, %70 : vector<2x32xi32>
    %72 = vector.shape_cast %71 : vector<2x32xi32> to vector<2x32x1xi32>
    %73 = vector.broadcast %72 : vector<2x32x1xi32> to vector<2x32x256xi32>
    %74 = arith.cmpi slt, %10, %73 : vector<2x32x256xi32>
    %75 = arith.extui %74 : vector<2x32x256xi1> to vector<2x32x256xi32>
    %cst_17 = arith.constant dense<0> : vector<2x32xi32>
    %76 = vector.multi_reduction <add>, %75, %cst_17 [2] : vector<2x32x256xi32> to vector<2x32xi32>
    %c127_i32_18 = arith.constant 127 : i32
    %77 = vector.broadcast %c127_i32_18 : i32 to vector<2x32xi32>
    %78 = arith.cmpi sle, %76, %77 : vector<2x32xi32>
    %79 = arith.select %78, %71, %69 : vector<2x32xi1>, vector<2x32xi32>
    %c16777216_i32 = arith.constant 16777216 : i32
    %80 = vector.broadcast %c16777216_i32 : i32 to vector<2x32xi32>
    %81 = arith.ori %79, %80 : vector<2x32xi32>
    %82 = vector.shape_cast %81 : vector<2x32xi32> to vector<2x32x1xi32>
    %83 = vector.broadcast %82 : vector<2x32x1xi32> to vector<2x32x256xi32>
    %84 = arith.cmpi slt, %10, %83 : vector<2x32x256xi32>
    %85 = arith.extui %84 : vector<2x32x256xi1> to vector<2x32x256xi32>
    %cst_19 = arith.constant dense<0> : vector<2x32xi32>
    %86 = vector.multi_reduction <add>, %85, %cst_19 [2] : vector<2x32x256xi32> to vector<2x32xi32>
    %c127_i32_20 = arith.constant 127 : i32
    %87 = vector.broadcast %c127_i32_20 : i32 to vector<2x32xi32>
    %88 = arith.cmpi sle, %86, %87 : vector<2x32xi32>
    %89 = arith.select %88, %81, %79 : vector<2x32xi1>, vector<2x32xi32>
    %c8388608_i32 = arith.constant 8388608 : i32
    %90 = vector.broadcast %c8388608_i32 : i32 to vector<2x32xi32>
    %91 = arith.ori %89, %90 : vector<2x32xi32>
    %92 = vector.shape_cast %91 : vector<2x32xi32> to vector<2x32x1xi32>
    %93 = vector.broadcast %92 : vector<2x32x1xi32> to vector<2x32x256xi32>
    %94 = arith.cmpi slt, %10, %93 : vector<2x32x256xi32>
    %95 = arith.extui %94 : vector<2x32x256xi1> to vector<2x32x256xi32>
    %cst_21 = arith.constant dense<0> : vector<2x32xi32>
    %96 = vector.multi_reduction <add>, %95, %cst_21 [2] : vector<2x32x256xi32> to vector<2x32xi32>
    %c127_i32_22 = arith.constant 127 : i32
    %97 = vector.broadcast %c127_i32_22 : i32 to vector<2x32xi32>
    %98 = arith.cmpi sle, %96, %97 : vector<2x32xi32>
    %99 = arith.select %98, %91, %89 : vector<2x32xi1>, vector<2x32xi32>
    %c4194304_i32 = arith.constant 4194304 : i32
    %100 = vector.broadcast %c4194304_i32 : i32 to vector<2x32xi32>
    %101 = arith.ori %99, %100 : vector<2x32xi32>
    %102 = vector.shape_cast %101 : vector<2x32xi32> to vector<2x32x1xi32>
    %103 = vector.broadcast %102 : vector<2x32x1xi32> to vector<2x32x256xi32>
    %104 = arith.cmpi slt, %10, %103 : vector<2x32x256xi32>
    %105 = arith.extui %104 : vector<2x32x256xi1> to vector<2x32x256xi32>
    %cst_23 = arith.constant dense<0> : vector<2x32xi32>
    %106 = vector.multi_reduction <add>, %105, %cst_23 [2] : vector<2x32x256xi32> to vector<2x32xi32>
    %c127_i32_24 = arith.constant 127 : i32
    %107 = vector.broadcast %c127_i32_24 : i32 to vector<2x32xi32>
    %108 = arith.cmpi sle, %106, %107 : vector<2x32xi32>
    %109 = arith.select %108, %101, %99 : vector<2x32xi1>, vector<2x32xi32>
    %c2097152_i32 = arith.constant 2097152 : i32
    %110 = vector.broadcast %c2097152_i32 : i32 to vector<2x32xi32>
    %111 = arith.ori %109, %110 : vector<2x32xi32>
    %112 = vector.shape_cast %111 : vector<2x32xi32> to vector<2x32x1xi32>
    %113 = vector.broadcast %112 : vector<2x32x1xi32> to vector<2x32x256xi32>
    %114 = arith.cmpi slt, %10, %113 : vector<2x32x256xi32>
    %115 = arith.extui %114 : vector<2x32x256xi1> to vector<2x32x256xi32>
    %cst_25 = arith.constant dense<0> : vector<2x32xi32>
    %116 = vector.multi_reduction <add>, %115, %cst_25 [2] : vector<2x32x256xi32> to vector<2x32xi32>
    %c127_i32_26 = arith.constant 127 : i32
    %117 = vector.broadcast %c127_i32_26 : i32 to vector<2x32xi32>
    %118 = arith.cmpi sle, %116, %117 : vector<2x32xi32>
    %119 = arith.select %118, %111, %109 : vector<2x32xi1>, vector<2x32xi32>
    %c1048576_i32 = arith.constant 1048576 : i32
    %120 = vector.broadcast %c1048576_i32 : i32 to vector<2x32xi32>
    %121 = arith.ori %119, %120 : vector<2x32xi32>
    %122 = vector.shape_cast %121 : vector<2x32xi32> to vector<2x32x1xi32>
    %123 = vector.broadcast %122 : vector<2x32x1xi32> to vector<2x32x256xi32>
    %124 = arith.cmpi slt, %10, %123 : vector<2x32x256xi32>
    %125 = arith.extui %124 : vector<2x32x256xi1> to vector<2x32x256xi32>
    %cst_27 = arith.constant dense<0> : vector<2x32xi32>
    %126 = vector.multi_reduction <add>, %125, %cst_27 [2] : vector<2x32x256xi32> to vector<2x32xi32>
    %c127_i32_28 = arith.constant 127 : i32
    %127 = vector.broadcast %c127_i32_28 : i32 to vector<2x32xi32>
    %128 = arith.cmpi sle, %126, %127 : vector<2x32xi32>
    %129 = arith.select %128, %121, %119 : vector<2x32xi1>, vector<2x32xi32>
    %c524288_i32 = arith.constant 524288 : i32
    %130 = vector.broadcast %c524288_i32 : i32 to vector<2x32xi32>
    %131 = arith.ori %129, %130 : vector<2x32xi32>
    %132 = vector.shape_cast %131 : vector<2x32xi32> to vector<2x32x1xi32>
    %133 = vector.broadcast %132 : vector<2x32x1xi32> to vector<2x32x256xi32>
    %134 = arith.cmpi slt, %10, %133 : vector<2x32x256xi32>
    %135 = arith.extui %134 : vector<2x32x256xi1> to vector<2x32x256xi32>
    %cst_29 = arith.constant dense<0> : vector<2x32xi32>
    %136 = vector.multi_reduction <add>, %135, %cst_29 [2] : vector<2x32x256xi32> to vector<2x32xi32>
    %c127_i32_30 = arith.constant 127 : i32
    %137 = vector.broadcast %c127_i32_30 : i32 to vector<2x32xi32>
    %138 = arith.cmpi sle, %136, %137 : vector<2x32xi32>
    %139 = arith.select %138, %131, %129 : vector<2x32xi1>, vector<2x32xi32>
    %c262144_i32 = arith.constant 262144 : i32
    %140 = vector.broadcast %c262144_i32 : i32 to vector<2x32xi32>
    %141 = arith.ori %139, %140 : vector<2x32xi32>
    %142 = vector.shape_cast %141 : vector<2x32xi32> to vector<2x32x1xi32>
    %143 = vector.broadcast %142 : vector<2x32x1xi32> to vector<2x32x256xi32>
    %144 = arith.cmpi slt, %10, %143 : vector<2x32x256xi32>
    %145 = arith.extui %144 : vector<2x32x256xi1> to vector<2x32x256xi32>
    %cst_31 = arith.constant dense<0> : vector<2x32xi32>
    %146 = vector.multi_reduction <add>, %145, %cst_31 [2] : vector<2x32x256xi32> to vector<2x32xi32>
    %c127_i32_32 = arith.constant 127 : i32
    %147 = vector.broadcast %c127_i32_32 : i32 to vector<2x32xi32>
    %148 = arith.cmpi sle, %146, %147 : vector<2x32xi32>
    %149 = arith.select %148, %141, %139 : vector<2x32xi1>, vector<2x32xi32>
    %c131072_i32 = arith.constant 131072 : i32
    %150 = vector.broadcast %c131072_i32 : i32 to vector<2x32xi32>
    %151 = arith.ori %149, %150 : vector<2x32xi32>
    %152 = vector.shape_cast %151 : vector<2x32xi32> to vector<2x32x1xi32>
    %153 = vector.broadcast %152 : vector<2x32x1xi32> to vector<2x32x256xi32>
    %154 = arith.cmpi slt, %10, %153 : vector<2x32x256xi32>
    %155 = arith.extui %154 : vector<2x32x256xi1> to vector<2x32x256xi32>
    %cst_33 = arith.constant dense<0> : vector<2x32xi32>
    %156 = vector.multi_reduction <add>, %155, %cst_33 [2] : vector<2x32x256xi32> to vector<2x32xi32>
    %c127_i32_34 = arith.constant 127 : i32
    %157 = vector.broadcast %c127_i32_34 : i32 to vector<2x32xi32>
    %158 = arith.cmpi sle, %156, %157 : vector<2x32xi32>
    %159 = arith.select %158, %151, %149 : vector<2x32xi1>, vector<2x32xi32>
    %c65536_i32 = arith.constant 65536 : i32
    %160 = vector.broadcast %c65536_i32 : i32 to vector<2x32xi32>
    %161 = arith.ori %159, %160 : vector<2x32xi32>
    %162 = vector.shape_cast %161 : vector<2x32xi32> to vector<2x32x1xi32>
    %163 = vector.broadcast %162 : vector<2x32x1xi32> to vector<2x32x256xi32>
    %164 = arith.cmpi slt, %10, %163 : vector<2x32x256xi32>
    %165 = arith.extui %164 : vector<2x32x256xi1> to vector<2x32x256xi32>
    %cst_35 = arith.constant dense<0> : vector<2x32xi32>
    %166 = vector.multi_reduction <add>, %165, %cst_35 [2] : vector<2x32x256xi32> to vector<2x32xi32>
    %c127_i32_36 = arith.constant 127 : i32
    %167 = vector.broadcast %c127_i32_36 : i32 to vector<2x32xi32>
    %168 = arith.cmpi sle, %166, %167 : vector<2x32xi32>
    %169 = arith.select %168, %161, %159 : vector<2x32xi1>, vector<2x32xi32>
    %c32768_i32 = arith.constant 32768 : i32
    %170 = vector.broadcast %c32768_i32 : i32 to vector<2x32xi32>
    %171 = arith.ori %169, %170 : vector<2x32xi32>
    %172 = vector.shape_cast %171 : vector<2x32xi32> to vector<2x32x1xi32>
    %173 = vector.broadcast %172 : vector<2x32x1xi32> to vector<2x32x256xi32>
    %174 = arith.cmpi slt, %10, %173 : vector<2x32x256xi32>
    %175 = arith.extui %174 : vector<2x32x256xi1> to vector<2x32x256xi32>
    %cst_37 = arith.constant dense<0> : vector<2x32xi32>
    %176 = vector.multi_reduction <add>, %175, %cst_37 [2] : vector<2x32x256xi32> to vector<2x32xi32>
    %c127_i32_38 = arith.constant 127 : i32
    %177 = vector.broadcast %c127_i32_38 : i32 to vector<2x32xi32>
    %178 = arith.cmpi sle, %176, %177 : vector<2x32xi32>
    %179 = arith.select %178, %171, %169 : vector<2x32xi1>, vector<2x32xi32>
    %c16384_i32 = arith.constant 16384 : i32
    %180 = vector.broadcast %c16384_i32 : i32 to vector<2x32xi32>
    %181 = arith.ori %179, %180 : vector<2x32xi32>
    %182 = vector.shape_cast %181 : vector<2x32xi32> to vector<2x32x1xi32>
    %183 = vector.broadcast %182 : vector<2x32x1xi32> to vector<2x32x256xi32>
    %184 = arith.cmpi slt, %10, %183 : vector<2x32x256xi32>
    %185 = arith.extui %184 : vector<2x32x256xi1> to vector<2x32x256xi32>
    %cst_39 = arith.constant dense<0> : vector<2x32xi32>
    %186 = vector.multi_reduction <add>, %185, %cst_39 [2] : vector<2x32x256xi32> to vector<2x32xi32>
    %c127_i32_40 = arith.constant 127 : i32
    %187 = vector.broadcast %c127_i32_40 : i32 to vector<2x32xi32>
    %188 = arith.cmpi sle, %186, %187 : vector<2x32xi32>
    %189 = arith.select %188, %181, %179 : vector<2x32xi1>, vector<2x32xi32>
    %c8192_i32 = arith.constant 8192 : i32
    %190 = vector.broadcast %c8192_i32 : i32 to vector<2x32xi32>
    %191 = arith.ori %189, %190 : vector<2x32xi32>
    %192 = vector.shape_cast %191 : vector<2x32xi32> to vector<2x32x1xi32>
    %193 = vector.broadcast %192 : vector<2x32x1xi32> to vector<2x32x256xi32>
    %194 = arith.cmpi slt, %10, %193 : vector<2x32x256xi32>
    %195 = arith.extui %194 : vector<2x32x256xi1> to vector<2x32x256xi32>
    %cst_41 = arith.constant dense<0> : vector<2x32xi32>
    %196 = vector.multi_reduction <add>, %195, %cst_41 [2] : vector<2x32x256xi32> to vector<2x32xi32>
    %c127_i32_42 = arith.constant 127 : i32
    %197 = vector.broadcast %c127_i32_42 : i32 to vector<2x32xi32>
    %198 = arith.cmpi sle, %196, %197 : vector<2x32xi32>
    %199 = arith.select %198, %191, %189 : vector<2x32xi1>, vector<2x32xi32>
    %c4096_i32 = arith.constant 4096 : i32
    %200 = vector.broadcast %c4096_i32 : i32 to vector<2x32xi32>
    %201 = arith.ori %199, %200 : vector<2x32xi32>
    %202 = vector.shape_cast %201 : vector<2x32xi32> to vector<2x32x1xi32>
    %203 = vector.broadcast %202 : vector<2x32x1xi32> to vector<2x32x256xi32>
    %204 = arith.cmpi slt, %10, %203 : vector<2x32x256xi32>
    %205 = arith.extui %204 : vector<2x32x256xi1> to vector<2x32x256xi32>
    %cst_43 = arith.constant dense<0> : vector<2x32xi32>
    %206 = vector.multi_reduction <add>, %205, %cst_43 [2] : vector<2x32x256xi32> to vector<2x32xi32>
    %c127_i32_44 = arith.constant 127 : i32
    %207 = vector.broadcast %c127_i32_44 : i32 to vector<2x32xi32>
    %208 = arith.cmpi sle, %206, %207 : vector<2x32xi32>
    %209 = arith.select %208, %201, %199 : vector<2x32xi1>, vector<2x32xi32>
    %c2048_i32 = arith.constant 2048 : i32
    %210 = vector.broadcast %c2048_i32 : i32 to vector<2x32xi32>
    %211 = arith.ori %209, %210 : vector<2x32xi32>
    %212 = vector.shape_cast %211 : vector<2x32xi32> to vector<2x32x1xi32>
    %213 = vector.broadcast %212 : vector<2x32x1xi32> to vector<2x32x256xi32>
    %214 = arith.cmpi slt, %10, %213 : vector<2x32x256xi32>
    %215 = arith.extui %214 : vector<2x32x256xi1> to vector<2x32x256xi32>
    %cst_45 = arith.constant dense<0> : vector<2x32xi32>
    %216 = vector.multi_reduction <add>, %215, %cst_45 [2] : vector<2x32x256xi32> to vector<2x32xi32>
    %c127_i32_46 = arith.constant 127 : i32
    %217 = vector.broadcast %c127_i32_46 : i32 to vector<2x32xi32>
    %218 = arith.cmpi sle, %216, %217 : vector<2x32xi32>
    %219 = arith.select %218, %211, %209 : vector<2x32xi1>, vector<2x32xi32>
    %c1024_i32 = arith.constant 1024 : i32
    %220 = vector.broadcast %c1024_i32 : i32 to vector<2x32xi32>
    %221 = arith.ori %219, %220 : vector<2x32xi32>
    %222 = vector.shape_cast %221 : vector<2x32xi32> to vector<2x32x1xi32>
    %223 = vector.broadcast %222 : vector<2x32x1xi32> to vector<2x32x256xi32>
    %224 = arith.cmpi slt, %10, %223 : vector<2x32x256xi32>
    %225 = arith.extui %224 : vector<2x32x256xi1> to vector<2x32x256xi32>
    %cst_47 = arith.constant dense<0> : vector<2x32xi32>
    %226 = vector.multi_reduction <add>, %225, %cst_47 [2] : vector<2x32x256xi32> to vector<2x32xi32>
    %c127_i32_48 = arith.constant 127 : i32
    %227 = vector.broadcast %c127_i32_48 : i32 to vector<2x32xi32>
    %228 = arith.cmpi sle, %226, %227 : vector<2x32xi32>
    %229 = arith.select %228, %221, %219 : vector<2x32xi1>, vector<2x32xi32>
    %c512_i32 = arith.constant 512 : i32
    %230 = vector.broadcast %c512_i32 : i32 to vector<2x32xi32>
    %231 = arith.ori %229, %230 : vector<2x32xi32>
    %232 = vector.shape_cast %231 : vector<2x32xi32> to vector<2x32x1xi32>
    %233 = vector.broadcast %232 : vector<2x32x1xi32> to vector<2x32x256xi32>
    %234 = arith.cmpi slt, %10, %233 : vector<2x32x256xi32>
    %235 = arith.extui %234 : vector<2x32x256xi1> to vector<2x32x256xi32>
    %cst_49 = arith.constant dense<0> : vector<2x32xi32>
    %236 = vector.multi_reduction <add>, %235, %cst_49 [2] : vector<2x32x256xi32> to vector<2x32xi32>
    %c127_i32_50 = arith.constant 127 : i32
    %237 = vector.broadcast %c127_i32_50 : i32 to vector<2x32xi32>
    %238 = arith.cmpi sle, %236, %237 : vector<2x32xi32>
    %239 = arith.select %238, %231, %229 : vector<2x32xi1>, vector<2x32xi32>
    %c256_i32 = arith.constant 256 : i32
    %240 = vector.broadcast %c256_i32 : i32 to vector<2x32xi32>
    %241 = arith.ori %239, %240 : vector<2x32xi32>
    %242 = vector.shape_cast %241 : vector<2x32xi32> to vector<2x32x1xi32>
    %243 = vector.broadcast %242 : vector<2x32x1xi32> to vector<2x32x256xi32>
    %244 = arith.cmpi slt, %10, %243 : vector<2x32x256xi32>
    %245 = arith.extui %244 : vector<2x32x256xi1> to vector<2x32x256xi32>
    %cst_51 = arith.constant dense<0> : vector<2x32xi32>
    %246 = vector.multi_reduction <add>, %245, %cst_51 [2] : vector<2x32x256xi32> to vector<2x32xi32>
    %c127_i32_52 = arith.constant 127 : i32
    %247 = vector.broadcast %c127_i32_52 : i32 to vector<2x32xi32>
    %248 = arith.cmpi sle, %246, %247 : vector<2x32xi32>
    %249 = arith.select %248, %241, %239 : vector<2x32xi1>, vector<2x32xi32>
    %c128_i32 = arith.constant 128 : i32
    %250 = vector.broadcast %c128_i32 : i32 to vector<2x32xi32>
    %251 = arith.ori %249, %250 : vector<2x32xi32>
    %252 = vector.shape_cast %251 : vector<2x32xi32> to vector<2x32x1xi32>
    %253 = vector.broadcast %252 : vector<2x32x1xi32> to vector<2x32x256xi32>
    %254 = arith.cmpi slt, %10, %253 : vector<2x32x256xi32>
    %255 = arith.extui %254 : vector<2x32x256xi1> to vector<2x32x256xi32>
    %cst_53 = arith.constant dense<0> : vector<2x32xi32>
    %256 = vector.multi_reduction <add>, %255, %cst_53 [2] : vector<2x32x256xi32> to vector<2x32xi32>
    %c127_i32_54 = arith.constant 127 : i32
    %257 = vector.broadcast %c127_i32_54 : i32 to vector<2x32xi32>
    %258 = arith.cmpi sle, %256, %257 : vector<2x32xi32>
    %259 = arith.select %258, %251, %249 : vector<2x32xi1>, vector<2x32xi32>
    %c64_i32 = arith.constant 64 : i32
    %260 = vector.broadcast %c64_i32 : i32 to vector<2x32xi32>
    %261 = arith.ori %259, %260 : vector<2x32xi32>
    %262 = vector.shape_cast %261 : vector<2x32xi32> to vector<2x32x1xi32>
    %263 = vector.broadcast %262 : vector<2x32x1xi32> to vector<2x32x256xi32>
    %264 = arith.cmpi slt, %10, %263 : vector<2x32x256xi32>
    %265 = arith.extui %264 : vector<2x32x256xi1> to vector<2x32x256xi32>
    %cst_55 = arith.constant dense<0> : vector<2x32xi32>
    %266 = vector.multi_reduction <add>, %265, %cst_55 [2] : vector<2x32x256xi32> to vector<2x32xi32>
    %c127_i32_56 = arith.constant 127 : i32
    %267 = vector.broadcast %c127_i32_56 : i32 to vector<2x32xi32>
    %268 = arith.cmpi sle, %266, %267 : vector<2x32xi32>
    %269 = arith.select %268, %261, %259 : vector<2x32xi1>, vector<2x32xi32>
    %c32_i32 = arith.constant 32 : i32
    %270 = vector.broadcast %c32_i32 : i32 to vector<2x32xi32>
    %271 = arith.ori %269, %270 : vector<2x32xi32>
    %272 = vector.shape_cast %271 : vector<2x32xi32> to vector<2x32x1xi32>
    %273 = vector.broadcast %272 : vector<2x32x1xi32> to vector<2x32x256xi32>
    %274 = arith.cmpi slt, %10, %273 : vector<2x32x256xi32>
    %275 = arith.extui %274 : vector<2x32x256xi1> to vector<2x32x256xi32>
    %cst_57 = arith.constant dense<0> : vector<2x32xi32>
    %276 = vector.multi_reduction <add>, %275, %cst_57 [2] : vector<2x32x256xi32> to vector<2x32xi32>
    %c127_i32_58 = arith.constant 127 : i32
    %277 = vector.broadcast %c127_i32_58 : i32 to vector<2x32xi32>
    %278 = arith.cmpi sle, %276, %277 : vector<2x32xi32>
    %279 = arith.select %278, %271, %269 : vector<2x32xi1>, vector<2x32xi32>
    %c16_i32 = arith.constant 16 : i32
    %280 = vector.broadcast %c16_i32 : i32 to vector<2x32xi32>
    %281 = arith.ori %279, %280 : vector<2x32xi32>
    %282 = vector.shape_cast %281 : vector<2x32xi32> to vector<2x32x1xi32>
    %283 = vector.broadcast %282 : vector<2x32x1xi32> to vector<2x32x256xi32>
    %284 = arith.cmpi slt, %10, %283 : vector<2x32x256xi32>
    %285 = arith.extui %284 : vector<2x32x256xi1> to vector<2x32x256xi32>
    %cst_59 = arith.constant dense<0> : vector<2x32xi32>
    %286 = vector.multi_reduction <add>, %285, %cst_59 [2] : vector<2x32x256xi32> to vector<2x32xi32>
    %c127_i32_60 = arith.constant 127 : i32
    %287 = vector.broadcast %c127_i32_60 : i32 to vector<2x32xi32>
    %288 = arith.cmpi sle, %286, %287 : vector<2x32xi32>
    %289 = arith.select %288, %281, %279 : vector<2x32xi1>, vector<2x32xi32>
    %c8_i32 = arith.constant 8 : i32
    %290 = vector.broadcast %c8_i32 : i32 to vector<2x32xi32>
    %291 = arith.ori %289, %290 : vector<2x32xi32>
    %292 = vector.shape_cast %291 : vector<2x32xi32> to vector<2x32x1xi32>
    %293 = vector.broadcast %292 : vector<2x32x1xi32> to vector<2x32x256xi32>
    %294 = arith.cmpi slt, %10, %293 : vector<2x32x256xi32>
    %295 = arith.extui %294 : vector<2x32x256xi1> to vector<2x32x256xi32>
    %cst_61 = arith.constant dense<0> : vector<2x32xi32>
    %296 = vector.multi_reduction <add>, %295, %cst_61 [2] : vector<2x32x256xi32> to vector<2x32xi32>
    %c127_i32_62 = arith.constant 127 : i32
    %297 = vector.broadcast %c127_i32_62 : i32 to vector<2x32xi32>
    %298 = arith.cmpi sle, %296, %297 : vector<2x32xi32>
    %299 = arith.select %298, %291, %289 : vector<2x32xi1>, vector<2x32xi32>
    %c4_i32 = arith.constant 4 : i32
    %300 = vector.broadcast %c4_i32 : i32 to vector<2x32xi32>
    %301 = arith.ori %299, %300 : vector<2x32xi32>
    %302 = vector.shape_cast %301 : vector<2x32xi32> to vector<2x32x1xi32>
    %303 = vector.broadcast %302 : vector<2x32x1xi32> to vector<2x32x256xi32>
    %304 = arith.cmpi slt, %10, %303 : vector<2x32x256xi32>
    %305 = arith.extui %304 : vector<2x32x256xi1> to vector<2x32x256xi32>
    %cst_63 = arith.constant dense<0> : vector<2x32xi32>
    %306 = vector.multi_reduction <add>, %305, %cst_63 [2] : vector<2x32x256xi32> to vector<2x32xi32>
    %c127_i32_64 = arith.constant 127 : i32
    %307 = vector.broadcast %c127_i32_64 : i32 to vector<2x32xi32>
    %308 = arith.cmpi sle, %306, %307 : vector<2x32xi32>
    %309 = arith.select %308, %301, %299 : vector<2x32xi1>, vector<2x32xi32>
    %c2_i32 = arith.constant 2 : i32
    %310 = vector.broadcast %c2_i32 : i32 to vector<2x32xi32>
    %311 = arith.ori %309, %310 : vector<2x32xi32>
    %312 = vector.shape_cast %311 : vector<2x32xi32> to vector<2x32x1xi32>
    %313 = vector.broadcast %312 : vector<2x32x1xi32> to vector<2x32x256xi32>
    %314 = arith.cmpi slt, %10, %313 : vector<2x32x256xi32>
    %315 = arith.extui %314 : vector<2x32x256xi1> to vector<2x32x256xi32>
    %cst_65 = arith.constant dense<0> : vector<2x32xi32>
    %316 = vector.multi_reduction <add>, %315, %cst_65 [2] : vector<2x32x256xi32> to vector<2x32xi32>
    %c127_i32_66 = arith.constant 127 : i32
    %317 = vector.broadcast %c127_i32_66 : i32 to vector<2x32xi32>
    %318 = arith.cmpi sle, %316, %317 : vector<2x32xi32>
    %319 = arith.select %318, %311, %309 : vector<2x32xi1>, vector<2x32xi32>
    %c1_i32 = arith.constant 1 : i32
    %320 = vector.broadcast %c1_i32 : i32 to vector<2x32xi32>
    %321 = arith.ori %319, %320 : vector<2x32xi32>
    %322 = vector.shape_cast %321 : vector<2x32xi32> to vector<2x32x1xi32>
    %323 = vector.broadcast %322 : vector<2x32x1xi32> to vector<2x32x256xi32>
    %324 = arith.cmpi slt, %10, %323 : vector<2x32x256xi32>
    %325 = arith.extui %324 : vector<2x32x256xi1> to vector<2x32x256xi32>
    %cst_67 = arith.constant dense<0> : vector<2x32xi32>
    %326 = vector.multi_reduction <add>, %325, %cst_67 [2] : vector<2x32x256xi32> to vector<2x32xi32>
    %c127_i32_68 = arith.constant 127 : i32
    %327 = vector.broadcast %c127_i32_68 : i32 to vector<2x32xi32>
    %328 = arith.cmpi sle, %326, %327 : vector<2x32xi32>
    %329 = arith.select %328, %321, %319 : vector<2x32xi1>, vector<2x32xi32>
    %330 = vector.shape_cast %329 : vector<2x32xi32> to vector<2x32x1xi32>
    %331 = vector.broadcast %330 : vector<2x32x1xi32> to vector<2x32x256xi32>
    %332 = arith.cmpi eq, %10, %331 : vector<2x32x256xi32>
    %cst_69 = arith.constant 0xFF800000 : f32
    %333 = vector.broadcast %cst_69 : f32 to vector<2x32x256xf32>
    %334 = arith.select %332, %0, %333 : vector<2x32x256xi1>, vector<2x32x256xf32>
    %cst_70 = arith.constant dense<0xFF800000> : vector<2x32xf32>
    %335 = vector.multi_reduction <maximumf>, %334, %cst_70 [2] : vector<2x32x256xf32> to vector<2x32xf32>
    %c0_71 = arith.constant 0 : index
    %c0_72 = arith.constant 0 : index
    %336 = vector.load %arg2[%c0_71, %c0_72] : memref<32x2xf32, #tpu.memory_space<vmem>>, vector<32x2xf32>
    %c0_73 = arith.constant 0 : index
    %c0_74 = arith.constant 0 : index
    %337 = vector.load %arg3[%c0_73, %c0_74] : memref<1x2xf32, #tpu.memory_space<vmem>>, vector<1x2xf32>
    %cst_75 = arith.constant dense<0.000000e+00> : vector<2x2xf32>
    %338 = tpu.matmul %3, %336, %cst_75 {dimension_numbers = #tpu.dot_dimension_numbers<[1], [0], [0], [1], [0, 0, 1, 1], [], []>} : vector<2x32xf32>, vector<32x2xf32>, vector<2x2xf32> -> vector<2x2xf32>
    %339 = vector.broadcast %337 : vector<1x2xf32> to vector<2x2xf32>
    %340 = arith.addf %338, %339 : vector<2x2xf32>
    %cst_76 = arith.constant 0.000000e+00 : f32
    %341 = vector.broadcast %cst_76 : f32 to vector<2x2xf32>
    %342 = arith.maximumf %340, %341 : vector<2x2xf32>
    %cst_77 = arith.constant dense<0.000000e+00> : vector<2x2xf32>
    %343 = tpu.matmul %4, %336, %cst_77 {dimension_numbers = #tpu.dot_dimension_numbers<[1], [0], [0], [1], [0, 0, 1, 1], [], []>} : vector<2x32xf32>, vector<32x2xf32>, vector<2x2xf32> -> vector<2x2xf32>
    %344 = vector.broadcast %337 : vector<1x2xf32> to vector<2x2xf32>
    %345 = arith.addf %343, %344 : vector<2x2xf32>
    %cst_78 = arith.constant 0.000000e+00 : f32
    %346 = vector.broadcast %cst_78 : f32 to vector<2x2xf32>
    %347 = arith.maximumf %345, %346 : vector<2x2xf32>
    %348 = arith.addf %342, %347 : vector<2x2xf32>
    %cst_79 = arith.constant dense<0.000000e+00> : vector<2x2xf32>
    %349 = tpu.matmul %335, %336, %cst_79 {dimension_numbers = #tpu.dot_dimension_numbers<[1], [0], [0], [1], [0, 0, 1, 1], [], []>} : vector<2x32xf32>, vector<32x2xf32>, vector<2x2xf32> -> vector<2x2xf32>
    %350 = vector.broadcast %337 : vector<1x2xf32> to vector<2x2xf32>
    %351 = arith.addf %349, %350 : vector<2x2xf32>
    %cst_80 = arith.constant 0.000000e+00 : f32
    %352 = vector.broadcast %cst_80 : f32 to vector<2x2xf32>
    %353 = arith.maximumf %351, %352 : vector<2x2xf32>
    %354 = arith.addf %348, %353 : vector<2x2xf32>
    %c0_81 = arith.constant 0 : index
    %c0_82 = arith.constant 0 : index
    %355 = vector.load %arg4[%c0_81, %c0_82] : memref<2x32xf32, #tpu.memory_space<vmem>>, vector<2x32xf32>
    %cst_83 = arith.constant dense<0.000000e+00> : vector<2x32xf32>
    %356 = tpu.matmul %354, %355, %cst_83 {dimension_numbers = #tpu.dot_dimension_numbers<[1], [0], [0], [1], [0, 0, 1, 1], [], []>} : vector<2x2xf32>, vector<2x32xf32>, vector<2x32xf32> -> vector<2x32xf32>
    %c0_84 = arith.constant 0 : index
    %c0_85 = arith.constant 0 : index
    %357 = vector.load %arg5[%c0_84, %c0_85] : memref<1x32xf32, #tpu.memory_space<vmem>>, vector<1x32xf32>
    %cst_86 = arith.constant 3.000000e+00 : f32
    %358 = vector.broadcast %cst_86 : f32 to vector<1x32xf32>
    %359 = arith.mulf %358, %357 : vector<1x32xf32>
    %360 = vector.broadcast %359 : vector<1x32xf32> to vector<2x32xf32>
    %361 = arith.addf %356, %360 : vector<2x32xf32>
    %362 = arith.negf %361 : vector<2x32xf32>
    %363 = math.exp %362 : vector<2x32xf32>
    %cst_87 = arith.constant 1.000000e+00 : f32
    %364 = vector.broadcast %cst_87 : f32 to vector<2x32xf32>
    %365 = arith.addf %364, %363 : vector<2x32xf32>
    %366 = arith.divf %364, %365 : vector<2x32xf32>
    %c0_88 = arith.constant 0 : index
    %c0_89 = arith.constant 0 : index
    %c0_90 = arith.constant 0 : index
    %367 = vector.load %arg6[%c0_88, %c0_89, %c0_90] : memref<2x1x32xf32, #tpu.memory_space<vmem>>, vector<2x1x32xf32>
    %368 = vector.shape_cast %367 : vector<2x1x32xf32> to vector<2x32xf32>
    %369 = vector.shape_cast %366 : vector<2x32xf32> to vector<2x1x32xf32>
    tpu.vector_store %arg6[%c0_88, %c0_89, %c0_90], %369 {strides = array<i32>} : memref<2x1x32xf32, #tpu.memory_space<vmem>>, vector<2x1x32xf32>,
    return
  }
  func.func @transform_0(%arg0: i32) -> (i32, i32, i32) {
    %c0_i32 = arith.constant 0 : i32
    %c0_i32_0 = arith.constant 0 : i32
    %c0_i32_1 = arith.constant 0 : i32
    return %arg0, %c0_i32, %c0_i32_0 : i32, i32, i32
  }
  func.func @transform_1(%arg0: i32) -> (i32, i32) {
    %c0_i32 = arith.constant 0 : i32
    %c0_i32_0 = arith.constant 0 : i32
    %c0_i32_1 = arith.constant 0 : i32
    return %c0_i32, %c0_i32_0 : i32, i32
  }
  func.func @transform_2(%arg0: i32) -> (i32, i32) {
    %c0_i32 = arith.constant 0 : i32
    %c0_i32_0 = arith.constant 0 : i32
    %c0_i32_1 = arith.constant 0 : i32
    return %c0_i32, %c0_i32_0 : i32, i32
  }
  func.func @transform_3(%arg0: i32) -> (i32, i32) {
    %c0_i32 = arith.constant 0 : i32
    %c0_i32_0 = arith.constant 0 : i32
    %c0_i32_1 = arith.constant 0 : i32
    return %c0_i32, %c0_i32_0 : i32, i32
  }
  func.func @transform_4(%arg0: i32) -> (i32, i32) {
    %c0_i32 = arith.constant 0 : i32
    %c0_i32_0 = arith.constant 0 : i32
    %c0_i32_1 = arith.constant 0 : i32
    return %c0_i32, %c0_i32_0 : i32, i32
  }
  func.func @transform_5(%arg0: i32) -> (i32, i32, i32) {
    %c0_i32 = arith.constant 0 : i32
    %c0_i32_0 = arith.constant 0 : i32
    %c0_i32_1 = arith.constant 0 : i32
    return %arg0, %c0_i32, %c0_i32_0 : i32, i32, i32
  }
}

</mosaic_0001>

<llo_original>
// kernel: tpu_custom_call.1
$region0: #{tpu_custom_call.1}
  #allocation0 [shape = 'u32[]', space=smem, size = 0x4, offset = 0x4, fixed_abs, tag = 'smem constant byte address 0x4 - core index']
  #allocation1 [shape = 'u32[144,128]{1,0:T(1,128)}', space=vmem, size = 0x12000, scoped, tag = 'internal scratch']
  %s0 = inlined_call_operand.hbm [shape: f32[2,32,256], index: 0, kind: input, shape index: {}]
  %s1 = inlined_call_operand.vmem [shape: f32[32,2], index: 1, kind: input, shape index: {}]
  %s2 = inlined_call_operand.vmem [shape: f32[1,2], index: 2, kind: input, shape index: {}]
  %s3 = inlined_call_operand.vmem [shape: f32[2,32], index: 3, kind: input, shape index: {}]
  %s4 = inlined_call_operand.vmem [shape: f32[1,32], index: 4, kind: input, shape index: {}]
  %s5 = inlined_call_operand.hbm [shape: f32[2,1,32], index: 5, kind: output, shape index: {}]
  %s6 = sld [smem:[#allocation0]]
  $region34: #{tpu_custom_call.1} parent=0
    _
  %s8 = ssub.s32 1, %s6
  %s9 = scalar_select 0, %s8, %s6
  $region1: #{tpu_custom_call.1} parent=0
    #allocation2 [shape = 'u8[65536]{0}', space=vmem, size = 0x10000, scoped, tag = 'input window, operand 0, single buffered']
    #allocation3 [shape = 's32[1]{0}', space=sflag, size = 0x4, scoped, tag = 'scoped memory for tpu_custom_call.1']
    #allocation4 [shape = 's32[1]{0}', space=sflag, size = 0x4, scoped, tag = 'scoped memory for tpu_custom_call.1']
    #allocation5 [shape = 'u8[1024]{0}', space=vmem, size = 0x400, scoped, tag = 'output window, operand 0, single buffered']
    %10 = vsyncpa [#allocation3], 0
    %11 = vsyncpa [#allocation4], 0
    // Predicated region
    $region2: #{tpu_custom_call.1} parent=1 // pred_check
      _
    $region3: #{tpu_custom_call.1} parent=1 // pred_check_branch
      %13 = sbr.rel (0) target = $region5
    $region4: #{tpu_custom_call.1} parent=1 // pred_region
      %s15 = ssub.s32 2048, 2048
      %16 = vsyncadd [#allocation3], %s15
      %s17 = sshll.u32 [#allocation2], 4
      %s18 = int_to_ptr.vmem [resolvable:$true] %s17
      %23 = dma.hbm_to_vmem [thread:$0]  %s0, 2048, %s18, [#allocation3], 256, 256, 16
    $region5: #{tpu_custom_call.1} parent=1 // pred_fallthru
      _
    // Predicated region
    $region6: #{tpu_custom_call.1} parent=1 // pred_check
      _
    $region7: #{tpu_custom_call.1} parent=1 // pred_check_branch
      %25 = sbr.rel (0) target = $region9
    $region8: #{tpu_custom_call.1} parent=1 // pred_region
      _
    $region9: #{tpu_custom_call.1} parent=1 // pred_fallthru
      _
    // Predicated region
    $region10: #{tpu_custom_call.1} parent=1 // pred_check
      _
    $region11: #{tpu_custom_call.1} parent=1 // pred_check_branch
      %27 = sbr.rel (0) target = $region13
    $region12: #{tpu_custom_call.1} parent=1 // pred_region
      _
    $region13: #{tpu_custom_call.1} parent=1 // pred_fallthru
      _
    // Predicated region
    $region14: #{tpu_custom_call.1} parent=1 // pred_check
      _
    $region15: #{tpu_custom_call.1} parent=1 // pred_check_branch
      %29 = sbr.rel (0) target = $region17
    $region16: #{tpu_custom_call.1} parent=1 // pred_region
      _
    $region17: #{tpu_custom_call.1} parent=1 // pred_fallthru
      _
    // Predicated region
    $region18: #{tpu_custom_call.1} parent=1 // pred_check
      _
    $region19: #{tpu_custom_call.1} parent=1 // pred_check_branch
      %31 = sbr.rel (0) target = $region21
    $region20: #{tpu_custom_call.1} parent=1 // pred_region
      _
    $region21: #{tpu_custom_call.1} parent=1 // pred_fallthru
      _
    // Predicated region
    $region22: #{tpu_custom_call.1} parent=1 // pred_check
      _
    $region23: #{tpu_custom_call.1} parent=1 // pred_check_branch
      %33 = sbr.rel (0) target = $region25
    $region24: #{tpu_custom_call.1} parent=1 // pred_region
      %34 = dma.done [#allocation3], 2048
    $region25: #{tpu_custom_call.1} parent=1 // pred_fallthru
      _
    %v35 = vld [vmem:[#allocation2] sm:$0xff]
    %v36 = vld [vmem:[#allocation2 + $0x8] sm:$0xff]
    %v37 = vld [vmem:[#allocation2 + $0x10] sm:$0xff]
    %v38 = vld [vmem:[#allocation2 + $0x18] sm:$0xff]
    %v39 = vld [vmem:[#allocation2 + $0x20] sm:$0xff]
    %v40 = vld [vmem:[#allocation2 + $0x28] sm:$0xff]
    %v41 = vld [vmem:[#allocation2 + $0x30] sm:$0xff]
    %v42 = vld [vmem:[#allocation2 + $0x38] sm:$0xff]
    %v43 = vld [vmem:[#allocation2 + $0x40] sm:$0xff]
    %v44 = vld [vmem:[#allocation2 + $0x48] sm:$0xff]
    %v45 = vld [vmem:[#allocation2 + $0x50] sm:$0xff]
    %v46 = vld [vmem:[#allocation2 + $0x58] sm:$0xff]
    %v47 = vld [vmem:[#allocation2 + $0x60] sm:$0xff]
    %v48 = vld [vmem:[#allocation2 + $0x68] sm:$0xff]
    %v49 = vld [vmem:[#allocation2 + $0x70] sm:$0xff]
    %v50 = vld [vmem:[#allocation2 + $0x78] sm:$0xff]
    %v51 = vadd.f32 %v35, %v36
    %52 = vadd.xlane.f32.xlu0 %v51
    %v53 = vpop.xlane.xlu0 %52
    %v54 = vadd.f32 %v37, %v38
    %55 = vadd.xlane.f32.xlu0 %v54
    %v56 = vpop.xlane.xlu0 %55
    %v57 = vadd.f32 %v39, %v40
    %58 = vadd.xlane.f32.xlu0 %v57
    %v59 = vpop.xlane.xlu0 %58
    %v60 = vadd.f32 %v41, %v42
    %61 = vadd.xlane.f32.xlu0 %v60
    %v62 = vpop.xlane.xlu0 %61
    %v63 = vadd.f32 %v43, %v44
    %64 = vadd.xlane.f32.xlu0 %v63
    %v65 = vpop.xlane.xlu0 %64
    %v66 = vadd.f32 %v45, %v46
    %67 = vadd.xlane.f32.xlu0 %v66
    %v68 = vpop.xlane.xlu0 %67
    %v69 = vadd.f32 %v47, %v48
    %70 = vadd.xlane.f32.xlu0 %v69
    %v71 = vpop.xlane.xlu0 %70
    %v72 = vadd.f32 %v49, %v50
    %73 = vadd.xlane.f32.xlu0 %v72
    %v74 = vpop.xlane.xlu0 %73
    %v75 = vrcp.pop 256.0
    %v76 = vmul.f32 %v53, %v75
    %v77 = vmul.f32 %v56, %v75
    %v78 = vmul.f32 %v59, %v75
    %v79 = vmul.f32 %v62, %v75
    %v80 = vmul.f32 %v65, %v75
    %v81 = vmul.f32 %v68, %v75
    %v82 = vmul.f32 %v71, %v75
    %v83 = vmul.f32 %v74, %v75
    %v84 = vmax.f32 %v35, %v36
    %85 = vmax.xlane.f32.xlu0 %v84
    %v86 = vpop.xlane.xlu0 %85
    %v87 = vmax.f32 %v37, %v38
    %88 = vmax.xlane.f32.xlu0 %v87
    %v89 = vpop.xlane.xlu0 %88
    %v90 = vmax.f32 %v39, %v40
    %91 = vmax.xlane.f32.xlu0 %v90
    %v92 = vpop.xlane.xlu0 %91
    %v93 = vmax.f32 %v41, %v42
    %94 = vmax.xlane.f32.xlu0 %v93
    %v95 = vpop.xlane.xlu0 %94
    %v96 = vmax.f32 %v43, %v44
    %97 = vmax.xlane.f32.xlu0 %v96
    %v98 = vpop.xlane.xlu0 %97
    %v99 = vmax.f32 %v45, %v46
    %100 = vmax.xlane.f32.xlu0 %v99
    %v101 = vpop.xlane.xlu0 %100
    %v102 = vmax.f32 %v47, %v48
    %103 = vmax.xlane.f32.xlu0 %v102
    %v104 = vpop.xlane.xlu0 %103
    %v105 = vmax.f32 %v49, %v50
    %106 = vmax.xlane.f32.xlu0 %v105
    %v107 = vpop.xlane.xlu0 %106
    %vm124 = vcmp.lt.s32.totalorder %v35, 0
    %vm125 = vcmp.lt.s32.totalorder %v36, 0
    %vm126 = vcmp.lt.s32.totalorder %v37, 0
    %vm127 = vcmp.lt.s32.totalorder %v38, 0
    %vm128 = vcmp.lt.s32.totalorder %v39, 0
    %vm129 = vcmp.lt.s32.totalorder %v40, 0
    %vm130 = vcmp.lt.s32.totalorder %v41, 0
    %vm131 = vcmp.lt.s32.totalorder %v42, 0
    %vm132 = vcmp.lt.s32.totalorder %v43, 0
    %vm133 = vcmp.lt.s32.totalorder %v44, 0
    %vm134 = vcmp.lt.s32.totalorder %v45, 0
    %vm135 = vcmp.lt.s32.totalorder %v46, 0
    %vm136 = vcmp.lt.s32.totalorder %v47, 0
    %vm137 = vcmp.lt.s32.totalorder %v48, 0
    %vm138 = vcmp.lt.s32.totalorder %v49, 0
    %vm139 = vcmp.lt.s32.totalorder %v50, 0
    %v140 = vxor.u32 %v35, 2147483647
    %v141 = vxor.u32 %v36, 2147483647
    %v142 = vxor.u32 %v37, 2147483647
    %v143 = vxor.u32 %v38, 2147483647
    %v144 = vxor.u32 %v39, 2147483647
    %v145 = vxor.u32 %v40, 2147483647
    %v146 = vxor.u32 %v41, 2147483647
    %v147 = vxor.u32 %v42, 2147483647
    %v148 = vxor.u32 %v43, 2147483647
    %v149 = vxor.u32 %v44, 2147483647
    %v150 = vxor.u32 %v45, 2147483647
    %v151 = vxor.u32 %v46, 2147483647
    %v152 = vxor.u32 %v47, 2147483647
    %v153 = vxor.u32 %v48, 2147483647
    %v154 = vxor.u32 %v49, 2147483647
    %v155 = vxor.u32 %v50, 2147483647
    %v156 = vsel %vm124, %v140, %v35
    %v157 = vsel %vm125, %v141, %v36
    %v158 = vsel %vm126, %v142, %v37
    %v159 = vsel %vm127, %v143, %v38
    %v160 = vsel %vm128, %v144, %v39
    %v161 = vsel %vm129, %v145, %v40
    %v162 = vsel %vm130, %v146, %v41
    %v163 = vsel %vm131, %v147, %v42
    %v164 = vsel %vm132, %v148, %v43
    %v165 = vsel %vm133, %v149, %v44
    %v166 = vsel %vm134, %v150, %v45
    %v167 = vsel %vm135, %v151, %v46
    %v168 = vsel %vm136, %v152, %v47
    %v169 = vsel %vm137, %v153, %v48
    %v170 = vsel %vm138, %v154, %v49
    %v171 = vsel %vm139, %v155, %v50
    %vm172 = vcmp.lt.s32.totalorder %v156, 0
    %vm173 = vcmp.lt.s32.totalorder %v157, 0
    %vm174 = vcmp.lt.s32.totalorder %v158, 0
    %vm175 = vcmp.lt.s32.totalorder %v159, 0
    %vm176 = vcmp.lt.s32.totalorder %v160, 0
    %vm177 = vcmp.lt.s32.totalorder %v161, 0
    %vm178 = vcmp.lt.s32.totalorder %v162, 0
    %vm179 = vcmp.lt.s32.totalorder %v163, 0
    %vm180 = vcmp.lt.s32.totalorder %v164, 0
    %vm181 = vcmp.lt.s32.totalorder %v165, 0
    %vm182 = vcmp.lt.s32.totalorder %v166, 0
    %vm183 = vcmp.lt.s32.totalorder %v167, 0
    %vm184 = vcmp.lt.s32.totalorder %v168, 0
    %vm185 = vcmp.lt.s32.totalorder %v169, 0
    %vm186 = vcmp.lt.s32.totalorder %v170, 0
    %vm187 = vcmp.lt.s32.totalorder %v171, 0
    %v188 = vsel %vm172, 1, 0
    %v189 = vsel %vm173, 1, 0
    %v190 = vsel %vm174, 1, 0
    %v191 = vsel %vm175, 1, 0
    %v192 = vsel %vm176, 1, 0
    %v193 = vsel %vm177, 1, 0
    %v194 = vsel %vm178, 1, 0
    %v195 = vsel %vm179, 1, 0
    %v196 = vsel %vm180, 1, 0
    %v197 = vsel %vm181, 1, 0
    %v198 = vsel %vm182, 1, 0
    %v199 = vsel %vm183, 1, 0
    %v200 = vsel %vm184, 1, 0
    %v201 = vsel %vm185, 1, 0
    %v202 = vsel %vm186, 1, 0
    %v203 = vsel %vm187, 1, 0
    %v204 = vadd.s32 %v188, %v189
    %v205 = vand.u32 %v204, 65535
    %v206 = vshrl.u32 %v204, 16
    %v207 = vcvt.s32.f32 %v205
    %v208 = vcvt.s32.f32 %v206
    %209 = vadd.xlane.f32.xlu0 %v207
    %v210 = vpop.xlane.xlu0 %209
    %211 = vadd.xlane.f32.xlu0 %v208
    %v212 = vpop.xlane.xlu0 %211
    %v213 = vcvt.f32.s32 %v210
    %v214 = vcvt.f32.s32 %v212
    %v215 = vshll.u32 %v214, 16
    %v216 = vadd.s32 %v215, %v213
    %v217 = vadd.s32 %v190, %v191
    %v218 = vand.u32 %v217, 65535
    %v219 = vshrl.u32 %v217, 16
    %v220 = vcvt.s32.f32 %v218
    %v221 = vcvt.s32.f32 %v219
    %222 = vadd.xlane.f32.xlu0 %v220
    %v223 = vpop.xlane.xlu0 %222
    %224 = vadd.xlane.f32.xlu0 %v221
    %v225 = vpop.xlane.xlu0 %224
    %v226 = vcvt.f32.s32 %v223
    %v227 = vcvt.f32.s32 %v225
    %v228 = vshll.u32 %v227, 16
    %v229 = vadd.s32 %v228, %v226
    %v230 = vadd.s32 %v192, %v193
    %v231 = vand.u32 %v230, 65535
    %v232 = vshrl.u32 %v230, 16
    %v233 = vcvt.s32.f32 %v231
    %v234 = vcvt.s32.f32 %v232
    %235 = vadd.xlane.f32.xlu0 %v233
    %v236 = vpop.xlane.xlu0 %235
    %237 = vadd.xlane.f32.xlu0 %v234
    %v238 = vpop.xlane.xlu0 %237
    %v239 = vcvt.f32.s32 %v236
    %v240 = vcvt.f32.s32 %v238
    %v241 = vshll.u32 %v240, 16
    %v242 = vadd.s32 %v241, %v239
    %v243 = vadd.s32 %v194, %v195
    %v244 = vand.u32 %v243, 65535
    %v245 = vshrl.u32 %v243, 16
    %v246 = vcvt.s32.f32 %v244
    %v247 = vcvt.s32.f32 %v245
    %248 = vadd.xlane.f32.xlu0 %v246
    %v249 = vpop.xlane.xlu0 %248
    %250 = vadd.xlane.f32.xlu0 %v247
    %v251 = vpop.xlane.xlu0 %250
    %v252 = vcvt.f32.s32 %v249
    %v253 = vcvt.f32.s32 %v251
    %v254 = vshll.u32 %v253, 16
    %v255 = vadd.s32 %v254, %v252
    %v256 = vadd.s32 %v196, %v197
    %v257 = vand.u32 %v256, 65535
    %v258 = vshrl.u32 %v256, 16
    %v259 = vcvt.s32.f32 %v257
    %v260 = vcvt.s32.f32 %v258
    %261 = vadd.xlane.f32.xlu0 %v259
    %v262 = vpop.xlane.xlu0 %261
    %263 = vadd.xlane.f32.xlu0 %v260
    %v264 = vpop.xlane.xlu0 %263
    %v265 = vcvt.f32.s32 %v262
    %v266 = vcvt.f32.s32 %v264
    %v267 = vshll.u32 %v266, 16
    %v268 = vadd.s32 %v267, %v265
    %v269 = vadd.s32 %v198, %v199
    %v270 = vand.u32 %v269, 65535
    %v271 = vshrl.u32 %v269, 16
    %v272 = vcvt.s32.f32 %v270
    %v273 = vcvt.s32.f32 %v271
    %274 = vadd.xlane.f32.xlu0 %v272
    %v275 = vpop.xlane.xlu0 %274
    %276 = vadd.xlane.f32.xlu0 %v273
    %v277 = vpop.xlane.xlu0 %276
    %v278 = vcvt.f32.s32 %v275
    %v279 = vcvt.f32.s32 %v277
    %v280 = vshll.u32 %v279, 16
    %v281 = vadd.s32 %v280, %v278
    %v282 = vadd.s32 %v200, %v201
    %v283 = vand.u32 %v282, 65535
    %v284 = vshrl.u32 %v282, 16
    %v285 = vcvt.s32.f32 %v283
    %v286 = vcvt.s32.f32 %v284
    %287 = vadd.xlane.f32.xlu0 %v285
    %v288 = vpop.xlane.xlu0 %287
    %289 = vadd.xlane.f32.xlu0 %v286
    %v290 = vpop.xlane.xlu0 %289
    %v291 = vcvt.f32.s32 %v288
    %v292 = vcvt.f32.s32 %v290
    %v293 = vshll.u32 %v292, 16
    %v294 = vadd.s32 %v293, %v291
    %v295 = vadd.s32 %v202, %v203
    %v296 = vand.u32 %v295, 65535
    %v297 = vshrl.u32 %v295, 16
    %v298 = vcvt.s32.f32 %v296
    %v299 = vcvt.s32.f32 %v297
    %300 = vadd.xlane.f32.xlu0 %v298
    %v301 = vpop.xlane.xlu0 %300
    %302 = vadd.xlane.f32.xlu0 %v299
    %v303 = vpop.xlane.xlu0 %302
    %v304 = vcvt.f32.s32 %v301
    %v305 = vcvt.f32.s32 %v303
    %v306 = vshll.u32 %v305, 16
    %v307 = vadd.s32 %v306, %v304
    %vm308 = vcmp.le.s32.totalorder %v216, 127
    %vm309 = vcmp.le.s32.totalorder %v229, 127
    %vm310 = vcmp.le.s32.totalorder %v242, 127
    %vm311 = vcmp.le.s32.totalorder %v255, 127
    %vm312 = vcmp.le.s32.totalorder %v268, 127
    %vm313 = vcmp.le.s32.totalorder %v281, 127
    %vm314 = vcmp.le.s32.totalorder %v294, 127
    %vm315 = vcmp.le.s32.totalorder %v307, 127
    %v316 = vsel %vm308, 0, 2147483648
    %v317 = vsel %vm309, 0, 2147483648
    %v318 = vsel %vm310, 0, 2147483648
    %v319 = vsel %vm311, 0, 2147483648
    %v320 = vsel %vm312, 0, 2147483648
    %v321 = vsel %vm313, 0, 2147483648
    %v322 = vsel %vm314, 0, 2147483648
    %v323 = vsel %vm315, 0, 2147483648
    %v324 = vor.u32 %v316, 1073741824
    %v325 = vor.u32 %v317, 1073741824
    %v326 = vor.u32 %v318, 1073741824
    %v327 = vor.u32 %v319, 1073741824
    %v328 = vor.u32 %v320, 1073741824
    %v329 = vor.u32 %v321, 1073741824
    %v330 = vor.u32 %v322, 1073741824
    %v331 = vor.u32 %v323, 1073741824
    %vm332 = vcmp.lt.s32.totalorder %v156, %v324
    %vm333 = vcmp.lt.s32.totalorder %v157, %v324
    %vm334 = vcmp.lt.s32.totalorder %v158, %v325
    %vm335 = vcmp.lt.s32.totalorder %v159, %v325
    %vm336 = vcmp.lt.s32.totalorder %v160, %v326
    %vm337 = vcmp.lt.s32.totalorder %v161, %v326
    %vm338 = vcmp.lt.s32.totalorder %v162, %v327
    %vm339 = vcmp.lt.s32.totalorder %v163, %v327
    %vm340 = vcmp.lt.s32.totalorder %v164, %v328
    %vm341 = vcmp.lt.s32.totalorder %v165, %v328
    %vm342 = vcmp.lt.s32.totalorder %v166, %v329
    %vm343 = vcmp.lt.s32.totalorder %v167, %v329
    %vm344 = vcmp.lt.s32.totalorder %v168, %v330
    %vm345 = vcmp.lt.s32.totalorder %v169, %v330
    %vm346 = vcmp.lt.s32.totalorder %v170, %v331
    %vm347 = vcmp.lt.s32.totalorder %v171, %v331
    %v348 = vsel %vm332, 1, 0
    %v349 = vsel %vm333, 1, 0
    %v350 = vsel %vm334, 1, 0
    %v351 = vsel %vm335, 1, 0
    %v352 = vsel %vm336, 1, 0
    %v353 = vsel %vm337, 1, 0
    %v354 = vsel %vm338, 1, 0
    %v355 = vsel %vm339, 1, 0
    %v356 = vsel %vm340, 1, 0
    %v357 = vsel %vm341, 1, 0
    %v358 = vsel %vm342, 1, 0
    %v359 = vsel %vm343, 1, 0
    %v360 = vsel %vm344, 1, 0
    %v361 = vsel %vm345, 1, 0
    %v362 = vsel %vm346, 1, 0
    %v363 = vsel %vm347, 1, 0
    %v364 = vadd.s32 %v348, %v349
    %v365 = vand.u32 %v364, 65535
    %v366 = vshrl.u32 %v364, 16
    %v367 = vcvt.s32.f32 %v365
    %v368 = vcvt.s32.f32 %v366
    %369 = vadd.xlane.f32.xlu0 %v367
    %v370 = vpop.xlane.xlu0 %369
    %371 = vadd.xlane.f32.xlu0 %v368
    %v372 = vpop.xlane.xlu0 %371
    %v373 = vcvt.f32.s32 %v370
    %v374 = vcvt.f32.s32 %v372
    %v375 = vshll.u32 %v374, 16
    %v376 = vadd.s32 %v375, %v373
    %v377 = vadd.s32 %v350, %v351
    %v378 = vand.u32 %v377, 65535
    %v379 = vshrl.u32 %v377, 16
    %v380 = vcvt.s32.f32 %v378
    %v381 = vcvt.s32.f32 %v379
    %382 = vadd.xlane.f32.xlu0 %v380
    %v383 = vpop.xlane.xlu0 %382
    %384 = vadd.xlane.f32.xlu0 %v381
    %v385 = vpop.xlane.xlu0 %384
    %v386 = vcvt.f32.s32 %v383
    %v387 = vcvt.f32.s32 %v385
    %v388 = vshll.u32 %v387, 16
    %v389 = vadd.s32 %v388, %v386
    %v390 = vadd.s32 %v352, %v353
    %v391 = vand.u32 %v390, 65535
    %v392 = vshrl.u32 %v390, 16
    %v393 = vcvt.s32.f32 %v391
    %v394 = vcvt.s32.f32 %v392
    %395 = vadd.xlane.f32.xlu0 %v393
    %v396 = vpop.xlane.xlu0 %395
    %397 = vadd.xlane.f32.xlu0 %v394
    %v398 = vpop.xlane.xlu0 %397
    %v399 = vcvt.f32.s32 %v396
    %v400 = vcvt.f32.s32 %v398
    %v401 = vshll.u32 %v400, 16
    %v402 = vadd.s32 %v401, %v399
    %v403 = vadd.s32 %v354, %v355
    %v404 = vand.u32 %v403, 65535
    %v405 = vshrl.u32 %v403, 16
    %v406 = vcvt.s32.f32 %v404
    %v407 = vcvt.s32.f32 %v405
    %408 = vadd.xlane.f32.xlu0 %v406
    %v409 = vpop.xlane.xlu0 %408
    %410 = vadd.xlane.f32.xlu0 %v407
    %v411 = vpop.xlane.xlu0 %410
    %v412 = vcvt.f32.s32 %v409
    %v413 = vcvt.f32.s32 %v411
    %v414 = vshll.u32 %v413, 16
    %v415 = vadd.s32 %v414, %v412
    %v416 = vadd.s32 %v356, %v357
    %v417 = vand.u32 %v416, 65535
    %v418 = vshrl.u32 %v416, 16
    %v419 = vcvt.s32.f32 %v417
    %v420 = vcvt.s32.f32 %v418
    %421 = vadd.xlane.f32.xlu0 %v419
    %v422 = vpop.xlane.xlu0 %421
    %423 = vadd.xlane.f32.xlu0 %v420
    %v424 = vpop.xlane.xlu0 %423
    %v425 = vcvt.f32.s32 %v422
    %v426 = vcvt.f32.s32 %v424
    %v427 = vshll.u32 %v426, 16
    %v428 = vadd.s32 %v427, %v425
    %v429 = vadd.s32 %v358, %v359
    %v430 = vand.u32 %v429, 65535
    %v431 = vshrl.u32 %v429, 16
    %v432 = vcvt.s32.f32 %v430
    %v433 = vcvt.s32.f32 %v431
    %434 = vadd.xlane.f32.xlu0 %v432
    %v435 = vpop.xlane.xlu0 %434
    %436 = vadd.xlane.f32.xlu0 %v433
    %v437 = vpop.xlane.xlu0 %436
    %v438 = vcvt.f32.s32 %v435
    %v439 = vcvt.f32.s32 %v437
    %v440 = vshll.u32 %v439, 16
    %v441 = vadd.s32 %v440, %v438
    %v442 = vadd.s32 %v360, %v361
    %v443 = vand.u32 %v442, 65535
    %v444 = vshrl.u32 %v442, 16
    %v445 = vcvt.s32.f32 %v443
    %v446 = vcvt.s32.f32 %v444
    %447 = vadd.xlane.f32.xlu0 %v445
    %v448 = vpop.xlane.xlu0 %447
    %449 = vadd.xlane.f32.xlu0 %v446
    %v450 = vpop.xlane.xlu0 %449
    %v451 = vcvt.f32.s32 %v448
    %v452 = vcvt.f32.s32 %v450
    %v453 = vshll.u32 %v452, 16
    %v454 = vadd.s32 %v453, %v451
    %v455 = vadd.s32 %v362, %v363
    %v456 = vand.u32 %v455, 65535
    %v457 = vshrl.u32 %v455, 16
    %v458 = vcvt.s32.f32 %v456
    %v459 = vcvt.s32.f32 %v457
    %460 = vadd.xlane.f32.xlu0 %v458
    %v461 = vpop.xlane.xlu0 %460
    %462 = vadd.xlane.f32.xlu0 %v459
    %v463 = vpop.xlane.xlu0 %462
    %v464 = vcvt.f32.s32 %v461
    %v465 = vcvt.f32.s32 %v463
    %v466 = vshll.u32 %v465, 16
    %v467 = vadd.s32 %v466, %v464
    %vm468 = vcmp.le.s32.totalorder %v376, 127
    %vm469 = vcmp.le.s32.totalorder %v389, 127
    %vm470 = vcmp.le.s32.totalorder %v402, 127
    %vm471 = vcmp.le.s32.totalorder %v415, 127
    %vm472 = vcmp.le.s32.totalorder %v428, 127
    %vm473 = vcmp.le.s32.totalorder %v441, 127
    %vm474 = vcmp.le.s32.totalorder %v454, 127
    %vm475 = vcmp.le.s32.totalorder %v467, 127
    %v476 = vsel %vm468, %v324, %v316
    %v477 = vsel %vm469, %v325, %v317
    %v478 = vsel %vm470, %v326, %v318
    %v479 = vsel %vm471, %v327, %v319
    %v480 = vsel %vm472, %v328, %v320
    %v481 = vsel %vm473, %v329, %v321
    %v482 = vsel %vm474, %v330, %v322
    %v483 = vsel %vm475, %v331, %v323
    %v484 = vor.u32 %v476, 536870912
    %v485 = vor.u32 %v477, 536870912
    %v486 = vor.u32 %v478, 536870912
    %v487 = vor.u32 %v479, 536870912
    %v488 = vor.u32 %v480, 536870912
    %v489 = vor.u32 %v481, 536870912
    %v490 = vor.u32 %v482, 536870912
    %v491 = vor.u32 %v483, 536870912
    %vm492 = vcmp.lt.s32.totalorder %v156, %v484
    %vm493 = vcmp.lt.s32.totalorder %v157, %v484
    %vm494 = vcmp.lt.s32.totalorder %v158, %v485
    %vm495 = vcmp.lt.s32.totalorder %v159, %v485
    %vm496 = vcmp.lt.s32.totalorder %v160, %v486
    %vm497 = vcmp.lt.s32.totalorder %v161, %v486
    %vm498 = vcmp.lt.s32.totalorder %v162, %v487
    %vm499 = vcmp.lt.s32.totalorder %v163, %v487
    %vm500 = vcmp.lt.s32.totalorder %v164, %v488
    %vm501 = vcmp.lt.s32.totalorder %v165, %v488
    %vm502 = vcmp.lt.s32.totalorder %v166, %v489
    %vm503 = vcmp.lt.s32.totalorder %v167, %v489
    %vm504 = vcmp.lt.s32.totalorder %v168, %v490
    %vm505 = vcmp.lt.s32.totalorder %v169, %v490
    %vm506 = vcmp.lt.s32.totalorder %v170, %v491
    %vm507 = vcmp.lt.s32.totalorder %v171, %v491
    %v508 = vsel %vm492, 1, 0
    %v509 = vsel %vm493, 1, 0
    %v510 = vsel %vm494, 1, 0
    %v511 = vsel %vm495, 1, 0
    %v512 = vsel %vm496, 1, 0
    %v513 = vsel %vm497, 1, 0
    %v514 = vsel %vm498, 1, 0
    %v515 = vsel %vm499, 1, 0
    %v516 = vsel %vm500, 1, 0
    %v517 = vsel %vm501, 1, 0
    %v518 = vsel %vm502, 1, 0
    %v519 = vsel %vm503, 1, 0
    %v520 = vsel %vm504, 1, 0
    %v521 = vsel %vm505, 1, 0
    %v522 = vsel %vm506, 1, 0
    %v523 = vsel %vm507, 1, 0
    %v524 = vadd.s32 %v508, %v509
    %v525 = vand.u32 %v524, 65535
    %v526 = vshrl.u32 %v524, 16
    %v527 = vcvt.s32.f32 %v525
    %v528 = vcvt.s32.f32 %v526
    %529 = vadd.xlane.f32.xlu0 %v527
    %v530 = vpop.xlane.xlu0 %529
    %531 = vadd.xlane.f32.xlu0 %v528
    %v532 = vpop.xlane.xlu0 %531
    %v533 = vcvt.f32.s32 %v530
    %v534 = vcvt.f32.s32 %v532
    %v535 = vshll.u32 %v534, 16
    %v536 = vadd.s32 %v535, %v533
    %v537 = vadd.s32 %v510, %v511
    %v538 = vand.u32 %v537, 65535
    %v539 = vshrl.u32 %v537, 16
    %v540 = vcvt.s32.f32 %v538
    %v541 = vcvt.s32.f32 %v539
    %542 = vadd.xlane.f32.xlu0 %v540
    %v543 = vpop.xlane.xlu0 %542
    %544 = vadd.xlane.f32.xlu0 %v541
    %v545 = vpop.xlane.xlu0 %544
    %v546 = vcvt.f32.s32 %v543
    %v547 = vcvt.f32.s32 %v545
    %v548 = vshll.u32 %v547, 16
    %v549 = vadd.s32 %v548, %v546
    %v550 = vadd.s32 %v512, %v513
    %v551 = vand.u32 %v550, 65535
    %v552 = vshrl.u32 %v550, 16
    %v553 = vcvt.s32.f32 %v551
    %v554 = vcvt.s32.f32 %v552
    %555 = vadd.xlane.f32.xlu0 %v553
    %v556 = vpop.xlane.xlu0 %555
    %557 = vadd.xlane.f32.xlu0 %v554
    %v558 = vpop.xlane.xlu0 %557
    %v559 = vcvt.f32.s32 %v556
    %v560 = vcvt.f32.s32 %v558
    %v561 = vshll.u32 %v560, 16
    %v562 = vadd.s32 %v561, %v559
    %v563 = vadd.s32 %v514, %v515
    %v564 = vand.u32 %v563, 65535
    %v565 = vshrl.u32 %v563, 16
    %v566 = vcvt.s32.f32 %v564
    %v567 = vcvt.s32.f32 %v565
    %568 = vadd.xlane.f32.xlu0 %v566
    %v569 = vpop.xlane.xlu0 %568
    %570 = vadd.xlane.f32.xlu0 %v567
    %v571 = vpop.xlane.xlu0 %570
    %v572 = vcvt.f32.s32 %v569
    %v573 = vcvt.f32.s32 %v571
    %v574 = vshll.u32 %v573, 16
    %v575 = vadd.s32 %v574, %v572
    %v576 = vadd.s32 %v516, %v517
    %v577 = vand.u32 %v576, 65535
    %v578 = vshrl.u32 %v576, 16
    %v579 = vcvt.s32.f32 %v577
    %v580 = vcvt.s32.f32 %v578
    %581 = vadd.xlane.f32.xlu0 %v579
    %v582 = vpop.xlane.xlu0 %581
    %583 = vadd.xlane.f32.xlu0 %v580
    %v584 = vpop.xlane.xlu0 %583
    %v585 = vcvt.f32.s32 %v582
    %v586 = vcvt.f32.s32 %v584
    %v587 = vshll.u32 %v586, 16
    %v588 = vadd.s32 %v587, %v585
    %v589 = vadd.s32 %v518, %v519
    %v590 = vand.u32 %v589, 65535
    %v591 = vshrl.u32 %v589, 16
    %v592 = vcvt.s32.f32 %v590
    %v593 = vcvt.s32.f32 %v591
    %594 = vadd.xlane.f32.xlu0 %v592
    %v595 = vpop.xlane.xlu0 %594
    %596 = vadd.xlane.f32.xlu0 %v593
    %v597 = vpop.xlane.xlu0 %596
    %v598 = vcvt.f32.s32 %v595
    %v599 = vcvt.f32.s32 %v597
    %v600 = vshll.u32 %v599, 16
    %v601 = vadd.s32 %v600, %v598
    %v602 = vadd.s32 %v520, %v521
    %v603 = vand.u32 %v602, 65535
    %v604 = vshrl.u32 %v602, 16
    %v605 = vcvt.s32.f32 %v603
    %v606 = vcvt.s32.f32 %v604
    %607 = vadd.xlane.f32.xlu0 %v605
    %v608 = vpop.xlane.xlu0 %607
    %609 = vadd.xlane.f32.xlu0 %v606
    %v610 = vpop.xlane.xlu0 %609
    %v611 = vcvt.f32.s32 %v608
    %v612 = vcvt.f32.s32 %v610
    %v613 = vshll.u32 %v612, 16
    %v614 = vadd.s32 %v613, %v611
    %v615 = vadd.s32 %v522, %v523
    %v616 = vand.u32 %v615, 65535
    %v617 = vshrl.u32 %v615, 16
    %v618 = vcvt.s32.f32 %v616
    %v619 = vcvt.s32.f32 %v617
    %620 = vadd.xlane.f32.xlu0 %v618
    %v621 = vpop.xlane.xlu0 %620
    %622 = vadd.xlane.f32.xlu0 %v619
    %v623 = vpop.xlane.xlu0 %622
    %v624 = vcvt.f32.s32 %v621
    %v625 = vcvt.f32.s32 %v623
    %v626 = vshll.u32 %v625, 16
    %v627 = vadd.s32 %v626, %v624
    %vm628 = vcmp.le.s32.totalorder %v536, 127
    %vm629 = vcmp.le.s32.totalorder %v549, 127
    %vm630 = vcmp.le.s32.totalorder %v562, 127
    %vm631 = vcmp.le.s32.totalorder %v575, 127
    %vm632 = vcmp.le.s32.totalorder %v588, 127
    %vm633 = vcmp.le.s32.totalorder %v601, 127
    %vm634 = vcmp.le.s32.totalorder %v614, 127
    %vm635 = vcmp.le.s32.totalorder %v627, 127
    %v636 = vsel %vm628, %v484, %v476
    %v637 = vsel %vm629, %v485, %v477
    %v638 = vsel %vm630, %v486, %v478
    %v639 = vsel %vm631, %v487, %v479
    %v640 = vsel %vm632, %v488, %v480
    %v641 = vsel %vm633, %v489, %v481
    %v642 = vsel %vm634, %v490, %v482
    %v643 = vsel %vm635, %v491, %v483
    %v644 = vor.u32 %v636, 268435456
    %v645 = vor.u32 %v637, 268435456
    %v646 = vor.u32 %v638, 268435456
    %v647 = vor.u32 %v639, 268435456
    %v648 = vor.u32 %v640, 268435456
    %v649 = vor.u32 %v641, 268435456
    %v650 = vor.u32 %v642, 268435456
    %v651 = vor.u32 %v643, 268435456
    %vm652 = vcmp.lt.s32.totalorder %v156, %v644
    %vm653 = vcmp.lt.s32.totalorder %v157, %v644
    %vm654 = vcmp.lt.s32.totalorder %v158, %v645
    %vm655 = vcmp.lt.s32.totalorder %v159, %v645
    %vm656 = vcmp.lt.s32.totalorder %v160, %v646
    %vm657 = vcmp.lt.s32.totalorder %v161, %v646
    %vm658 = vcmp.lt.s32.totalorder %v162, %v647
    %vm659 = vcmp.lt.s32.totalorder %v163, %v647
    %vm660 = vcmp.lt.s32.totalorder %v164, %v648
    %vm661 = vcmp.lt.s32.totalorder %v165, %v648
    %vm662 = vcmp.lt.s32.totalorder %v166, %v649
    %vm663 = vcmp.lt.s32.totalorder %v167, %v649
    %vm664 = vcmp.lt.s32.totalorder %v168, %v650
    %vm665 = vcmp.lt.s32.totalorder %v169, %v650
    %vm666 = vcmp.lt.s32.totalorder %v170, %v651
    %vm667 = vcmp.lt.s32.totalorder %v171, %v651
    %v668 = vsel %vm652, 1, 0
    %v669 = vsel %vm653, 1, 0
    %v670 = vsel %vm654, 1, 0
    %v671 = vsel %vm655, 1, 0
    %v672 = vsel %vm656, 1, 0
    %v673 = vsel %vm657, 1, 0
    %v674 = vsel %vm658, 1, 0
    %v675 = vsel %vm659, 1, 0
    %v676 = vsel %vm660, 1, 0
    %v677 = vsel %vm661, 1, 0
    %v678 = vsel %vm662, 1, 0
    %v679 = vsel %vm663, 1, 0
    %v680 = vsel %vm664, 1, 0
    %v681 = vsel %vm665, 1, 0
    %v682 = vsel %vm666, 1, 0
    %v683 = vsel %vm667, 1, 0
    %v684 = vadd.s32 %v668, %v669
    %v685 = vand.u32 %v684, 65535
    %v686 = vshrl.u32 %v684, 16
    %v687 = vcvt.s32.f32 %v685
    %v688 = vcvt.s32.f32 %v686
    %689 = vadd.xlane.f32.xlu0 %v687
    %v690 = vpop.xlane.xlu0 %689
    %691 = vadd.xlane.f32.xlu0 %v688
    %v692 = vpop.xlane.xlu0 %691
    %v693 = vcvt.f32.s32 %v690
    %v694 = vcvt.f32.s32 %v692
    %v695 = vshll.u32 %v694, 16
    %v696 = vadd.s32 %v695, %v693
    %v697 = vadd.s32 %v670, %v671
    %v698 = vand.u32 %v697, 65535
    %v699 = vshrl.u32 %v697, 16
    %v700 = vcvt.s32.f32 %v698
    %v701 = vcvt.s32.f32 %v699
    %702 = vadd.xlane.f32.xlu0 %v700
    %v703 = vpop.xlane.xlu0 %702
    %704 = vadd.xlane.f32.xlu0 %v701
    %v705 = vpop.xlane.xlu0 %704
    %v706 = vcvt.f32.s32 %v703
    %v707 = vcvt.f32.s32 %v705
    %v708 = vshll.u32 %v707, 16
    %v709 = vadd.s32 %v708, %v706
    %v710 = vadd.s32 %v672, %v673
    %v711 = vand.u32 %v710, 65535
    %v712 = vshrl.u32 %v710, 16
    %v713 = vcvt.s32.f32 %v711
    %v714 = vcvt.s32.f32 %v712
    %715 = vadd.xlane.f32.xlu0 %v713
    %v716 = vpop.xlane.xlu0 %715
    %717 = vadd.xlane.f32.xlu0 %v714
    %v718 = vpop.xlane.xlu0 %717
    %v719 = vcvt.f32.s32 %v716
    %v720 = vcvt.f32.s32 %v718
    %v721 = vshll.u32 %v720, 16
    %v722 = vadd.s32 %v721, %v719
    %v723 = vadd.s32 %v674, %v675
    %v724 = vand.u32 %v723, 65535
    %v725 = vshrl.u32 %v723, 16
    %v726 = vcvt.s32.f32 %v724
    %v727 = vcvt.s32.f32 %v725
    %728 = vadd.xlane.f32.xlu0 %v726
    %v729 = vpop.xlane.xlu0 %728
    %730 = vadd.xlane.f32.xlu0 %v727
    %v731 = vpop.xlane.xlu0 %730
    %v732 = vcvt.f32.s32 %v729
    %v733 = vcvt.f32.s32 %v731
    %v734 = vshll.u32 %v733, 16
    %v735 = vadd.s32 %v734, %v732
    %v736 = vadd.s32 %v676, %v677
    %v737 = vand.u32 %v736, 65535
    %v738 = vshrl.u32 %v736, 16
    %v739 = vcvt.s32.f32 %v737
    %v740 = vcvt.s32.f32 %v738
    %741 = vadd.xlane.f32.xlu0 %v739
    %v742 = vpop.xlane.xlu0 %741
    %743 = vadd.xlane.f32.xlu0 %v740
    %v744 = vpop.xlane.xlu0 %743
    %v745 = vcvt.f32.s32 %v742
    %v746 = vcvt.f32.s32 %v744
    %v747 = vshll.u32 %v746, 16
    %v748 = vadd.s32 %v747, %v745
    %v749 = vadd.s32 %v678, %v679
    %v750 = vand.u32 %v749, 65535
    %v751 = vshrl.u32 %v749, 16
    %v752 = vcvt.s32.f32 %v750
    %v753 = vcvt.s32.f32 %v751
    %754 = vadd.xlane.f32.xlu0 %v752
    %v755 = vpop.xlane.xlu0 %754
    %756 = vadd.xlane.f32.xlu0 %v753
    %v757 = vpop.xlane.xlu0 %756
    %v758 = vcvt.f32.s32 %v755
    %v759 = vcvt.f32.s32 %v757
    %v760 = vshll.u32 %v759, 16
    %v761 = vadd.s32 %v760, %v758
    %v762 = vadd.s32 %v680, %v681
    %v763 = vand.u32 %v762, 65535
    %v764 = vshrl.u32 %v762, 16
    %v765 = vcvt.s32.f32 %v763
    %v766 = vcvt.s32.f32 %v764
    %767 = vadd.xlane.f32.xlu0 %v765
    %v768 = vpop.xlane.xlu0 %767
    %769 = vadd.xlane.f32.xlu0 %v766
    %v770 = vpop.xlane.xlu0 %769
    %v771 = vcvt.f32.s32 %v768
    %v772 = vcvt.f32.s32 %v770
    %v773 = vshll.u32 %v772, 16
    %v774 = vadd.s32 %v773, %v771
    %v775 = vadd.s32 %v682, %v683
    %v776 = vand.u32 %v775, 65535
    %v777 = vshrl.u32 %v775, 16
    %v778 = vcvt.s32.f32 %v776
    %v779 = vcvt.s32.f32 %v777
    %780 = vadd.xlane.f32.xlu0 %v778
    %v781 = vpop.xlane.xlu0 %780
    %782 = vadd.xlane.f32.xlu0 %v779
    %v783 = vpop.xlane.xlu0 %782
    %v784 = vcvt.f32.s32 %v781
    %v785 = vcvt.f32.s32 %v783
    %v786 = vshll.u32 %v785, 16
    %v787 = vadd.s32 %v786, %v784
    %vm788 = vcmp.le.s32.totalorder %v696, 127
    %vm789 = vcmp.le.s32.totalorder %v709, 127
    %vm790 = vcmp.le.s32.totalorder %v722, 127
    %vm791 = vcmp.le.s32.totalorder %v735, 127
    %vm792 = vcmp.le.s32.totalorder %v748, 127
    %vm793 = vcmp.le.s32.totalorder %v761, 127
    %vm794 = vcmp.le.s32.totalorder %v774, 127
    %vm795 = vcmp.le.s32.totalorder %v787, 127
    %v796 = vsel %vm788, %v644, %v636
    %v797 = vsel %vm789, %v645, %v637
    %v798 = vsel %vm790, %v646, %v638
    %v799 = vsel %vm791, %v647, %v639
    %v800 = vsel %vm792, %v648, %v640
    %v801 = vsel %vm793, %v649, %v641
    %v802 = vsel %vm794, %v650, %v642
    %v803 = vsel %vm795, %v651, %v643
    %v804 = vor.u32 %v796, 134217728
    %v805 = vor.u32 %v797, 134217728
    %v806 = vor.u32 %v798, 134217728
    %v807 = vor.u32 %v799, 134217728
    %v808 = vor.u32 %v800, 134217728
    %v809 = vor.u32 %v801, 134217728
    %v810 = vor.u32 %v802, 134217728
    %v811 = vor.u32 %v803, 134217728
    %vm812 = vcmp.lt.s32.totalorder %v156, %v804
    %vm813 = vcmp.lt.s32.totalorder %v157, %v804
    %vm814 = vcmp.lt.s32.totalorder %v158, %v805
    %vm815 = vcmp.lt.s32.totalorder %v159, %v805
    %vm816 = vcmp.lt.s32.totalorder %v160, %v806
    %vm817 = vcmp.lt.s32.totalorder %v161, %v806
    %vm818 = vcmp.lt.s32.totalorder %v162, %v807
    %vm819 = vcmp.lt.s32.totalorder %v163, %v807
    %vm820 = vcmp.lt.s32.totalorder %v164, %v808
    %vm821 = vcmp.lt.s32.totalorder %v165, %v808
    %vm822 = vcmp.lt.s32.totalorder %v166, %v809
    %vm823 = vcmp.lt.s32.totalorder %v167, %v809
    %vm824 = vcmp.lt.s32.totalorder %v168, %v810
    %vm825 = vcmp.lt.s32.totalorder %v169, %v810
    %vm826 = vcmp.lt.s32.totalorder %v170, %v811
    %vm827 = vcmp.lt.s32.totalorder %v171, %v811
    %v828 = vsel %vm812, 1, 0
    %v829 = vsel %vm813, 1, 0
    %v830 = vsel %vm814, 1, 0
    %v831 = vsel %vm815, 1, 0
    %v832 = vsel %vm816, 1, 0
    %v833 = vsel %vm817, 1, 0
    %v834 = vsel %vm818, 1, 0
    %v835 = vsel %vm819, 1, 0
    %v836 = vsel %vm820, 1, 0
    %v837 = vsel %vm821, 1, 0
    %v838 = vsel %vm822, 1, 0
    %v839 = vsel %vm823, 1, 0
    %v840 = vsel %vm824, 1, 0
    %v841 = vsel %vm825, 1, 0
    %v842 = vsel %vm826, 1, 0
    %v843 = vsel %vm827, 1, 0
    %v844 = vadd.s32 %v828, %v829
    %v845 = vand.u32 %v844, 65535
    %v846 = vshrl.u32 %v844, 16
    %v847 = vcvt.s32.f32 %v845
    %v848 = vcvt.s32.f32 %v846
    %849 = vadd.xlane.f32.xlu0 %v847
    %v850 = vpop.xlane.xlu0 %849
    %851 = vadd.xlane.f32.xlu0 %v848
    %v852 = vpop.xlane.xlu0 %851
    %v853 = vcvt.f32.s32 %v850
    %v854 = vcvt.f32.s32 %v852
    %v855 = vshll.u32 %v854, 16
    %v856 = vadd.s32 %v855, %v853
    %v857 = vadd.s32 %v830, %v831
    %v858 = vand.u32 %v857, 65535
    %v859 = vshrl.u32 %v857, 16
    %v860 = vcvt.s32.f32 %v858
    %v861 = vcvt.s32.f32 %v859
    %862 = vadd.xlane.f32.xlu0 %v860
    %v863 = vpop.xlane.xlu0 %862
    %864 = vadd.xlane.f32.xlu0 %v861
    %v865 = vpop.xlane.xlu0 %864
    %v866 = vcvt.f32.s32 %v863
    %v867 = vcvt.f32.s32 %v865
    %v868 = vshll.u32 %v867, 16
    %v869 = vadd.s32 %v868, %v866
    %v870 = vadd.s32 %v832, %v833
    %v871 = vand.u32 %v870, 65535
    %v872 = vshrl.u32 %v870, 16
    %v873 = vcvt.s32.f32 %v871
    %v874 = vcvt.s32.f32 %v872
    %875 = vadd.xlane.f32.xlu0 %v873
    %v876 = vpop.xlane.xlu0 %875
    %877 = vadd.xlane.f32.xlu0 %v874
    %v878 = vpop.xlane.xlu0 %877
    %v879 = vcvt.f32.s32 %v876
    %v880 = vcvt.f32.s32 %v878
    %v881 = vshll.u32 %v880, 16
    %v882 = vadd.s32 %v881, %v879
    %v883 = vadd.s32 %v834, %v835
    %v884 = vand.u32 %v883, 65535
    %v885 = vshrl.u32 %v883, 16
    %v886 = vcvt.s32.f32 %v884
    %v887 = vcvt.s32.f32 %v885
    %888 = vadd.xlane.f32.xlu0 %v886
    %v889 = vpop.xlane.xlu0 %888
    %890 = vadd.xlane.f32.xlu0 %v887
    %v891 = vpop.xlane.xlu0 %890
    %v892 = vcvt.f32.s32 %v889
    %v893 = vcvt.f32.s32 %v891
    %v894 = vshll.u32 %v893, 16
    %v895 = vadd.s32 %v894, %v892
    %v896 = vadd.s32 %v836, %v837
    %v897 = vand.u32 %v896, 65535
    %v898 = vshrl.u32 %v896, 16
    %v899 = vcvt.s32.f32 %v897
    %v900 = vcvt.s32.f32 %v898
    %901 = vadd.xlane.f32.xlu0 %v899
    %v902 = vpop.xlane.xlu0 %901
    %903 = vadd.xlane.f32.xlu0 %v900
    %v904 = vpop.xlane.xlu0 %903
    %v905 = vcvt.f32.s32 %v902
    %v906 = vcvt.f32.s32 %v904
    %v907 = vshll.u32 %v906, 16
    %v908 = vadd.s32 %v907, %v905
    %v909 = vadd.s32 %v838, %v839
    %v910 = vand.u32 %v909, 65535
    %v911 = vshrl.u32 %v909, 16
    %v912 = vcvt.s32.f32 %v910
    %v913 = vcvt.s32.f32 %v911
    %914 = vadd.xlane.f32.xlu0 %v912
    %v915 = vpop.xlane.xlu0 %914
    %916 = vadd.xlane.f32.xlu0 %v913
    %v917 = vpop.xlane.xlu0 %916
    %v918 = vcvt.f32.s32 %v915
    %v919 = vcvt.f32.s32 %v917
    %v920 = vshll.u32 %v919, 16
    %v921 = vadd.s32 %v920, %v918
    %v922 = vadd.s32 %v840, %v841
    %v923 = vand.u32 %v922, 65535
    %v924 = vshrl.u32 %v922, 16
    %v925 = vcvt.s32.f32 %v923
    %v926 = vcvt.s32.f32 %v924
    %927 = vadd.xlane.f32.xlu0 %v925
    %v928 = vpop.xlane.xlu0 %927
    %929 = vadd.xlane.f32.xlu0 %v926
    %v930 = vpop.xlane.xlu0 %929
    %v931 = vcvt.f32.s32 %v928
    %v932 = vcvt.f32.s32 %v930
    %v933 = vshll.u32 %v932, 16
    %v934 = vadd.s32 %v933, %v931
    %v935 = vadd.s32 %v842, %v843
    %v936 = vand.u32 %v935, 65535
    %v937 = vshrl.u32 %v935, 16
    %v938 = vcvt.s32.f32 %v936
    %v939 = vcvt.s32.f32 %v937
    %940 = vadd.xlane.f32.xlu0 %v938
    %v941 = vpop.xlane.xlu0 %940
    %942 = vadd.xlane.f32.xlu0 %v939
    %v943 = vpop.xlane.xlu0 %942
    %v944 = vcvt.f32.s32 %v941
    %v945 = vcvt.f32.s32 %v943
    %v946 = vshll.u32 %v945, 16
    %v947 = vadd.s32 %v946, %v944
    %vm948 = vcmp.le.s32.totalorder %v856, 127
    %vm949 = vcmp.le.s32.totalorder %v869, 127
    %vm950 = vcmp.le.s32.totalorder %v882, 127
    %vm951 = vcmp.le.s32.totalorder %v895, 127
    %vm952 = vcmp.le.s32.totalorder %v908, 127
    %vm953 = vcmp.le.s32.totalorder %v921, 127
    %vm954 = vcmp.le.s32.totalorder %v934, 127
    %vm955 = vcmp.le.s32.totalorder %v947, 127
    %v956 = vsel %vm948, %v804, %v796
    %v957 = vsel %vm949, %v805, %v797
    %v958 = vsel %vm950, %v806, %v798
    %v959 = vsel %vm951, %v807, %v799
    %v960 = vsel %vm952, %v808, %v800
    %v961 = vsel %vm953, %v809, %v801
    %v962 = vsel %vm954, %v810, %v802
    %v963 = vsel %vm955, %v811, %v803
    %v964 = vor.u32 %v956, 67108864
    %v965 = vor.u32 %v957, 67108864
    %v966 = vor.u32 %v958, 67108864
    %v967 = vor.u32 %v959, 67108864
    %v968 = vor.u32 %v960, 67108864
    %v969 = vor.u32 %v961, 67108864
    %v970 = vor.u32 %v962, 67108864
    %v971 = vor.u32 %v963, 67108864
    %vm972 = vcmp.lt.s32.totalorder %v156, %v964
    %vm973 = vcmp.lt.s32.totalorder %v157, %v964
    %vm974 = vcmp.lt.s32.totalorder %v158, %v965
    %vm975 = vcmp.lt.s32.totalorder %v159, %v965
    %vm976 = vcmp.lt.s32.totalorder %v160, %v966
    %vm977 = vcmp.lt.s32.totalorder %v161, %v966
    %vm978 = vcmp.lt.s32.totalorder %v162, %v967
    %vm979 = vcmp.lt.s32.totalorder %v163, %v967
    %vm980 = vcmp.lt.s32.totalorder %v164, %v968
    %vm981 = vcmp.lt.s32.totalorder %v165, %v968
    %vm982 = vcmp.lt.s32.totalorder %v166, %v969
    %vm983 = vcmp.lt.s32.totalorder %v167, %v969
    %vm984 = vcmp.lt.s32.totalorder %v168, %v970
    %vm985 = vcmp.lt.s32.totalorder %v169, %v970
    %vm986 = vcmp.lt.s32.totalorder %v170, %v971
    %vm987 = vcmp.lt.s32.totalorder %v171, %v971
    %v988 = vsel %vm972, 1, 0
    %v989 = vsel %vm973, 1, 0
    %v990 = vsel %vm974, 1, 0
    %v991 = vsel %vm975, 1, 0
    %v992 = vsel %vm976, 1, 0
    %v993 = vsel %vm977, 1, 0
    %v994 = vsel %vm978, 1, 0
    %v995 = vsel %vm979, 1, 0
    %v996 = vsel %vm980, 1, 0
    %v997 = vsel %vm981, 1, 0
    %v998 = vsel %vm982, 1, 0
    %v999 = vsel %vm983, 1, 0
    %v1000 = vsel %vm984, 1, 0
    %v1001 = vsel %vm985, 1, 0
    %v1002 = vsel %vm986, 1, 0
    %v1003 = vsel %vm987, 1, 0
    %v1004 = vadd.s32 %v988, %v989
    %v1005 = vand.u32 %v1004, 65535
    %v1006 = vshrl.u32 %v1004, 16
    %v1007 = vcvt.s32.f32 %v1005
    %v1008 = vcvt.s32.f32 %v1006
    %1009 = vadd.xlane.f32.xlu0 %v1007
    %v1010 = vpop.xlane.xlu0 %1009
    %1011 = vadd.xlane.f32.xlu0 %v1008
    %v1012 = vpop.xlane.xlu0 %1011
    %v1013 = vcvt.f32.s32 %v1010
    %v1014 = vcvt.f32.s32 %v1012
    %v1015 = vshll.u32 %v1014, 16
    %v1016 = vadd.s32 %v1015, %v1013
    %v1017 = vadd.s32 %v990, %v991
    %v1018 = vand.u32 %v1017, 65535
    %v1019 = vshrl.u32 %v1017, 16
    %v1020 = vcvt.s32.f32 %v1018
    %v1021 = vcvt.s32.f32 %v1019
    %1022 = vadd.xlane.f32.xlu0 %v1020
    %v1023 = vpop.xlane.xlu0 %1022
    %1024 = vadd.xlane.f32.xlu0 %v1021
    %v1025 = vpop.xlane.xlu0 %1024
    %v1026 = vcvt.f32.s32 %v1023
    %v1027 = vcvt.f32.s32 %v1025
    %v1028 = vshll.u32 %v1027, 16
    %v1029 = vadd.s32 %v1028, %v1026
    %v1030 = vadd.s32 %v992, %v993
    %v1031 = vand.u32 %v1030, 65535
    %v1032 = vshrl.u32 %v1030, 16
    %v1033 = vcvt.s32.f32 %v1031
    %v1034 = vcvt.s32.f32 %v1032
    %1035 = vadd.xlane.f32.xlu0 %v1033
    %v1036 = vpop.xlane.xlu0 %1035
    %1037 = vadd.xlane.f32.xlu0 %v1034
    %v1038 = vpop.xlane.xlu0 %1037
    %v1039 = vcvt.f32.s32 %v1036
    %v1040 = vcvt.f32.s32 %v1038
    %v1041 = vshll.u32 %v1040, 16
    %v1042 = vadd.s32 %v1041, %v1039
    %v1043 = vadd.s32 %v994, %v995
    %v1044 = vand.u32 %v1043, 65535
    %v1045 = vshrl.u32 %v1043, 16
    %v1046 = vcvt.s32.f32 %v1044
    %v1047 = vcvt.s32.f32 %v1045
    %1048 = vadd.xlane.f32.xlu0 %v1046
    %v1049 = vpop.xlane.xlu0 %1048
    %1050 = vadd.xlane.f32.xlu0 %v1047
    %v1051 = vpop.xlane.xlu0 %1050
    %v1052 = vcvt.f32.s32 %v1049
    %v1053 = vcvt.f32.s32 %v1051
    %v1054 = vshll.u32 %v1053, 16
    %v1055 = vadd.s32 %v1054, %v1052
    %v1056 = vadd.s32 %v996, %v997
    %v1057 = vand.u32 %v1056, 65535
    %v1058 = vshrl.u32 %v1056, 16
    %v1059 = vcvt.s32.f32 %v1057
    %v1060 = vcvt.s32.f32 %v1058
    %1061 = vadd.xlane.f32.xlu0 %v1059
    %v1062 = vpop.xlane.xlu0 %1061
    %1063 = vadd.xlane.f32.xlu0 %v1060
    %v1064 = vpop.xlane.xlu0 %1063
    %v1065 = vcvt.f32.s32 %v1062
    %v1066 = vcvt.f32.s32 %v1064
    %v1067 = vshll.u32 %v1066, 16
    %v1068 = vadd.s32 %v1067, %v1065
    %v1069 = vadd.s32 %v998, %v999
    %v1070 = vand.u32 %v1069, 65535
    %v1071 = vshrl.u32 %v1069, 16
    %v1072 = vcvt.s32.f32 %v1070
    %v1073 = vcvt.s32.f32 %v1071
    %1074 = vadd.xlane.f32.xlu0 %v1072
    %v1075 = vpop.xlane.xlu0 %1074
    %1076 = vadd.xlane.f32.xlu0 %v1073
    %v1077 = vpop.xlane.xlu0 %1076
    %v1078 = vcvt.f32.s32 %v1075
    %v1079 = vcvt.f32.s32 %v1077
    %v1080 = vshll.u32 %v1079, 16
    %v1081 = vadd.s32 %v1080, %v1078
    %v1082 = vadd.s32 %v1000, %v1001
    %v1083 = vand.u32 %v1082, 65535
    %v1084 = vshrl.u32 %v1082, 16
    %v1085 = vcvt.s32.f32 %v1083
    %v1086 = vcvt.s32.f32 %v1084
    %1087 = vadd.xlane.f32.xlu0 %v1085
    %v1088 = vpop.xlane.xlu0 %1087
    %1089 = vadd.xlane.f32.xlu0 %v1086
    %v1090 = vpop.xlane.xlu0 %1089
    %v1091 = vcvt.f32.s32 %v1088
    %v1092 = vcvt.f32.s32 %v1090
    %v1093 = vshll.u32 %v1092, 16
    %v1094 = vadd.s32 %v1093, %v1091
    %v1095 = vadd.s32 %v1002, %v1003
    %v1096 = vand.u32 %v1095, 65535
    %v1097 = vshrl.u32 %v1095, 16
    %v1098 = vcvt.s32.f32 %v1096
    %v1099 = vcvt.s32.f32 %v1097
    %1100 = vadd.xlane.f32.xlu0 %v1098
    %v1101 = vpop.xlane.xlu0 %1100
    %1102 = vadd.xlane.f32.xlu0 %v1099
    %v1103 = vpop.xlane.xlu0 %1102
    %v1104 = vcvt.f32.s32 %v1101
    %v1105 = vcvt.f32.s32 %v1103
    %v1106 = vshll.u32 %v1105, 16
    %v1107 = vadd.s32 %v1106, %v1104
    %vm1108 = vcmp.le.s32.totalorder %v1016, 127
    %vm1109 = vcmp.le.s32.totalorder %v1029, 127
    %vm1110 = vcmp.le.s32.totalorder %v1042, 127
    %vm1111 = vcmp.le.s32.totalorder %v1055, 127
    %vm1112 = vcmp.le.s32.totalorder %v1068, 127
    %vm1113 = vcmp.le.s32.totalorder %v1081, 127
    %vm1114 = vcmp.le.s32.totalorder %v1094, 127
    %vm1115 = vcmp.le.s32.totalorder %v1107, 127
    %v1116 = vsel %vm1108, %v964, %v956
    %v1117 = vsel %vm1109, %v965, %v957
    %v1118 = vsel %vm1110, %v966, %v958
    %v1119 = vsel %vm1111, %v967, %v959
    %v1120 = vsel %vm1112, %v968, %v960
    %v1121 = vsel %vm1113, %v969, %v961
    %v1122 = vsel %vm1114, %v970, %v962
    %v1123 = vsel %vm1115, %v971, %v963
    %v1124 = vor.u32 %v1116, 33554432
    %v1125 = vor.u32 %v1117, 33554432
    %v1126 = vor.u32 %v1118, 33554432
    %v1127 = vor.u32 %v1119, 33554432
    %v1128 = vor.u32 %v1120, 33554432
    %v1129 = vor.u32 %v1121, 33554432
    %v1130 = vor.u32 %v1122, 33554432
    %v1131 = vor.u32 %v1123, 33554432
    %vm1132 = vcmp.lt.s32.totalorder %v156, %v1124
    %vm1133 = vcmp.lt.s32.totalorder %v157, %v1124
    %vm1134 = vcmp.lt.s32.totalorder %v158, %v1125
    %vm1135 = vcmp.lt.s32.totalorder %v159, %v1125
    %vm1136 = vcmp.lt.s32.totalorder %v160, %v1126
    %vm1137 = vcmp.lt.s32.totalorder %v161, %v1126
    %vm1138 = vcmp.lt.s32.totalorder %v162, %v1127
    %vm1139 = vcmp.lt.s32.totalorder %v163, %v1127
    %vm1140 = vcmp.lt.s32.totalorder %v164, %v1128
    %vm1141 = vcmp.lt.s32.totalorder %v165, %v1128
    %vm1142 = vcmp.lt.s32.totalorder %v166, %v1129
    %vm1143 = vcmp.lt.s32.totalorder %v167, %v1129
    %vm1144 = vcmp.lt.s32.totalorder %v168, %v1130
    %vm1145 = vcmp.lt.s32.totalorder %v169, %v1130
    %vm1146 = vcmp.lt.s32.totalorder %v170, %v1131
    %vm1147 = vcmp.lt.s32.totalorder %v171, %v1131
    %v1148 = vsel %vm1132, 1, 0
    %v1149 = vsel %vm1133, 1, 0
    %v1150 = vsel %vm1134, 1, 0
    %v1151 = vsel %vm1135, 1, 0
    %v1152 = vsel %vm1136, 1, 0
    %v1153 = vsel %vm1137, 1, 0
    %v1154 = vsel %vm1138, 1, 0
    %v1155 = vsel %vm1139, 1, 0
    %v1156 = vsel %vm1140, 1, 0
    %v1157 = vsel %vm1141, 1, 0
    %v1158 = vsel %vm1142, 1, 0
    %v1159 = vsel %vm1143, 1, 0
    %v1160 = vsel %vm1144, 1, 0
    %v1161 = vsel %vm1145, 1, 0
    %v1162 = vsel %vm1146, 1, 0
    %v1163 = vsel %vm1147, 1, 0
    %v1164 = vadd.s32 %v1148, %v1149
    %v1165 = vand.u32 %v1164, 65535
    %v1166 = vshrl.u32 %v1164, 16
    %v1167 = vcvt.s32.f32 %v1165
    %v1168 = vcvt.s32.f32 %v1166
    %1169 = vadd.xlane.f32.xlu0 %v1167
    %v1170 = vpop.xlane.xlu0 %1169
    %1171 = vadd.xlane.f32.xlu0 %v1168
    %v1172 = vpop.xlane.xlu0 %1171
    %v1173 = vcvt.f32.s32 %v1170
    %v1174 = vcvt.f32.s32 %v1172
    %v1175 = vshll.u32 %v1174, 16
    %v1176 = vadd.s32 %v1175, %v1173
    %v1177 = vadd.s32 %v1150, %v1151
    %v1178 = vand.u32 %v1177, 65535
    %v1179 = vshrl.u32 %v1177, 16
    %v1180 = vcvt.s32.f32 %v1178
    %v1181 = vcvt.s32.f32 %v1179
    %1182 = vadd.xlane.f32.xlu0 %v1180
    %v1183 = vpop.xlane.xlu0 %1182
    %1184 = vadd.xlane.f32.xlu0 %v1181
    %v1185 = vpop.xlane.xlu0 %1184
    %v1186 = vcvt.f32.s32 %v1183
    %v1187 = vcvt.f32.s32 %v1185
    %v1188 = vshll.u32 %v1187, 16
    %v1189 = vadd.s32 %v1188, %v1186
    %v1190 = vadd.s32 %v1152, %v1153
    %v1191 = vand.u32 %v1190, 65535
    %v1192 = vshrl.u32 %v1190, 16
    %v1193 = vcvt.s32.f32 %v1191
    %v1194 = vcvt.s32.f32 %v1192
    %1195 = vadd.xlane.f32.xlu0 %v1193
    %v1196 = vpop.xlane.xlu0 %1195
    %1197 = vadd.xlane.f32.xlu0 %v1194
    %v1198 = vpop.xlane.xlu0 %1197
    %v1199 = vcvt.f32.s32 %v1196
    %v1200 = vcvt.f32.s32 %v1198
    %v1201 = vshll.u32 %v1200, 16
    %v1202 = vadd.s32 %v1201, %v1199
    %v1203 = vadd.s32 %v1154, %v1155
    %v1204 = vand.u32 %v1203, 65535
    %v1205 = vshrl.u32 %v1203, 16
    %v1206 = vcvt.s32.f32 %v1204
    %v1207 = vcvt.s32.f32 %v1205
    %1208 = vadd.xlane.f32.xlu0 %v1206
    %v1209 = vpop.xlane.xlu0 %1208
    %1210 = vadd.xlane.f32.xlu0 %v1207
    %v1211 = vpop.xlane.xlu0 %1210
    %v1212 = vcvt.f32.s32 %v1209
    %v1213 = vcvt.f32.s32 %v1211
    %v1214 = vshll.u32 %v1213, 16
    %v1215 = vadd.s32 %v1214, %v1212
    %v1216 = vadd.s32 %v1156, %v1157
    %v1217 = vand.u32 %v1216, 65535
    %v1218 = vshrl.u32 %v1216, 16
    %v1219 = vcvt.s32.f32 %v1217
    %v1220 = vcvt.s32.f32 %v1218
    %1221 = vadd.xlane.f32.xlu0 %v1219
    %v1222 = vpop.xlane.xlu0 %1221
    %1223 = vadd.xlane.f32.xlu0 %v1220
    %v1224 = vpop.xlane.xlu0 %1223
    %v1225 = vcvt.f32.s32 %v1222
    %v1226 = vcvt.f32.s32 %v1224
    %v1227 = vshll.u32 %v1226, 16
    %v1228 = vadd.s32 %v1227, %v1225
    %v1229 = vadd.s32 %v1158, %v1159
    %v1230 = vand.u32 %v1229, 65535
    %v1231 = vshrl.u32 %v1229, 16
    %v1232 = vcvt.s32.f32 %v1230
    %v1233 = vcvt.s32.f32 %v1231
    %1234 = vadd.xlane.f32.xlu0 %v1232
    %v1235 = vpop.xlane.xlu0 %1234
    %1236 = vadd.xlane.f32.xlu0 %v1233
    %v1237 = vpop.xlane.xlu0 %1236
    %v1238 = vcvt.f32.s32 %v1235
    %v1239 = vcvt.f32.s32 %v1237
    %v1240 = vshll.u32 %v1239, 16
    %v1241 = vadd.s32 %v1240, %v1238
    %v1242 = vadd.s32 %v1160, %v1161
    %v1243 = vand.u32 %v1242, 65535
    %v1244 = vshrl.u32 %v1242, 16
    %v1245 = vcvt.s32.f32 %v1243
    %v1246 = vcvt.s32.f32 %v1244
    %1247 = vadd.xlane.f32.xlu0 %v1245
    %v1248 = vpop.xlane.xlu0 %1247
    %1249 = vadd.xlane.f32.xlu0 %v1246
    %v1250 = vpop.xlane.xlu0 %1249
    %v1251 = vcvt.f32.s32 %v1248
    %v1252 = vcvt.f32.s32 %v1250
    %v1253 = vshll.u32 %v1252, 16
    %v1254 = vadd.s32 %v1253, %v1251
    %v1255 = vadd.s32 %v1162, %v1163
    %v1256 = vand.u32 %v1255, 65535
    %v1257 = vshrl.u32 %v1255, 16
    %v1258 = vcvt.s32.f32 %v1256
    %v1259 = vcvt.s32.f32 %v1257
    %1260 = vadd.xlane.f32.xlu0 %v1258
    %v1261 = vpop.xlane.xlu0 %1260
    %1262 = vadd.xlane.f32.xlu0 %v1259
    %v1263 = vpop.xlane.xlu0 %1262
    %v1264 = vcvt.f32.s32 %v1261
    %v1265 = vcvt.f32.s32 %v1263
    %v1266 = vshll.u32 %v1265, 16
    %v1267 = vadd.s32 %v1266, %v1264
    %vm1268 = vcmp.le.s32.totalorder %v1176, 127
    %vm1269 = vcmp.le.s32.totalorder %v1189, 127
    %vm1270 = vcmp.le.s32.totalorder %v1202, 127
    %vm1271 = vcmp.le.s32.totalorder %v1215, 127
    %vm1272 = vcmp.le.s32.totalorder %v1228, 127
    %vm1273 = vcmp.le.s32.totalorder %v1241, 127
    %vm1274 = vcmp.le.s32.totalorder %v1254, 127
    %vm1275 = vcmp.le.s32.totalorder %v1267, 127
    %v1276 = vsel %vm1268, %v1124, %v1116
    %v1277 = vsel %vm1269, %v1125, %v1117
    %v1278 = vsel %vm1270, %v1126, %v1118
    %v1279 = vsel %vm1271, %v1127, %v1119
    %v1280 = vsel %vm1272, %v1128, %v1120
    %v1281 = vsel %vm1273, %v1129, %v1121
    %v1282 = vsel %vm1274, %v1130, %v1122
    %v1283 = vsel %vm1275, %v1131, %v1123
    %v1284 = vor.u32 %v1276, 16777216
    %v1285 = vor.u32 %v1277, 16777216
    %v1286 = vor.u32 %v1278, 16777216
    %v1287 = vor.u32 %v1279, 16777216
    %v1288 = vor.u32 %v1280, 16777216
    %v1289 = vor.u32 %v1281, 16777216
    %v1290 = vor.u32 %v1282, 16777216
    %v1291 = vor.u32 %v1283, 16777216
    %vm1292 = vcmp.lt.s32.totalorder %v156, %v1284
    %vm1293 = vcmp.lt.s32.totalorder %v157, %v1284
    %vm1294 = vcmp.lt.s32.totalorder %v158, %v1285
    %vm1295 = vcmp.lt.s32.totalorder %v159, %v1285
    %vm1296 = vcmp.lt.s32.totalorder %v160, %v1286
    %vm1297 = vcmp.lt.s32.totalorder %v161, %v1286
    %vm1298 = vcmp.lt.s32.totalorder %v162, %v1287
    %vm1299 = vcmp.lt.s32.totalorder %v163, %v1287
    %vm1300 = vcmp.lt.s32.totalorder %v164, %v1288
    %vm1301 = vcmp.lt.s32.totalorder %v165, %v1288
    %vm1302 = vcmp.lt.s32.totalorder %v166, %v1289
    %vm1303 = vcmp.lt.s32.totalorder %v167, %v1289
    %vm1304 = vcmp.lt.s32.totalorder %v168, %v1290
    %vm1305 = vcmp.lt.s32.totalorder %v169, %v1290
    %vm1306 = vcmp.lt.s32.totalorder %v170, %v1291
    %vm1307 = vcmp.lt.s32.totalorder %v171, %v1291
    %v1308 = vsel %vm1292, 1, 0
    %v1309 = vsel %vm1293, 1, 0
    %v1310 = vsel %vm1294, 1, 0
    %v1311 = vsel %vm1295, 1, 0
    %v1312 = vsel %vm1296, 1, 0
    %v1313 = vsel %vm1297, 1, 0
    %v1314 = vsel %vm1298, 1, 0
    %v1315 = vsel %vm1299, 1, 0
    %v1316 = vsel %vm1300, 1, 0
    %v1317 = vsel %vm1301, 1, 0
    %v1318 = vsel %vm1302, 1, 0
    %v1319 = vsel %vm1303, 1, 0
    %v1320 = vsel %vm1304, 1, 0
    %v1321 = vsel %vm1305, 1, 0
    %v1322 = vsel %vm1306, 1, 0
    %v1323 = vsel %vm1307, 1, 0
    %v1324 = vadd.s32 %v1308, %v1309
    %v1325 = vand.u32 %v1324, 65535
    %v1326 = vshrl.u32 %v1324, 16
    %v1327 = vcvt.s32.f32 %v1325
    %v1328 = vcvt.s32.f32 %v1326
    %1329 = vadd.xlane.f32.xlu0 %v1327
    %v1330 = vpop.xlane.xlu0 %1329
    %1331 = vadd.xlane.f32.xlu0 %v1328
    %v1332 = vpop.xlane.xlu0 %1331
    %v1333 = vcvt.f32.s32 %v1330
    %v1334 = vcvt.f32.s32 %v1332
    %v1335 = vshll.u32 %v1334, 16
    %v1336 = vadd.s32 %v1335, %v1333
    %v1337 = vadd.s32 %v1310, %v1311
    %v1338 = vand.u32 %v1337, 65535
    %v1339 = vshrl.u32 %v1337, 16
    %v1340 = vcvt.s32.f32 %v1338
    %v1341 = vcvt.s32.f32 %v1339
    %1342 = vadd.xlane.f32.xlu0 %v1340
    %v1343 = vpop.xlane.xlu0 %1342
    %1344 = vadd.xlane.f32.xlu0 %v1341
    %v1345 = vpop.xlane.xlu0 %1344
    %v1346 = vcvt.f32.s32 %v1343
    %v1347 = vcvt.f32.s32 %v1345
    %v1348 = vshll.u32 %v1347, 16
    %v1349 = vadd.s32 %v1348, %v1346
    %v1350 = vadd.s32 %v1312, %v1313
    %v1351 = vand.u32 %v1350, 65535
    %v1352 = vshrl.u32 %v1350, 16
    %v1353 = vcvt.s32.f32 %v1351
    %v1354 = vcvt.s32.f32 %v1352
    %1355 = vadd.xlane.f32.xlu0 %v1353
    %v1356 = vpop.xlane.xlu0 %1355
    %1357 = vadd.xlane.f32.xlu0 %v1354
    %v1358 = vpop.xlane.xlu0 %1357
    %v1359 = vcvt.f32.s32 %v1356
    %v1360 = vcvt.f32.s32 %v1358
    %v1361 = vshll.u32 %v1360, 16
    %v1362 = vadd.s32 %v1361, %v1359
    %v1363 = vadd.s32 %v1314, %v1315
    %v1364 = vand.u32 %v1363, 65535
    %v1365 = vshrl.u32 %v1363, 16
    %v1366 = vcvt.s32.f32 %v1364
    %v1367 = vcvt.s32.f32 %v1365
    %1368 = vadd.xlane.f32.xlu0 %v1366
    %v1369 = vpop.xlane.xlu0 %1368
    %1370 = vadd.xlane.f32.xlu0 %v1367
    %v1371 = vpop.xlane.xlu0 %1370
    %v1372 = vcvt.f32.s32 %v1369
    %v1373 = vcvt.f32.s32 %v1371
    %v1374 = vshll.u32 %v1373, 16
    %v1375 = vadd.s32 %v1374, %v1372
    %v1376 = vadd.s32 %v1316, %v1317
    %v1377 = vand.u32 %v1376, 65535
    %v1378 = vshrl.u32 %v1376, 16
    %v1379 = vcvt.s32.f32 %v1377
    %v1380 = vcvt.s32.f32 %v1378
    %1381 = vadd.xlane.f32.xlu0 %v1379
    %v1382 = vpop.xlane.xlu0 %1381
    %1383 = vadd.xlane.f32.xlu0 %v1380
    %v1384 = vpop.xlane.xlu0 %1383
    %v1385 = vcvt.f32.s32 %v1382
    %v1386 = vcvt.f32.s32 %v1384
    %v1387 = vshll.u32 %v1386, 16
    %v1388 = vadd.s32 %v1387, %v1385
    %v1389 = vadd.s32 %v1318, %v1319
    %v1390 = vand.u32 %v1389, 65535
    %v1391 = vshrl.u32 %v1389, 16
    %v1392 = vcvt.s32.f32 %v1390
    %v1393 = vcvt.s32.f32 %v1391
    %1394 = vadd.xlane.f32.xlu0 %v1392
    %v1395 = vpop.xlane.xlu0 %1394
    %1396 = vadd.xlane.f32.xlu0 %v1393
    %v1397 = vpop.xlane.xlu0 %1396
    %v1398 = vcvt.f32.s32 %v1395
    %v1399 = vcvt.f32.s32 %v1397
    %v1400 = vshll.u32 %v1399, 16
    %v1401 = vadd.s32 %v1400, %v1398
    %v1402 = vadd.s32 %v1320, %v1321
    %v1403 = vand.u32 %v1402, 65535
    %v1404 = vshrl.u32 %v1402, 16
    %v1405 = vcvt.s32.f32 %v1403
    %v1406 = vcvt.s32.f32 %v1404
    %1407 = vadd.xlane.f32.xlu0 %v1405
    %v1408 = vpop.xlane.xlu0 %1407
    %1409 = vadd.xlane.f32.xlu0 %v1406
    %v1410 = vpop.xlane.xlu0 %1409
    %v1411 = vcvt.f32.s32 %v1408
    %v1412 = vcvt.f32.s32 %v1410
    %v1413 = vshll.u32 %v1412, 16
    %v1414 = vadd.s32 %v1413, %v1411
    %v1415 = vadd.s32 %v1322, %v1323
    %v1416 = vand.u32 %v1415, 65535
    %v1417 = vshrl.u32 %v1415, 16
    %v1418 = vcvt.s32.f32 %v1416
    %v1419 = vcvt.s32.f32 %v1417
    %1420 = vadd.xlane.f32.xlu0 %v1418
    %v1421 = vpop.xlane.xlu0 %1420
    %1422 = vadd.xlane.f32.xlu0 %v1419
    %v1423 = vpop.xlane.xlu0 %1422
    %v1424 = vcvt.f32.s32 %v1421
    %v1425 = vcvt.f32.s32 %v1423
    %v1426 = vshll.u32 %v1425, 16
    %v1427 = vadd.s32 %v1426, %v1424
    %vm1428 = vcmp.le.s32.totalorder %v1336, 127
    %vm1429 = vcmp.le.s32.totalorder %v1349, 127
    %vm1430 = vcmp.le.s32.totalorder %v1362, 127
    %vm1431 = vcmp.le.s32.totalorder %v1375, 127
    %vm1432 = vcmp.le.s32.totalorder %v1388, 127
    %vm1433 = vcmp.le.s32.totalorder %v1401, 127
    %vm1434 = vcmp.le.s32.totalorder %v1414, 127
    %vm1435 = vcmp.le.s32.totalorder %v1427, 127
    %v1436 = vsel %vm1428, %v1284, %v1276
    %v1437 = vsel %vm1429, %v1285, %v1277
    %v1438 = vsel %vm1430, %v1286, %v1278
    %v1439 = vsel %vm1431, %v1287, %v1279
    %v1440 = vsel %vm1432, %v1288, %v1280
    %v1441 = vsel %vm1433, %v1289, %v1281
    %v1442 = vsel %vm1434, %v1290, %v1282
    %v1443 = vsel %vm1435, %v1291, %v1283
    %v1444 = vor.u32 %v1436, 8388608
    %v1445 = vor.u32 %v1437, 8388608
    %v1446 = vor.u32 %v1438, 8388608
    %v1447 = vor.u32 %v1439, 8388608
    %v1448 = vor.u32 %v1440, 8388608
    %v1449 = vor.u32 %v1441, 8388608
    %v1450 = vor.u32 %v1442, 8388608
    %v1451 = vor.u32 %v1443, 8388608
    %vm1452 = vcmp.lt.s32.totalorder %v156, %v1444
    %vm1453 = vcmp.lt.s32.totalorder %v157, %v1444
    %vm1454 = vcmp.lt.s32.totalorder %v158, %v1445
    %vm1455 = vcmp.lt.s32.totalorder %v159, %v1445
    %vm1456 = vcmp.lt.s32.totalorder %v160, %v1446
    %vm1457 = vcmp.lt.s32.totalorder %v161, %v1446
    %vm1458 = vcmp.lt.s32.totalorder %v162, %v1447
    %vm1459 = vcmp.lt.s32.totalorder %v163, %v1447
    %vm1460 = vcmp.lt.s32.totalorder %v164, %v1448
    %vm1461 = vcmp.lt.s32.totalorder %v165, %v1448
    %vm1462 = vcmp.lt.s32.totalorder %v166, %v1449
    %vm1463 = vcmp.lt.s32.totalorder %v167, %v1449
    %vm1464 = vcmp.lt.s32.totalorder %v168, %v1450
    %vm1465 = vcmp.lt.s32.totalorder %v169, %v1450
    %vm1466 = vcmp.lt.s32.totalorder %v170, %v1451
    %vm1467 = vcmp.lt.s32.totalorder %v171, %v1451
    %v1468 = vsel %vm1452, 1, 0
    %v1469 = vsel %vm1453, 1, 0
    %v1470 = vsel %vm1454, 1, 0
    %v1471 = vsel %vm1455, 1, 0
    %v1472 = vsel %vm1456, 1, 0
    %v1473 = vsel %vm1457, 1, 0
    %v1474 = vsel %vm1458, 1, 0
    %v1475 = vsel %vm1459, 1, 0
    %v1476 = vsel %vm1460, 1, 0
    %v1477 = vsel %vm1461, 1, 0
    %v1478 = vsel %vm1462, 1, 0
    %v1479 = vsel %vm1463, 1, 0
    %v1480 = vsel %vm1464, 1, 0
    %v1481 = vsel %vm1465, 1, 0
    %v1482 = vsel %vm1466, 1, 0
    %v1483 = vsel %vm1467, 1, 0
    %v1484 = vadd.s32 %v1468, %v1469
    %v1485 = vand.u32 %v1484, 65535
    %v1486 = vshrl.u32 %v1484, 16
    %v1487 = vcvt.s32.f32 %v1485
    %v1488 = vcvt.s32.f32 %v1486
    %1489 = vadd.xlane.f32.xlu0 %v1487
    %v1490 = vpop.xlane.xlu0 %1489
    %1491 = vadd.xlane.f32.xlu0 %v1488
    %v1492 = vpop.xlane.xlu0 %1491
    %v1493 = vcvt.f32.s32 %v1490
    %v1494 = vcvt.f32.s32 %v1492
    %v1495 = vshll.u32 %v1494, 16
    %v1496 = vadd.s32 %v1495, %v1493
    %v1497 = vadd.s32 %v1470, %v1471
    %v1498 = vand.u32 %v1497, 65535
    %v1499 = vshrl.u32 %v1497, 16
    %v1500 = vcvt.s32.f32 %v1498
    %v1501 = vcvt.s32.f32 %v1499
    %1502 = vadd.xlane.f32.xlu0 %v1500
    %v1503 = vpop.xlane.xlu0 %1502
    %1504 = vadd.xlane.f32.xlu0 %v1501
    %v1505 = vpop.xlane.xlu0 %1504
    %v1506 = vcvt.f32.s32 %v1503
    %v1507 = vcvt.f32.s32 %v1505
    %v1508 = vshll.u32 %v1507, 16
    %v1509 = vadd.s32 %v1508, %v1506
    %v1510 = vadd.s32 %v1472, %v1473
    %v1511 = vand.u32 %v1510, 65535
    %v1512 = vshrl.u32 %v1510, 16
    %v1513 = vcvt.s32.f32 %v1511
    %v1514 = vcvt.s32.f32 %v1512
    %1515 = vadd.xlane.f32.xlu0 %v1513
    %v1516 = vpop.xlane.xlu0 %1515
    %1517 = vadd.xlane.f32.xlu0 %v1514
    %v1518 = vpop.xlane.xlu0 %1517
    %v1519 = vcvt.f32.s32 %v1516
    %v1520 = vcvt.f32.s32 %v1518
    %v1521 = vshll.u32 %v1520, 16
    %v1522 = vadd.s32 %v1521, %v1519
    %v1523 = vadd.s32 %v1474, %v1475
    %v1524 = vand.u32 %v1523, 65535
    %v1525 = vshrl.u32 %v1523, 16
    %v1526 = vcvt.s32.f32 %v1524
    %v1527 = vcvt.s32.f32 %v1525
    %1528 = vadd.xlane.f32.xlu0 %v1526
    %v1529 = vpop.xlane.xlu0 %1528
    %1530 = vadd.xlane.f32.xlu0 %v1527
    %v1531 = vpop.xlane.xlu0 %1530
    %v1532 = vcvt.f32.s32 %v1529
    %v1533 = vcvt.f32.s32 %v1531
    %v1534 = vshll.u32 %v1533, 16
    %v1535 = vadd.s32 %v1534, %v1532
    %v1536 = vadd.s32 %v1476, %v1477
    %v1537 = vand.u32 %v1536, 65535
    %v1538 = vshrl.u32 %v1536, 16
    %v1539 = vcvt.s32.f32 %v1537
    %v1540 = vcvt.s32.f32 %v1538
    %1541 = vadd.xlane.f32.xlu0 %v1539
    %v1542 = vpop.xlane.xlu0 %1541
    %1543 = vadd.xlane.f32.xlu0 %v1540
    %v1544 = vpop.xlane.xlu0 %1543
    %v1545 = vcvt.f32.s32 %v1542
    %v1546 = vcvt.f32.s32 %v1544
    %v1547 = vshll.u32 %v1546, 16
    %v1548 = vadd.s32 %v1547, %v1545
    %v1549 = vadd.s32 %v1478, %v1479
    %v1550 = vand.u32 %v1549, 65535
    %v1551 = vshrl.u32 %v1549, 16
    %v1552 = vcvt.s32.f32 %v1550
    %v1553 = vcvt.s32.f32 %v1551
    %1554 = vadd.xlane.f32.xlu0 %v1552
    %v1555 = vpop.xlane.xlu0 %1554
    %1556 = vadd.xlane.f32.xlu0 %v1553
    %v1557 = vpop.xlane.xlu0 %1556
    %v1558 = vcvt.f32.s32 %v1555
    %v1559 = vcvt.f32.s32 %v1557
    %v1560 = vshll.u32 %v1559, 16
    %v1561 = vadd.s32 %v1560, %v1558
    %v1562 = vadd.s32 %v1480, %v1481
    %v1563 = vand.u32 %v1562, 65535
    %v1564 = vshrl.u32 %v1562, 16
    %v1565 = vcvt.s32.f32 %v1563
    %v1566 = vcvt.s32.f32 %v1564
    %1567 = vadd.xlane.f32.xlu0 %v1565
    %v1568 = vpop.xlane.xlu0 %1567
    %1569 = vadd.xlane.f32.xlu0 %v1566
    %v1570 = vpop.xlane.xlu0 %1569
    %v1571 = vcvt.f32.s32 %v1568
    %v1572 = vcvt.f32.s32 %v1570
    %v1573 = vshll.u32 %v1572, 16
    %v1574 = vadd.s32 %v1573, %v1571
    %v1575 = vadd.s32 %v1482, %v1483
    %v1576 = vand.u32 %v1575, 65535
    %v1577 = vshrl.u32 %v1575, 16
    %v1578 = vcvt.s32.f32 %v1576
    %v1579 = vcvt.s32.f32 %v1577
    %1580 = vadd.xlane.f32.xlu0 %v1578
    %v1581 = vpop.xlane.xlu0 %1580
    %1582 = vadd.xlane.f32.xlu0 %v1579
    %v1583 = vpop.xlane.xlu0 %1582
    %v1584 = vcvt.f32.s32 %v1581
    %v1585 = vcvt.f32.s32 %v1583
    %v1586 = vshll.u32 %v1585, 16
    %v1587 = vadd.s32 %v1586, %v1584
    %vm1588 = vcmp.le.s32.totalorder %v1496, 127
    %vm1589 = vcmp.le.s32.totalorder %v1509, 127
    %vm1590 = vcmp.le.s32.totalorder %v1522, 127
    %vm1591 = vcmp.le.s32.totalorder %v1535, 127
    %vm1592 = vcmp.le.s32.totalorder %v1548, 127
    %vm1593 = vcmp.le.s32.totalorder %v1561, 127
    %vm1594 = vcmp.le.s32.totalorder %v1574, 127
    %vm1595 = vcmp.le.s32.totalorder %v1587, 127
    %v1596 = vsel %vm1588, %v1444, %v1436
    %v1597 = vsel %vm1589, %v1445, %v1437
    %v1598 = vsel %vm1590, %v1446, %v1438
    %v1599 = vsel %vm1591, %v1447, %v1439
    %v1600 = vsel %vm1592, %v1448, %v1440
    %v1601 = vsel %vm1593, %v1449, %v1441
    %v1602 = vsel %vm1594, %v1450, %v1442
    %v1603 = vsel %vm1595, %v1451, %v1443
    %v1604 = vor.u32 %v1596, 4194304
    %v1605 = vor.u32 %v1597, 4194304
    %v1606 = vor.u32 %v1598, 4194304
    %v1607 = vor.u32 %v1599, 4194304
    %v1608 = vor.u32 %v1600, 4194304
    %v1609 = vor.u32 %v1601, 4194304
    %v1610 = vor.u32 %v1602, 4194304
    %v1611 = vor.u32 %v1603, 4194304
    %vm1612 = vcmp.lt.s32.totalorder %v156, %v1604
    %vm1613 = vcmp.lt.s32.totalorder %v157, %v1604
    %vm1614 = vcmp.lt.s32.totalorder %v158, %v1605
    %vm1615 = vcmp.lt.s32.totalorder %v159, %v1605
    %vm1616 = vcmp.lt.s32.totalorder %v160, %v1606
    %vm1617 = vcmp.lt.s32.totalorder %v161, %v1606
    %vm1618 = vcmp.lt.s32.totalorder %v162, %v1607
    %vm1619 = vcmp.lt.s32.totalorder %v163, %v1607
    %vm1620 = vcmp.lt.s32.totalorder %v164, %v1608
    %vm1621 = vcmp.lt.s32.totalorder %v165, %v1608
    %vm1622 = vcmp.lt.s32.totalorder %v166, %v1609
    %vm1623 = vcmp.lt.s32.totalorder %v167, %v1609
    %vm1624 = vcmp.lt.s32.totalorder %v168, %v1610
    %vm1625 = vcmp.lt.s32.totalorder %v169, %v1610
    %vm1626 = vcmp.lt.s32.totalorder %v170, %v1611
    %vm1627 = vcmp.lt.s32.totalorder %v171, %v1611
    %v1628 = vsel %vm1612, 1, 0
    %v1629 = vsel %vm1613, 1, 0
    %v1630 = vsel %vm1614, 1, 0
    %v1631 = vsel %vm1615, 1, 0
    %v1632 = vsel %vm1616, 1, 0
    %v1633 = vsel %vm1617, 1, 0
    %v1634 = vsel %vm1618, 1, 0
    %v1635 = vsel %vm1619, 1, 0
    %v1636 = vsel %vm1620, 1, 0
    %v1637 = vsel %vm1621, 1, 0
    %v1638 = vsel %vm1622, 1, 0
    %v1639 = vsel %vm1623, 1, 0
    %v1640 = vsel %vm1624, 1, 0
    %v1641 = vsel %vm1625, 1, 0
    %v1642 = vsel %vm1626, 1, 0
    %v1643 = vsel %vm1627, 1, 0
    %v1644 = vadd.s32 %v1628, %v1629
    %v1645 = vand.u32 %v1644, 65535
    %v1646 = vshrl.u32 %v1644, 16
    %v1647 = vcvt.s32.f32 %v1645
    %v1648 = vcvt.s32.f32 %v1646
    %1649 = vadd.xlane.f32.xlu0 %v1647
    %v1650 = vpop.xlane.xlu0 %1649
    %1651 = vadd.xlane.f32.xlu0 %v1648
    %v1652 = vpop.xlane.xlu0 %1651
    %v1653 = vcvt.f32.s32 %v1650
    %v1654 = vcvt.f32.s32 %v1652
    %v1655 = vshll.u32 %v1654, 16
    %v1656 = vadd.s32 %v1655, %v1653
    %v1657 = vadd.s32 %v1630, %v1631
    %v1658 = vand.u32 %v1657, 65535
    %v1659 = vshrl.u32 %v1657, 16
    %v1660 = vcvt.s32.f32 %v1658
    %v1661 = vcvt.s32.f32 %v1659
    %1662 = vadd.xlane.f32.xlu0 %v1660
    %v1663 = vpop.xlane.xlu0 %1662
    %1664 = vadd.xlane.f32.xlu0 %v1661
    %v1665 = vpop.xlane.xlu0 %1664
    %v1666 = vcvt.f32.s32 %v1663
    %v1667 = vcvt.f32.s32 %v1665
    %v1668 = vshll.u32 %v1667, 16
    %v1669 = vadd.s32 %v1668, %v1666
    %v1670 = vadd.s32 %v1632, %v1633
    %v1671 = vand.u32 %v1670, 65535
    %v1672 = vshrl.u32 %v1670, 16
    %v1673 = vcvt.s32.f32 %v1671
    %v1674 = vcvt.s32.f32 %v1672
    %1675 = vadd.xlane.f32.xlu0 %v1673
    %v1676 = vpop.xlane.xlu0 %1675
    %1677 = vadd.xlane.f32.xlu0 %v1674
    %v1678 = vpop.xlane.xlu0 %1677
    %v1679 = vcvt.f32.s32 %v1676
    %v1680 = vcvt.f32.s32 %v1678
    %v1681 = vshll.u32 %v1680, 16
    %v1682 = vadd.s32 %v1681, %v1679
    %v1683 = vadd.s32 %v1634, %v1635
    %v1684 = vand.u32 %v1683, 65535
    %v1685 = vshrl.u32 %v1683, 16
    %v1686 = vcvt.s32.f32 %v1684
    %v1687 = vcvt.s32.f32 %v1685
    %1688 = vadd.xlane.f32.xlu0 %v1686
    %v1689 = vpop.xlane.xlu0 %1688
    %1690 = vadd.xlane.f32.xlu0 %v1687
    %v1691 = vpop.xlane.xlu0 %1690
    %v1692 = vcvt.f32.s32 %v1689
    %v1693 = vcvt.f32.s32 %v1691
    %v1694 = vshll.u32 %v1693, 16
    %v1695 = vadd.s32 %v1694, %v1692
    %v1696 = vadd.s32 %v1636, %v1637
    %v1697 = vand.u32 %v1696, 65535
    %v1698 = vshrl.u32 %v1696, 16
    %v1699 = vcvt.s32.f32 %v1697
    %v1700 = vcvt.s32.f32 %v1698
    %1701 = vadd.xlane.f32.xlu0 %v1699
    %v1702 = vpop.xlane.xlu0 %1701
    %1703 = vadd.xlane.f32.xlu0 %v1700
    %v1704 = vpop.xlane.xlu0 %1703
    %v1705 = vcvt.f32.s32 %v1702
    %v1706 = vcvt.f32.s32 %v1704
    %v1707 = vshll.u32 %v1706, 16
    %v1708 = vadd.s32 %v1707, %v1705
    %v1709 = vadd.s32 %v1638, %v1639
    %v1710 = vand.u32 %v1709, 65535
    %v1711 = vshrl.u32 %v1709, 16
    %v1712 = vcvt.s32.f32 %v1710
    %v1713 = vcvt.s32.f32 %v1711
    %1714 = vadd.xlane.f32.xlu0 %v1712
    %v1715 = vpop.xlane.xlu0 %1714
    %1716 = vadd.xlane.f32.xlu0 %v1713
    %v1717 = vpop.xlane.xlu0 %1716
    %v1718 = vcvt.f32.s32 %v1715
    %v1719 = vcvt.f32.s32 %v1717
    %v1720 = vshll.u32 %v1719, 16
    %v1721 = vadd.s32 %v1720, %v1718
    %v1722 = vadd.s32 %v1640, %v1641
    %v1723 = vand.u32 %v1722, 65535
    %v1724 = vshrl.u32 %v1722, 16
    %v1725 = vcvt.s32.f32 %v1723
    %v1726 = vcvt.s32.f32 %v1724
    %1727 = vadd.xlane.f32.xlu0 %v1725
    %v1728 = vpop.xlane.xlu0 %1727
    %1729 = vadd.xlane.f32.xlu0 %v1726
    %v1730 = vpop.xlane.xlu0 %1729
    %v1731 = vcvt.f32.s32 %v1728
    %v1732 = vcvt.f32.s32 %v1730
    %v1733 = vshll.u32 %v1732, 16
    %v1734 = vadd.s32 %v1733, %v1731
    %v1735 = vadd.s32 %v1642, %v1643
    %v1736 = vand.u32 %v1735, 65535
    %v1737 = vshrl.u32 %v1735, 16
    %v1738 = vcvt.s32.f32 %v1736
    %v1739 = vcvt.s32.f32 %v1737
    %1740 = vadd.xlane.f32.xlu0 %v1738
    %v1741 = vpop.xlane.xlu0 %1740
    %1742 = vadd.xlane.f32.xlu0 %v1739
    %v1743 = vpop.xlane.xlu0 %1742
    %v1744 = vcvt.f32.s32 %v1741
    %v1745 = vcvt.f32.s32 %v1743
    %v1746 = vshll.u32 %v1745, 16
    %v1747 = vadd.s32 %v1746, %v1744
    %vm1748 = vcmp.le.s32.totalorder %v1656, 127
    %vm1749 = vcmp.le.s32.totalorder %v1669, 127
    %vm1750 = vcmp.le.s32.totalorder %v1682, 127
    %vm1751 = vcmp.le.s32.totalorder %v1695, 127
    %vm1752 = vcmp.le.s32.totalorder %v1708, 127
    %vm1753 = vcmp.le.s32.totalorder %v1721, 127
    %vm1754 = vcmp.le.s32.totalorder %v1734, 127
    %vm1755 = vcmp.le.s32.totalorder %v1747, 127
    %v1756 = vsel %vm1748, %v1604, %v1596
    %v1757 = vsel %vm1749, %v1605, %v1597
    %v1758 = vsel %vm1750, %v1606, %v1598
    %v1759 = vsel %vm1751, %v1607, %v1599
    %v1760 = vsel %vm1752, %v1608, %v1600
    %v1761 = vsel %vm1753, %v1609, %v1601
    %v1762 = vsel %vm1754, %v1610, %v1602
    %v1763 = vsel %vm1755, %v1611, %v1603
    %v1764 = vor.u32 %v1756, 2097152
    %v1765 = vor.u32 %v1757, 2097152
    %v1766 = vor.u32 %v1758, 2097152
    %v1767 = vor.u32 %v1759, 2097152
    %v1768 = vor.u32 %v1760, 2097152
    %v1769 = vor.u32 %v1761, 2097152
    %v1770 = vor.u32 %v1762, 2097152
    %v1771 = vor.u32 %v1763, 2097152
    %vm1772 = vcmp.lt.s32.totalorder %v156, %v1764
    %vm1773 = vcmp.lt.s32.totalorder %v157, %v1764
    %vm1774 = vcmp.lt.s32.totalorder %v158, %v1765
    %vm1775 = vcmp.lt.s32.totalorder %v159, %v1765
    %vm1776 = vcmp.lt.s32.totalorder %v160, %v1766
    %vm1777 = vcmp.lt.s32.totalorder %v161, %v1766
    %vm1778 = vcmp.lt.s32.totalorder %v162, %v1767
    %vm1779 = vcmp.lt.s32.totalorder %v163, %v1767
    %vm1780 = vcmp.lt.s32.totalorder %v164, %v1768
    %vm1781 = vcmp.lt.s32.totalorder %v165, %v1768
    %vm1782 = vcmp.lt.s32.totalorder %v166, %v1769
    %vm1783 = vcmp.lt.s32.totalorder %v167, %v1769
    %vm1784 = vcmp.lt.s32.totalorder %v168, %v1770
    %vm1785 = vcmp.lt.s32.totalorder %v169, %v1770
    %vm1786 = vcmp.lt.s32.totalorder %v170, %v1771
    %vm1787 = vcmp.lt.s32.totalorder %v171, %v1771
    %v1788 = vsel %vm1772, 1, 0
    %v1789 = vsel %vm1773, 1, 0
    %v1790 = vsel %vm1774, 1, 0
    %v1791 = vsel %vm1775, 1, 0
    %v1792 = vsel %vm1776, 1, 0
    %v1793 = vsel %vm1777, 1, 0
    %v1794 = vsel %vm1778, 1, 0
    %v1795 = vsel %vm1779, 1, 0
    %v1796 = vsel %vm1780, 1, 0
    %v1797 = vsel %vm1781, 1, 0
    %v1798 = vsel %vm1782, 1, 0
    %v1799 = vsel %vm1783, 1, 0
    %v1800 = vsel %vm1784, 1, 0
    %v1801 = vsel %vm1785, 1, 0
    %v1802 = vsel %vm1786, 1, 0
    %v1803 = vsel %vm1787, 1, 0
    %v1804 = vadd.s32 %v1788, %v1789
    %v1805 = vand.u32 %v1804, 65535
    %v1806 = vshrl.u32 %v1804, 16
    %v1807 = vcvt.s32.f32 %v1805
    %v1808 = vcvt.s32.f32 %v1806
    %1809 = vadd.xlane.f32.xlu0 %v1807
    %v1810 = vpop.xlane.xlu0 %1809
    %1811 = vadd.xlane.f32.xlu0 %v1808
    %v1812 = vpop.xlane.xlu0 %1811
    %v1813 = vcvt.f32.s32 %v1810
    %v1814 = vcvt.f32.s32 %v1812
    %v1815 = vshll.u32 %v1814, 16
    %v1816 = vadd.s32 %v1815, %v1813
    %v1817 = vadd.s32 %v1790, %v1791
    %v1818 = vand.u32 %v1817, 65535
    %v1819 = vshrl.u32 %v1817, 16
    %v1820 = vcvt.s32.f32 %v1818
    %v1821 = vcvt.s32.f32 %v1819
    %1822 = vadd.xlane.f32.xlu0 %v1820
    %v1823 = vpop.xlane.xlu0 %1822
    %1824 = vadd.xlane.f32.xlu0 %v1821
    %v1825 = vpop.xlane.xlu0 %1824
    %v1826 = vcvt.f32.s32 %v1823
    %v1827 = vcvt.f32.s32 %v1825
    %v1828 = vshll.u32 %v1827, 16
    %v1829 = vadd.s32 %v1828, %v1826
    %v1830 = vadd.s32 %v1792, %v1793
    %v1831 = vand.u32 %v1830, 65535
    %v1832 = vshrl.u32 %v1830, 16
    %v1833 = vcvt.s32.f32 %v1831
    %v1834 = vcvt.s32.f32 %v1832
    %1835 = vadd.xlane.f32.xlu0 %v1833
    %v1836 = vpop.xlane.xlu0 %1835
    %1837 = vadd.xlane.f32.xlu0 %v1834
    %v1838 = vpop.xlane.xlu0 %1837
    %v1839 = vcvt.f32.s32 %v1836
    %v1840 = vcvt.f32.s32 %v1838
    %v1841 = vshll.u32 %v1840, 16
    %v1842 = vadd.s32 %v1841, %v1839
    %v1843 = vadd.s32 %v1794, %v1795
    %v1844 = vand.u32 %v1843, 65535
    %v1845 = vshrl.u32 %v1843, 16
    %v1846 = vcvt.s32.f32 %v1844
    %v1847 = vcvt.s32.f32 %v1845
    %1848 = vadd.xlane.f32.xlu0 %v1846
    %v1849 = vpop.xlane.xlu0 %1848
    %1850 = vadd.xlane.f32.xlu0 %v1847
    %v1851 = vpop.xlane.xlu0 %1850
    %v1852 = vcvt.f32.s32 %v1849
    %v1853 = vcvt.f32.s32 %v1851
    %v1854 = vshll.u32 %v1853, 16
    %v1855 = vadd.s32 %v1854, %v1852
    %v1856 = vadd.s32 %v1796, %v1797
    %v1857 = vand.u32 %v1856, 65535
    %v1858 = vshrl.u32 %v1856, 16
    %v1859 = vcvt.s32.f32 %v1857
    %v1860 = vcvt.s32.f32 %v1858
    %1861 = vadd.xlane.f32.xlu0 %v1859
    %v1862 = vpop.xlane.xlu0 %1861
    %1863 = vadd.xlane.f32.xlu0 %v1860
    %v1864 = vpop.xlane.xlu0 %1863
    %v1865 = vcvt.f32.s32 %v1862
    %v1866 = vcvt.f32.s32 %v1864
    %v1867 = vshll.u32 %v1866, 16
    %v1868 = vadd.s32 %v1867, %v1865
    %v1869 = vadd.s32 %v1798, %v1799
    %v1870 = vand.u32 %v1869, 65535
    %v1871 = vshrl.u32 %v1869, 16
    %v1872 = vcvt.s32.f32 %v1870
    %v1873 = vcvt.s32.f32 %v1871
    %1874 = vadd.xlane.f32.xlu0 %v1872
    %v1875 = vpop.xlane.xlu0 %1874
    %1876 = vadd.xlane.f32.xlu0 %v1873
    %v1877 = vpop.xlane.xlu0 %1876
    %v1878 = vcvt.f32.s32 %v1875
    %v1879 = vcvt.f32.s32 %v1877
    %v1880 = vshll.u32 %v1879, 16
    %v1881 = vadd.s32 %v1880, %v1878
    %v1882 = vadd.s32 %v1800, %v1801
    %v1883 = vand.u32 %v1882, 65535
    %v1884 = vshrl.u32 %v1882, 16
    %v1885 = vcvt.s32.f32 %v1883
    %v1886 = vcvt.s32.f32 %v1884
    %1887 = vadd.xlane.f32.xlu0 %v1885
    %v1888 = vpop.xlane.xlu0 %1887
    %1889 = vadd.xlane.f32.xlu0 %v1886
    %v1890 = vpop.xlane.xlu0 %1889
    %v1891 = vcvt.f32.s32 %v1888
    %v1892 = vcvt.f32.s32 %v1890
    %v1893 = vshll.u32 %v1892, 16
    %v1894 = vadd.s32 %v1893, %v1891
    %v1895 = vadd.s32 %v1802, %v1803
    %v1896 = vand.u32 %v1895, 65535
    %v1897 = vshrl.u32 %v1895, 16
    %v1898 = vcvt.s32.f32 %v1896
    %v1899 = vcvt.s32.f32 %v1897
    %1900 = vadd.xlane.f32.xlu0 %v1898
    %v1901 = vpop.xlane.xlu0 %1900
    %1902 = vadd.xlane.f32.xlu0 %v1899
    %v1903 = vpop.xlane.xlu0 %1902
    %v1904 = vcvt.f32.s32 %v1901
    %v1905 = vcvt.f32.s32 %v1903
    %v1906 = vshll.u32 %v1905, 16
    %v1907 = vadd.s32 %v1906, %v1904
    %vm1908 = vcmp.le.s32.totalorder %v1816, 127
    %vm1909 = vcmp.le.s32.totalorder %v1829, 127
    %vm1910 = vcmp.le.s32.totalorder %v1842, 127
    %vm1911 = vcmp.le.s32.totalorder %v1855, 127
    %vm1912 = vcmp.le.s32.totalorder %v1868, 127
    %vm1913 = vcmp.le.s32.totalorder %v1881, 127
    %vm1914 = vcmp.le.s32.totalorder %v1894, 127
    %vm1915 = vcmp.le.s32.totalorder %v1907, 127
    %v1916 = vsel %vm1908, %v1764, %v1756
    %v1917 = vsel %vm1909, %v1765, %v1757
    %v1918 = vsel %vm1910, %v1766, %v1758
    %v1919 = vsel %vm1911, %v1767, %v1759
    %v1920 = vsel %vm1912, %v1768, %v1760
    %v1921 = vsel %vm1913, %v1769, %v1761
    %v1922 = vsel %vm1914, %v1770, %v1762
    %v1923 = vsel %vm1915, %v1771, %v1763
    %v1924 = vor.u32 %v1916, 1048576
    %v1925 = vor.u32 %v1917, 1048576
    %v1926 = vor.u32 %v1918, 1048576
    %v1927 = vor.u32 %v1919, 1048576
    %v1928 = vor.u32 %v1920, 1048576
    %v1929 = vor.u32 %v1921, 1048576
    %v1930 = vor.u32 %v1922, 1048576
    %v1931 = vor.u32 %v1923, 1048576
    %vm1932 = vcmp.lt.s32.totalorder %v156, %v1924
    %vm1933 = vcmp.lt.s32.totalorder %v157, %v1924
    %vm1934 = vcmp.lt.s32.totalorder %v158, %v1925
    %vm1935 = vcmp.lt.s32.totalorder %v159, %v1925
    %vm1936 = vcmp.lt.s32.totalorder %v160, %v1926
    %vm1937 = vcmp.lt.s32.totalorder %v161, %v1926
    %vm1938 = vcmp.lt.s32.totalorder %v162, %v1927
    %vm1939 = vcmp.lt.s32.totalorder %v163, %v1927
    %vm1940 = vcmp.lt.s32.totalorder %v164, %v1928
    %vm1941 = vcmp.lt.s32.totalorder %v165, %v1928
    %vm1942 = vcmp.lt.s32.totalorder %v166, %v1929
    %vm1943 = vcmp.lt.s32.totalorder %v167, %v1929
    %vm1944 = vcmp.lt.s32.totalorder %v168, %v1930
    %vm1945 = vcmp.lt.s32.totalorder %v169, %v1930
    %vm1946 = vcmp.lt.s32.totalorder %v170, %v1931
    %vm1947 = vcmp.lt.s32.totalorder %v171, %v1931
    %v1948 = vsel %vm1932, 1, 0
    %v1949 = vsel %vm1933, 1, 0
    %v1950 = vsel %vm1934, 1, 0
    %v1951 = vsel %vm1935, 1, 0
    %v1952 = vsel %vm1936, 1, 0
    %v1953 = vsel %vm1937, 1, 0
    %v1954 = vsel %vm1938, 1, 0
    %v1955 = vsel %vm1939, 1, 0
    %v1956 = vsel %vm1940, 1, 0
    %v1957 = vsel %vm1941, 1, 0
    %v1958 = vsel %vm1942, 1, 0
    %v1959 = vsel %vm1943, 1, 0
    %v1960 = vsel %vm1944, 1, 0
    %v1961 = vsel %vm1945, 1, 0
    %v1962 = vsel %vm1946, 1, 0
    %v1963 = vsel %vm1947, 1, 0
    %v1964 = vadd.s32 %v1948, %v1949
    %v1965 = vand.u32 %v1964, 65535
    %v1966 = vshrl.u32 %v1964, 16
    %v1967 = vcvt.s32.f32 %v1965
    %v1968 = vcvt.s32.f32 %v1966
    %1969 = vadd.xlane.f32.xlu0 %v1967
    %v1970 = vpop.xlane.xlu0 %1969
    %1971 = vadd.xlane.f32.xlu0 %v1968
    %v1972 = vpop.xlane.xlu0 %1971
    %v1973 = vcvt.f32.s32 %v1970
    %v1974 = vcvt.f32.s32 %v1972
    %v1975 = vshll.u32 %v1974, 16
    %v1976 = vadd.s32 %v1975, %v1973
    %v1977 = vadd.s32 %v1950, %v1951
    %v1978 = vand.u32 %v1977, 65535
    %v1979 = vshrl.u32 %v1977, 16
    %v1980 = vcvt.s32.f32 %v1978
    %v1981 = vcvt.s32.f32 %v1979
    %1982 = vadd.xlane.f32.xlu0 %v1980
    %v1983 = vpop.xlane.xlu0 %1982
    %1984 = vadd.xlane.f32.xlu0 %v1981
    %v1985 = vpop.xlane.xlu0 %1984
    %v1986 = vcvt.f32.s32 %v1983
    %v1987 = vcvt.f32.s32 %v1985
    %v1988 = vshll.u32 %v1987, 16
    %v1989 = vadd.s32 %v1988, %v1986
    %v1990 = vadd.s32 %v1952, %v1953
    %v1991 = vand.u32 %v1990, 65535
    %v1992 = vshrl.u32 %v1990, 16
    %v1993 = vcvt.s32.f32 %v1991
    %v1994 = vcvt.s32.f32 %v1992
    %1995 = vadd.xlane.f32.xlu0 %v1993
    %v1996 = vpop.xlane.xlu0 %1995
    %1997 = vadd.xlane.f32.xlu0 %v1994
    %v1998 = vpop.xlane.xlu0 %1997
    %v1999 = vcvt.f32.s32 %v1996
    %v2000 = vcvt.f32.s32 %v1998
    %v2001 = vshll.u32 %v2000, 16
    %v2002 = vadd.s32 %v2001, %v1999
    %v2003 = vadd.s32 %v1954, %v1955
    %v2004 = vand.u32 %v2003, 65535
    %v2005 = vshrl.u32 %v2003, 16
    %v2006 = vcvt.s32.f32 %v2004
    %v2007 = vcvt.s32.f32 %v2005
    %2008 = vadd.xlane.f32.xlu0 %v2006
    %v2009 = vpop.xlane.xlu0 %2008
    %2010 = vadd.xlane.f32.xlu0 %v2007
    %v2011 = vpop.xlane.xlu0 %2010
    %v2012 = vcvt.f32.s32 %v2009
    %v2013 = vcvt.f32.s32 %v2011
    %v2014 = vshll.u32 %v2013, 16
    %v2015 = vadd.s32 %v2014, %v2012
    %v2016 = vadd.s32 %v1956, %v1957
    %v2017 = vand.u32 %v2016, 65535
    %v2018 = vshrl.u32 %v2016, 16
    %v2019 = vcvt.s32.f32 %v2017
    %v2020 = vcvt.s32.f32 %v2018
    %2021 = vadd.xlane.f32.xlu0 %v2019
    %v2022 = vpop.xlane.xlu0 %2021
    %2023 = vadd.xlane.f32.xlu0 %v2020
    %v2024 = vpop.xlane.xlu0 %2023
    %v2025 = vcvt.f32.s32 %v2022
    %v2026 = vcvt.f32.s32 %v2024
    %v2027 = vshll.u32 %v2026, 16
    %v2028 = vadd.s32 %v2027, %v2025
    %v2029 = vadd.s32 %v1958, %v1959
    %v2030 = vand.u32 %v2029, 65535
    %v2031 = vshrl.u32 %v2029, 16
    %v2032 = vcvt.s32.f32 %v2030
    %v2033 = vcvt.s32.f32 %v2031
    %2034 = vadd.xlane.f32.xlu0 %v2032
    %v2035 = vpop.xlane.xlu0 %2034
    %2036 = vadd.xlane.f32.xlu0 %v2033
    %v2037 = vpop.xlane.xlu0 %2036
    %v2038 = vcvt.f32.s32 %v2035
    %v2039 = vcvt.f32.s32 %v2037
    %v2040 = vshll.u32 %v2039, 16
    %v2041 = vadd.s32 %v2040, %v2038
    %v2042 = vadd.s32 %v1960, %v1961
    %v2043 = vand.u32 %v2042, 65535
    %v2044 = vshrl.u32 %v2042, 16
    %v2045 = vcvt.s32.f32 %v2043
    %v2046 = vcvt.s32.f32 %v2044
    %2047 = vadd.xlane.f32.xlu0 %v2045
    %v2048 = vpop.xlane.xlu0 %2047
    %2049 = vadd.xlane.f32.xlu0 %v2046
    %v2050 = vpop.xlane.xlu0 %2049
    %v2051 = vcvt.f32.s32 %v2048
    %v2052 = vcvt.f32.s32 %v2050
    %v2053 = vshll.u32 %v2052, 16
    %v2054 = vadd.s32 %v2053, %v2051
    %v2055 = vadd.s32 %v1962, %v1963
    %v2056 = vand.u32 %v2055, 65535
    %v2057 = vshrl.u32 %v2055, 16
    %v2058 = vcvt.s32.f32 %v2056
    %v2059 = vcvt.s32.f32 %v2057
    %2060 = vadd.xlane.f32.xlu0 %v2058
    %v2061 = vpop.xlane.xlu0 %2060
    %2062 = vadd.xlane.f32.xlu0 %v2059
    %v2063 = vpop.xlane.xlu0 %2062
    %v2064 = vcvt.f32.s32 %v2061
    %v2065 = vcvt.f32.s32 %v2063
    %v2066 = vshll.u32 %v2065, 16
    %v2067 = vadd.s32 %v2066, %v2064
    %vm2068 = vcmp.le.s32.totalorder %v1976, 127
    %vm2069 = vcmp.le.s32.totalorder %v1989, 127
    %vm2070 = vcmp.le.s32.totalorder %v2002, 127
    %vm2071 = vcmp.le.s32.totalorder %v2015, 127
    %vm2072 = vcmp.le.s32.totalorder %v2028, 127
    %vm2073 = vcmp.le.s32.totalorder %v2041, 127
    %vm2074 = vcmp.le.s32.totalorder %v2054, 127
    %vm2075 = vcmp.le.s32.totalorder %v2067, 127
    %v2076 = vsel %vm2068, %v1924, %v1916
    %v2077 = vsel %vm2069, %v1925, %v1917
    %v2078 = vsel %vm2070, %v1926, %v1918
    %v2079 = vsel %vm2071, %v1927, %v1919
    %v2080 = vsel %vm2072, %v1928, %v1920
    %v2081 = vsel %vm2073, %v1929, %v1921
    %v2082 = vsel %vm2074, %v1930, %v1922
    %v2083 = vsel %vm2075, %v1931, %v1923
    %v2084 = vor.u32 %v2076, 524288
    %v2085 = vor.u32 %v2077, 524288
    %v2086 = vor.u32 %v2078, 524288
    %v2087 = vor.u32 %v2079, 524288
    %v2088 = vor.u32 %v2080, 524288
    %v2089 = vor.u32 %v2081, 524288
    %v2090 = vor.u32 %v2082, 524288
    %v2091 = vor.u32 %v2083, 524288
    %vm2092 = vcmp.lt.s32.totalorder %v156, %v2084
    %vm2093 = vcmp.lt.s32.totalorder %v157, %v2084
    %vm2094 = vcmp.lt.s32.totalorder %v158, %v2085
    %vm2095 = vcmp.lt.s32.totalorder %v159, %v2085
    %vm2096 = vcmp.lt.s32.totalorder %v160, %v2086
    %vm2097 = vcmp.lt.s32.totalorder %v161, %v2086
    %vm2098 = vcmp.lt.s32.totalorder %v162, %v2087
    %vm2099 = vcmp.lt.s32.totalorder %v163, %v2087
    %vm2100 = vcmp.lt.s32.totalorder %v164, %v2088
    %vm2101 = vcmp.lt.s32.totalorder %v165, %v2088
    %vm2102 = vcmp.lt.s32.totalorder %v166, %v2089
    %vm2103 = vcmp.lt.s32.totalorder %v167, %v2089
    %vm2104 = vcmp.lt.s32.totalorder %v168, %v2090
    %vm2105 = vcmp.lt.s32.totalorder %v169, %v2090
    %vm2106 = vcmp.lt.s32.totalorder %v170, %v2091
    %vm2107 = vcmp.lt.s32.totalorder %v171, %v2091
    %v2108 = vsel %vm2092, 1, 0
    %v2109 = vsel %vm2093, 1, 0
    %v2110 = vsel %vm2094, 1, 0
    %v2111 = vsel %vm2095, 1, 0
    %v2112 = vsel %vm2096, 1, 0
    %v2113 = vsel %vm2097, 1, 0
    %v2114 = vsel %vm2098, 1, 0
    %v2115 = vsel %vm2099, 1, 0
    %v2116 = vsel %vm2100, 1, 0
    %v2117 = vsel %vm2101, 1, 0
    %v2118 = vsel %vm2102, 1, 0
    %v2119 = vsel %vm2103, 1, 0
    %v2120 = vsel %vm2104, 1, 0
    %v2121 = vsel %vm2105, 1, 0
    %v2122 = vsel %vm2106, 1, 0
    %v2123 = vsel %vm2107, 1, 0
    %v2124 = vadd.s32 %v2108, %v2109
    %v2125 = vand.u32 %v2124, 65535
    %v2126 = vshrl.u32 %v2124, 16
    %v2127 = vcvt.s32.f32 %v2125
    %v2128 = vcvt.s32.f32 %v2126
    %2129 = vadd.xlane.f32.xlu0 %v2127
    %v2130 = vpop.xlane.xlu0 %2129
    %2131 = vadd.xlane.f32.xlu0 %v2128
    %v2132 = vpop.xlane.xlu0 %2131
    %v2133 = vcvt.f32.s32 %v2130
    %v2134 = vcvt.f32.s32 %v2132
    %v2135 = vshll.u32 %v2134, 16
    %v2136 = vadd.s32 %v2135, %v2133
    %v2137 = vadd.s32 %v2110, %v2111
    %v2138 = vand.u32 %v2137, 65535
    %v2139 = vshrl.u32 %v2137, 16
    %v2140 = vcvt.s32.f32 %v2138
    %v2141 = vcvt.s32.f32 %v2139
    %2142 = vadd.xlane.f32.xlu0 %v2140
    %v2143 = vpop.xlane.xlu0 %2142
    %2144 = vadd.xlane.f32.xlu0 %v2141
    %v2145 = vpop.xlane.xlu0 %2144
    %v2146 = vcvt.f32.s32 %v2143
    %v2147 = vcvt.f32.s32 %v2145
    %v2148 = vshll.u32 %v2147, 16
    %v2149 = vadd.s32 %v2148, %v2146
    %v2150 = vadd.s32 %v2112, %v2113
    %v2151 = vand.u32 %v2150, 65535
    %v2152 = vshrl.u32 %v2150, 16
    %v2153 = vcvt.s32.f32 %v2151
    %v2154 = vcvt.s32.f32 %v2152
    %2155 = vadd.xlane.f32.xlu0 %v2153
    %v2156 = vpop.xlane.xlu0 %2155
    %2157 = vadd.xlane.f32.xlu0 %v2154
    %v2158 = vpop.xlane.xlu0 %2157
    %v2159 = vcvt.f32.s32 %v2156
    %v2160 = vcvt.f32.s32 %v2158
    %v2161 = vshll.u32 %v2160, 16
    %v2162 = vadd.s32 %v2161, %v2159
    %v2163 = vadd.s32 %v2114, %v2115
    %v2164 = vand.u32 %v2163, 65535
    %v2165 = vshrl.u32 %v2163, 16
    %v2166 = vcvt.s32.f32 %v2164
    %v2167 = vcvt.s32.f32 %v2165
    %2168 = vadd.xlane.f32.xlu0 %v2166
    %v2169 = vpop.xlane.xlu0 %2168
    %2170 = vadd.xlane.f32.xlu0 %v2167
    %v2171 = vpop.xlane.xlu0 %2170
    %v2172 = vcvt.f32.s32 %v2169
    %v2173 = vcvt.f32.s32 %v2171
    %v2174 = vshll.u32 %v2173, 16
    %v2175 = vadd.s32 %v2174, %v2172
    %v2176 = vadd.s32 %v2116, %v2117
    %v2177 = vand.u32 %v2176, 65535
    %v2178 = vshrl.u32 %v2176, 16
    %v2179 = vcvt.s32.f32 %v2177
    %v2180 = vcvt.s32.f32 %v2178
    %2181 = vadd.xlane.f32.xlu0 %v2179
    %v2182 = vpop.xlane.xlu0 %2181
    %2183 = vadd.xlane.f32.xlu0 %v2180
    %v2184 = vpop.xlane.xlu0 %2183
    %v2185 = vcvt.f32.s32 %v2182
    %v2186 = vcvt.f32.s32 %v2184
    %v2187 = vshll.u32 %v2186, 16
    %v2188 = vadd.s32 %v2187, %v2185
    %v2189 = vadd.s32 %v2118, %v2119
    %v2190 = vand.u32 %v2189, 65535
    %v2191 = vshrl.u32 %v2189, 16
    %v2192 = vcvt.s32.f32 %v2190
    %v2193 = vcvt.s32.f32 %v2191
    %2194 = vadd.xlane.f32.xlu0 %v2192
    %v2195 = vpop.xlane.xlu0 %2194
    %2196 = vadd.xlane.f32.xlu0 %v2193
    %v2197 = vpop.xlane.xlu0 %2196
    %v2198 = vcvt.f32.s32 %v2195
    %v2199 = vcvt.f32.s32 %v2197
    %v2200 = vshll.u32 %v2199, 16
    %v2201 = vadd.s32 %v2200, %v2198
    %v2202 = vadd.s32 %v2120, %v2121
    %v2203 = vand.u32 %v2202, 65535
    %v2204 = vshrl.u32 %v2202, 16
    %v2205 = vcvt.s32.f32 %v2203
    %v2206 = vcvt.s32.f32 %v2204
    %2207 = vadd.xlane.f32.xlu0 %v2205
    %v2208 = vpop.xlane.xlu0 %2207
    %2209 = vadd.xlane.f32.xlu0 %v2206
    %v2210 = vpop.xlane.xlu0 %2209
    %v2211 = vcvt.f32.s32 %v2208
    %v2212 = vcvt.f32.s32 %v2210
    %v2213 = vshll.u32 %v2212, 16
    %v2214 = vadd.s32 %v2213, %v2211
    %v2215 = vadd.s32 %v2122, %v2123
    %v2216 = vand.u32 %v2215, 65535
    %v2217 = vshrl.u32 %v2215, 16
    %v2218 = vcvt.s32.f32 %v2216
    %v2219 = vcvt.s32.f32 %v2217
    %2220 = vadd.xlane.f32.xlu0 %v2218
    %v2221 = vpop.xlane.xlu0 %2220
    %2222 = vadd.xlane.f32.xlu0 %v2219
    %v2223 = vpop.xlane.xlu0 %2222
    %v2224 = vcvt.f32.s32 %v2221
    %v2225 = vcvt.f32.s32 %v2223
    %v2226 = vshll.u32 %v2225, 16
    %v2227 = vadd.s32 %v2226, %v2224
    %vm2228 = vcmp.le.s32.totalorder %v2136, 127
    %vm2229 = vcmp.le.s32.totalorder %v2149, 127
    %vm2230 = vcmp.le.s32.totalorder %v2162, 127
    %vm2231 = vcmp.le.s32.totalorder %v2175, 127
    %vm2232 = vcmp.le.s32.totalorder %v2188, 127
    %vm2233 = vcmp.le.s32.totalorder %v2201, 127
    %vm2234 = vcmp.le.s32.totalorder %v2214, 127
    %vm2235 = vcmp.le.s32.totalorder %v2227, 127
    %v2236 = vsel %vm2228, %v2084, %v2076
    %v2237 = vsel %vm2229, %v2085, %v2077
    %v2238 = vsel %vm2230, %v2086, %v2078
    %v2239 = vsel %vm2231, %v2087, %v2079
    %v2240 = vsel %vm2232, %v2088, %v2080
    %v2241 = vsel %vm2233, %v2089, %v2081
    %v2242 = vsel %vm2234, %v2090, %v2082
    %v2243 = vsel %vm2235, %v2091, %v2083
    %v2244 = vor.u32 %v2236, 262144
    %v2245 = vor.u32 %v2237, 262144
    %v2246 = vor.u32 %v2238, 262144
    %v2247 = vor.u32 %v2239, 262144
    %v2248 = vor.u32 %v2240, 262144
    %v2249 = vor.u32 %v2241, 262144
    %v2250 = vor.u32 %v2242, 262144
    %v2251 = vor.u32 %v2243, 262144
    %vm2252 = vcmp.lt.s32.totalorder %v156, %v2244
    %vm2253 = vcmp.lt.s32.totalorder %v157, %v2244
    %vm2254 = vcmp.lt.s32.totalorder %v158, %v2245
    %vm2255 = vcmp.lt.s32.totalorder %v159, %v2245
    %vm2256 = vcmp.lt.s32.totalorder %v160, %v2246
    %vm2257 = vcmp.lt.s32.totalorder %v161, %v2246
    %vm2258 = vcmp.lt.s32.totalorder %v162, %v2247
    %vm2259 = vcmp.lt.s32.totalorder %v163, %v2247
    %vm2260 = vcmp.lt.s32.totalorder %v164, %v2248
    %vm2261 = vcmp.lt.s32.totalorder %v165, %v2248
    %vm2262 = vcmp.lt.s32.totalorder %v166, %v2249
    %vm2263 = vcmp.lt.s32.totalorder %v167, %v2249
    %vm2264 = vcmp.lt.s32.totalorder %v168, %v2250
    %vm2265 = vcmp.lt.s32.totalorder %v169, %v2250
    %vm2266 = vcmp.lt.s32.totalorder %v170, %v2251
    %vm2267 = vcmp.lt.s32.totalorder %v171, %v2251
    %v2268 = vsel %vm2252, 1, 0
    %v2269 = vsel %vm2253, 1, 0
    %v2270 = vsel %vm2254, 1, 0
    %v2271 = vsel %vm2255, 1, 0
    %v2272 = vsel %vm2256, 1, 0
    %v2273 = vsel %vm2257, 1, 0
    %v2274 = vsel %vm2258, 1, 0
    %v2275 = vsel %vm2259, 1, 0
    %v2276 = vsel %vm2260, 1, 0
    %v2277 = vsel %vm2261, 1, 0
    %v2278 = vsel %vm2262, 1, 0
    %v2279 = vsel %vm2263, 1, 0
    %v2280 = vsel %vm2264, 1, 0
    %v2281 = vsel %vm2265, 1, 0
    %v2282 = vsel %vm2266, 1, 0
    %v2283 = vsel %vm2267, 1, 0
    %v2284 = vadd.s32 %v2268, %v2269
    %v2285 = vand.u32 %v2284, 65535
    %v2286 = vshrl.u32 %v2284, 16
    %v2287 = vcvt.s32.f32 %v2285
    %v2288 = vcvt.s32.f32 %v2286
    %2289 = vadd.xlane.f32.xlu0 %v2287
    %v2290 = vpop.xlane.xlu0 %2289
    %2291 = vadd.xlane.f32.xlu0 %v2288
    %v2292 = vpop.xlane.xlu0 %2291
    %v2293 = vcvt.f32.s32 %v2290
    %v2294 = vcvt.f32.s32 %v2292
    %v2295 = vshll.u32 %v2294, 16
    %v2296 = vadd.s32 %v2295, %v2293
    %v2297 = vadd.s32 %v2270, %v2271
    %v2298 = vand.u32 %v2297, 65535
    %v2299 = vshrl.u32 %v2297, 16
    %v2300 = vcvt.s32.f32 %v2298
    %v2301 = vcvt.s32.f32 %v2299
    %2302 = vadd.xlane.f32.xlu0 %v2300
    %v2303 = vpop.xlane.xlu0 %2302
    %2304 = vadd.xlane.f32.xlu0 %v2301
    %v2305 = vpop.xlane.xlu0 %2304
    %v2306 = vcvt.f32.s32 %v2303
    %v2307 = vcvt.f32.s32 %v2305
    %v2308 = vshll.u32 %v2307, 16
    %v2309 = vadd.s32 %v2308, %v2306
    %v2310 = vadd.s32 %v2272, %v2273
    %v2311 = vand.u32 %v2310, 65535
    %v2312 = vshrl.u32 %v2310, 16
    %v2313 = vcvt.s32.f32 %v2311
    %v2314 = vcvt.s32.f32 %v2312
    %2315 = vadd.xlane.f32.xlu0 %v2313
    %v2316 = vpop.xlane.xlu0 %2315
    %2317 = vadd.xlane.f32.xlu0 %v2314
    %v2318 = vpop.xlane.xlu0 %2317
    %v2319 = vcvt.f32.s32 %v2316
    %v2320 = vcvt.f32.s32 %v2318
    %v2321 = vshll.u32 %v2320, 16
    %v2322 = vadd.s32 %v2321, %v2319
    %v2323 = vadd.s32 %v2274, %v2275
    %v2324 = vand.u32 %v2323, 65535
    %v2325 = vshrl.u32 %v2323, 16
    %v2326 = vcvt.s32.f32 %v2324
    %v2327 = vcvt.s32.f32 %v2325
    %2328 = vadd.xlane.f32.xlu0 %v2326
    %v2329 = vpop.xlane.xlu0 %2328
    %2330 = vadd.xlane.f32.xlu0 %v2327
    %v2331 = vpop.xlane.xlu0 %2330
    %v2332 = vcvt.f32.s32 %v2329
    %v2333 = vcvt.f32.s32 %v2331
    %v2334 = vshll.u32 %v2333, 16
    %v2335 = vadd.s32 %v2334, %v2332
    %v2336 = vadd.s32 %v2276, %v2277
    %v2337 = vand.u32 %v2336, 65535
    %v2338 = vshrl.u32 %v2336, 16
    %v2339 = vcvt.s32.f32 %v2337
    %v2340 = vcvt.s32.f32 %v2338
    %2341 = vadd.xlane.f32.xlu0 %v2339
    %v2342 = vpop.xlane.xlu0 %2341
    %2343 = vadd.xlane.f32.xlu0 %v2340
    %v2344 = vpop.xlane.xlu0 %2343
    %v2345 = vcvt.f32.s32 %v2342
    %v2346 = vcvt.f32.s32 %v2344
    %v2347 = vshll.u32 %v2346, 16
    %v2348 = vadd.s32 %v2347, %v2345
    %v2349 = vadd.s32 %v2278, %v2279
    %v2350 = vand.u32 %v2349, 65535
    %v2351 = vshrl.u32 %v2349, 16
    %v2352 = vcvt.s32.f32 %v2350
    %v2353 = vcvt.s32.f32 %v2351
    %2354 = vadd.xlane.f32.xlu0 %v2352
    %v2355 = vpop.xlane.xlu0 %2354
    %2356 = vadd.xlane.f32.xlu0 %v2353
    %v2357 = vpop.xlane.xlu0 %2356
    %v2358 = vcvt.f32.s32 %v2355
    %v2359 = vcvt.f32.s32 %v2357
    %v2360 = vshll.u32 %v2359, 16
    %v2361 = vadd.s32 %v2360, %v2358
    %v2362 = vadd.s32 %v2280, %v2281
    %v2363 = vand.u32 %v2362, 65535
    %v2364 = vshrl.u32 %v2362, 16
    %v2365 = vcvt.s32.f32 %v2363
    %v2366 = vcvt.s32.f32 %v2364
    %2367 = vadd.xlane.f32.xlu0 %v2365
    %v2368 = vpop.xlane.xlu0 %2367
    %2369 = vadd.xlane.f32.xlu0 %v2366
    %v2370 = vpop.xlane.xlu0 %2369
    %v2371 = vcvt.f32.s32 %v2368
    %v2372 = vcvt.f32.s32 %v2370
    %v2373 = vshll.u32 %v2372, 16
    %v2374 = vadd.s32 %v2373, %v2371
    %v2375 = vadd.s32 %v2282, %v2283
    %v2376 = vand.u32 %v2375, 65535
    %v2377 = vshrl.u32 %v2375, 16
    %v2378 = vcvt.s32.f32 %v2376
    %v2379 = vcvt.s32.f32 %v2377
    %2380 = vadd.xlane.f32.xlu0 %v2378
    %v2381 = vpop.xlane.xlu0 %2380
    %2382 = vadd.xlane.f32.xlu0 %v2379
    %v2383 = vpop.xlane.xlu0 %2382
    %v2384 = vcvt.f32.s32 %v2381
    %v2385 = vcvt.f32.s32 %v2383
    %v2386 = vshll.u32 %v2385, 16
    %v2387 = vadd.s32 %v2386, %v2384
    %vm2388 = vcmp.le.s32.totalorder %v2296, 127
    %vm2389 = vcmp.le.s32.totalorder %v2309, 127
    %vm2390 = vcmp.le.s32.totalorder %v2322, 127
    %vm2391 = vcmp.le.s32.totalorder %v2335, 127
    %vm2392 = vcmp.le.s32.totalorder %v2348, 127
    %vm2393 = vcmp.le.s32.totalorder %v2361, 127
    %vm2394 = vcmp.le.s32.totalorder %v2374, 127
    %vm2395 = vcmp.le.s32.totalorder %v2387, 127
    %v2396 = vsel %vm2388, %v2244, %v2236
    %v2397 = vsel %vm2389, %v2245, %v2237
    %v2398 = vsel %vm2390, %v2246, %v2238
    %v2399 = vsel %vm2391, %v2247, %v2239
    %v2400 = vsel %vm2392, %v2248, %v2240
    %v2401 = vsel %vm2393, %v2249, %v2241
    %v2402 = vsel %vm2394, %v2250, %v2242
    %v2403 = vsel %vm2395, %v2251, %v2243
    %v2404 = vor.u32 %v2396, 131072
    %v2405 = vor.u32 %v2397, 131072
    %v2406 = vor.u32 %v2398, 131072
    %v2407 = vor.u32 %v2399, 131072
    %v2408 = vor.u32 %v2400, 131072
    %v2409 = vor.u32 %v2401, 131072
    %v2410 = vor.u32 %v2402, 131072
    %v2411 = vor.u32 %v2403, 131072
    %vm2412 = vcmp.lt.s32.totalorder %v156, %v2404
    %vm2413 = vcmp.lt.s32.totalorder %v157, %v2404
    %vm2414 = vcmp.lt.s32.totalorder %v158, %v2405
    %vm2415 = vcmp.lt.s32.totalorder %v159, %v2405
    %vm2416 = vcmp.lt.s32.totalorder %v160, %v2406
    %vm2417 = vcmp.lt.s32.totalorder %v161, %v2406
    %vm2418 = vcmp.lt.s32.totalorder %v162, %v2407
    %vm2419 = vcmp.lt.s32.totalorder %v163, %v2407
    %vm2420 = vcmp.lt.s32.totalorder %v164, %v2408
    %vm2421 = vcmp.lt.s32.totalorder %v165, %v2408
    %vm2422 = vcmp.lt.s32.totalorder %v166, %v2409
    %vm2423 = vcmp.lt.s32.totalorder %v167, %v2409
    %vm2424 = vcmp.lt.s32.totalorder %v168, %v2410
    %vm2425 = vcmp.lt.s32.totalorder %v169, %v2410
    %vm2426 = vcmp.lt.s32.totalorder %v170, %v2411
    %vm2427 = vcmp.lt.s32.totalorder %v171, %v2411
    %v2428 = vsel %vm2412, 1, 0
    %v2429 = vsel %vm2413, 1, 0
    %v2430 = vsel %vm2414, 1, 0
    %v2431 = vsel %vm2415, 1, 0
    %v2432 = vsel %vm2416, 1, 0
    %v2433 = vsel %vm2417, 1, 0
    %v2434 = vsel %vm2418, 1, 0
    %v2435 = vsel %vm2419, 1, 0
    %v2436 = vsel %vm2420, 1, 0
    %v2437 = vsel %vm2421, 1, 0
    %v2438 = vsel %vm2422, 1, 0
    %v2439 = vsel %vm2423, 1, 0
    %v2440 = vsel %vm2424, 1, 0
    %v2441 = vsel %vm2425, 1, 0
    %v2442 = vsel %vm2426, 1, 0
    %v2443 = vsel %vm2427, 1, 0
    %v2444 = vadd.s32 %v2428, %v2429
    %v2445 = vand.u32 %v2444, 65535
    %v2446 = vshrl.u32 %v2444, 16
    %v2447 = vcvt.s32.f32 %v2445
    %v2448 = vcvt.s32.f32 %v2446
    %2449 = vadd.xlane.f32.xlu0 %v2447
    %v2450 = vpop.xlane.xlu0 %2449
    %2451 = vadd.xlane.f32.xlu0 %v2448
    %v2452 = vpop.xlane.xlu0 %2451
    %v2453 = vcvt.f32.s32 %v2450
    %v2454 = vcvt.f32.s32 %v2452
    %v2455 = vshll.u32 %v2454, 16
    %v2456 = vadd.s32 %v2455, %v2453
    %v2457 = vadd.s32 %v2430, %v2431
    %v2458 = vand.u32 %v2457, 65535
    %v2459 = vshrl.u32 %v2457, 16
    %v2460 = vcvt.s32.f32 %v2458
    %v2461 = vcvt.s32.f32 %v2459
    %2462 = vadd.xlane.f32.xlu0 %v2460
    %v2463 = vpop.xlane.xlu0 %2462
    %2464 = vadd.xlane.f32.xlu0 %v2461
    %v2465 = vpop.xlane.xlu0 %2464
    %v2466 = vcvt.f32.s32 %v2463
    %v2467 = vcvt.f32.s32 %v2465
    %v2468 = vshll.u32 %v2467, 16
    %v2469 = vadd.s32 %v2468, %v2466
    %v2470 = vadd.s32 %v2432, %v2433
    %v2471 = vand.u32 %v2470, 65535
    %v2472 = vshrl.u32 %v2470, 16
    %v2473 = vcvt.s32.f32 %v2471
    %v2474 = vcvt.s32.f32 %v2472
    %2475 = vadd.xlane.f32.xlu0 %v2473
    %v2476 = vpop.xlane.xlu0 %2475
    %2477 = vadd.xlane.f32.xlu0 %v2474
    %v2478 = vpop.xlane.xlu0 %2477
    %v2479 = vcvt.f32.s32 %v2476
    %v2480 = vcvt.f32.s32 %v2478
    %v2481 = vshll.u32 %v2480, 16
    %v2482 = vadd.s32 %v2481, %v2479
    %v2483 = vadd.s32 %v2434, %v2435
    %v2484 = vand.u32 %v2483, 65535
    %v2485 = vshrl.u32 %v2483, 16
    %v2486 = vcvt.s32.f32 %v2484
    %v2487 = vcvt.s32.f32 %v2485
    %2488 = vadd.xlane.f32.xlu0 %v2486
    %v2489 = vpop.xlane.xlu0 %2488
    %2490 = vadd.xlane.f32.xlu0 %v2487
    %v2491 = vpop.xlane.xlu0 %2490
    %v2492 = vcvt.f32.s32 %v2489
    %v2493 = vcvt.f32.s32 %v2491
    %v2494 = vshll.u32 %v2493, 16
    %v2495 = vadd.s32 %v2494, %v2492
    %v2496 = vadd.s32 %v2436, %v2437
    %v2497 = vand.u32 %v2496, 65535
    %v2498 = vshrl.u32 %v2496, 16
    %v2499 = vcvt.s32.f32 %v2497
    %v2500 = vcvt.s32.f32 %v2498
    %2501 = vadd.xlane.f32.xlu0 %v2499
    %v2502 = vpop.xlane.xlu0 %2501
    %2503 = vadd.xlane.f32.xlu0 %v2500
    %v2504 = vpop.xlane.xlu0 %2503
    %v2505 = vcvt.f32.s32 %v2502
    %v2506 = vcvt.f32.s32 %v2504
    %v2507 = vshll.u32 %v2506, 16
    %v2508 = vadd.s32 %v2507, %v2505
    %v2509 = vadd.s32 %v2438, %v2439
    %v2510 = vand.u32 %v2509, 65535
    %v2511 = vshrl.u32 %v2509, 16
    %v2512 = vcvt.s32.f32 %v2510
    %v2513 = vcvt.s32.f32 %v2511
    %2514 = vadd.xlane.f32.xlu0 %v2512
    %v2515 = vpop.xlane.xlu0 %2514
    %2516 = vadd.xlane.f32.xlu0 %v2513
    %v2517 = vpop.xlane.xlu0 %2516
    %v2518 = vcvt.f32.s32 %v2515
    %v2519 = vcvt.f32.s32 %v2517
    %v2520 = vshll.u32 %v2519, 16
    %v2521 = vadd.s32 %v2520, %v2518
    %v2522 = vadd.s32 %v2440, %v2441
    %v2523 = vand.u32 %v2522, 65535
    %v2524 = vshrl.u32 %v2522, 16
    %v2525 = vcvt.s32.f32 %v2523
    %v2526 = vcvt.s32.f32 %v2524
    %2527 = vadd.xlane.f32.xlu0 %v2525
    %v2528 = vpop.xlane.xlu0 %2527
    %2529 = vadd.xlane.f32.xlu0 %v2526
    %v2530 = vpop.xlane.xlu0 %2529
    %v2531 = vcvt.f32.s32 %v2528
    %v2532 = vcvt.f32.s32 %v2530
    %v2533 = vshll.u32 %v2532, 16
    %v2534 = vadd.s32 %v2533, %v2531
    %v2535 = vadd.s32 %v2442, %v2443
    %v2536 = vand.u32 %v2535, 65535
    %v2537 = vshrl.u32 %v2535, 16
    %v2538 = vcvt.s32.f32 %v2536
    %v2539 = vcvt.s32.f32 %v2537
    %2540 = vadd.xlane.f32.xlu0 %v2538
    %v2541 = vpop.xlane.xlu0 %2540
    %2542 = vadd.xlane.f32.xlu0 %v2539
    %v2543 = vpop.xlane.xlu0 %2542
    %v2544 = vcvt.f32.s32 %v2541
    %v2545 = vcvt.f32.s32 %v2543
    %v2546 = vshll.u32 %v2545, 16
    %v2547 = vadd.s32 %v2546, %v2544
    %vm2548 = vcmp.le.s32.totalorder %v2456, 127
    %vm2549 = vcmp.le.s32.totalorder %v2469, 127
    %vm2550 = vcmp.le.s32.totalorder %v2482, 127
    %vm2551 = vcmp.le.s32.totalorder %v2495, 127
    %vm2552 = vcmp.le.s32.totalorder %v2508, 127
    %vm2553 = vcmp.le.s32.totalorder %v2521, 127
    %vm2554 = vcmp.le.s32.totalorder %v2534, 127
    %vm2555 = vcmp.le.s32.totalorder %v2547, 127
    %v2556 = vsel %vm2548, %v2404, %v2396
    %v2557 = vsel %vm2549, %v2405, %v2397
    %v2558 = vsel %vm2550, %v2406, %v2398
    %v2559 = vsel %vm2551, %v2407, %v2399
    %v2560 = vsel %vm2552, %v2408, %v2400
    %v2561 = vsel %vm2553, %v2409, %v2401
    %v2562 = vsel %vm2554, %v2410, %v2402
    %v2563 = vsel %vm2555, %v2411, %v2403
    %v2564 = vor.u32 %v2556, 65536
    %v2565 = vor.u32 %v2557, 65536
    %v2566 = vor.u32 %v2558, 65536
    %v2567 = vor.u32 %v2559, 65536
    %v2568 = vor.u32 %v2560, 65536
    %v2569 = vor.u32 %v2561, 65536
    %v2570 = vor.u32 %v2562, 65536
    %v2571 = vor.u32 %v2563, 65536
    %vm2572 = vcmp.lt.s32.totalorder %v156, %v2564
    %vm2573 = vcmp.lt.s32.totalorder %v157, %v2564
    %vm2574 = vcmp.lt.s32.totalorder %v158, %v2565
    %vm2575 = vcmp.lt.s32.totalorder %v159, %v2565
    %vm2576 = vcmp.lt.s32.totalorder %v160, %v2566
    %vm2577 = vcmp.lt.s32.totalorder %v161, %v2566
    %vm2578 = vcmp.lt.s32.totalorder %v162, %v2567
    %vm2579 = vcmp.lt.s32.totalorder %v163, %v2567
    %vm2580 = vcmp.lt.s32.totalorder %v164, %v2568
    %vm2581 = vcmp.lt.s32.totalorder %v165, %v2568
    %vm2582 = vcmp.lt.s32.totalorder %v166, %v2569
    %vm2583 = vcmp.lt.s32.totalorder %v167, %v2569
    %vm2584 = vcmp.lt.s32.totalorder %v168, %v2570
    %vm2585 = vcmp.lt.s32.totalorder %v169, %v2570
    %vm2586 = vcmp.lt.s32.totalorder %v170, %v2571
    %vm2587 = vcmp.lt.s32.totalorder %v171, %v2571
    %v2588 = vsel %vm2572, 1, 0
    %v2589 = vsel %vm2573, 1, 0
    %v2590 = vsel %vm2574, 1, 0
    %v2591 = vsel %vm2575, 1, 0
    %v2592 = vsel %vm2576, 1, 0
    %v2593 = vsel %vm2577, 1, 0
    %v2594 = vsel %vm2578, 1, 0
    %v2595 = vsel %vm2579, 1, 0
    %v2596 = vsel %vm2580, 1, 0
    %v2597 = vsel %vm2581, 1, 0
    %v2598 = vsel %vm2582, 1, 0
    %v2599 = vsel %vm2583, 1, 0
    %v2600 = vsel %vm2584, 1, 0
    %v2601 = vsel %vm2585, 1, 0
    %v2602 = vsel %vm2586, 1, 0
    %v2603 = vsel %vm2587, 1, 0
    %v2604 = vadd.s32 %v2588, %v2589
    %v2605 = vand.u32 %v2604, 65535
    %v2606 = vshrl.u32 %v2604, 16
    %v2607 = vcvt.s32.f32 %v2605
    %v2608 = vcvt.s32.f32 %v2606
    %2609 = vadd.xlane.f32.xlu0 %v2607
    %v2610 = vpop.xlane.xlu0 %2609
    %2611 = vadd.xlane.f32.xlu0 %v2608
    %v2612 = vpop.xlane.xlu0 %2611
    %v2613 = vcvt.f32.s32 %v2610
    %v2614 = vcvt.f32.s32 %v2612
    %v2615 = vshll.u32 %v2614, 16
    %v2616 = vadd.s32 %v2615, %v2613
    %v2617 = vadd.s32 %v2590, %v2591
    %v2618 = vand.u32 %v2617, 65535
    %v2619 = vshrl.u32 %v2617, 16
    %v2620 = vcvt.s32.f32 %v2618
    %v2621 = vcvt.s32.f32 %v2619
    %2622 = vadd.xlane.f32.xlu0 %v2620
    %v2623 = vpop.xlane.xlu0 %2622
    %2624 = vadd.xlane.f32.xlu0 %v2621
    %v2625 = vpop.xlane.xlu0 %2624
    %v2626 = vcvt.f32.s32 %v2623
    %v2627 = vcvt.f32.s32 %v2625
    %v2628 = vshll.u32 %v2627, 16
    %v2629 = vadd.s32 %v2628, %v2626
    %v2630 = vadd.s32 %v2592, %v2593
    %v2631 = vand.u32 %v2630, 65535
    %v2632 = vshrl.u32 %v2630, 16
    %v2633 = vcvt.s32.f32 %v2631
    %v2634 = vcvt.s32.f32 %v2632
    %2635 = vadd.xlane.f32.xlu0 %v2633
    %v2636 = vpop.xlane.xlu0 %2635
    %2637 = vadd.xlane.f32.xlu0 %v2634
    %v2638 = vpop.xlane.xlu0 %2637
    %v2639 = vcvt.f32.s32 %v2636
    %v2640 = vcvt.f32.s32 %v2638
    %v2641 = vshll.u32 %v2640, 16
    %v2642 = vadd.s32 %v2641, %v2639
    %v2643 = vadd.s32 %v2594, %v2595
    %v2644 = vand.u32 %v2643, 65535
    %v2645 = vshrl.u32 %v2643, 16
    %v2646 = vcvt.s32.f32 %v2644
    %v2647 = vcvt.s32.f32 %v2645
    %2648 = vadd.xlane.f32.xlu0 %v2646
    %v2649 = vpop.xlane.xlu0 %2648
    %2650 = vadd.xlane.f32.xlu0 %v2647
    %v2651 = vpop.xlane.xlu0 %2650
    %v2652 = vcvt.f32.s32 %v2649
    %v2653 = vcvt.f32.s32 %v2651
    %v2654 = vshll.u32 %v2653, 16
    %v2655 = vadd.s32 %v2654, %v2652
    %v2656 = vadd.s32 %v2596, %v2597
    %v2657 = vand.u32 %v2656, 65535
    %v2658 = vshrl.u32 %v2656, 16
    %v2659 = vcvt.s32.f32 %v2657
    %v2660 = vcvt.s32.f32 %v2658
    %2661 = vadd.xlane.f32.xlu0 %v2659
    %v2662 = vpop.xlane.xlu0 %2661
    %2663 = vadd.xlane.f32.xlu0 %v2660
    %v2664 = vpop.xlane.xlu0 %2663
    %v2665 = vcvt.f32.s32 %v2662
    %v2666 = vcvt.f32.s32 %v2664
    %v2667 = vshll.u32 %v2666, 16
    %v2668 = vadd.s32 %v2667, %v2665
    %v2669 = vadd.s32 %v2598, %v2599
    %v2670 = vand.u32 %v2669, 65535
    %v2671 = vshrl.u32 %v2669, 16
    %v2672 = vcvt.s32.f32 %v2670
    %v2673 = vcvt.s32.f32 %v2671
    %2674 = vadd.xlane.f32.xlu0 %v2672
    %v2675 = vpop.xlane.xlu0 %2674
    %2676 = vadd.xlane.f32.xlu0 %v2673
    %v2677 = vpop.xlane.xlu0 %2676
    %v2678 = vcvt.f32.s32 %v2675
    %v2679 = vcvt.f32.s32 %v2677
    %v2680 = vshll.u32 %v2679, 16
    %v2681 = vadd.s32 %v2680, %v2678
    %v2682 = vadd.s32 %v2600, %v2601
    %v2683 = vand.u32 %v2682, 65535
    %v2684 = vshrl.u32 %v2682, 16
    %v2685 = vcvt.s32.f32 %v2683
    %v2686 = vcvt.s32.f32 %v2684
    %2687 = vadd.xlane.f32.xlu0 %v2685
    %v2688 = vpop.xlane.xlu0 %2687
    %2689 = vadd.xlane.f32.xlu0 %v2686
    %v2690 = vpop.xlane.xlu0 %2689
    %v2691 = vcvt.f32.s32 %v2688
    %v2692 = vcvt.f32.s32 %v2690
    %v2693 = vshll.u32 %v2692, 16
    %v2694 = vadd.s32 %v2693, %v2691
    %v2695 = vadd.s32 %v2602, %v2603
    %v2696 = vand.u32 %v2695, 65535
    %v2697 = vshrl.u32 %v2695, 16
    %v2698 = vcvt.s32.f32 %v2696
    %v2699 = vcvt.s32.f32 %v2697
    %2700 = vadd.xlane.f32.xlu0 %v2698
    %v2701 = vpop.xlane.xlu0 %2700
    %2702 = vadd.xlane.f32.xlu0 %v2699
    %v2703 = vpop.xlane.xlu0 %2702
    %v2704 = vcvt.f32.s32 %v2701
    %v2705 = vcvt.f32.s32 %v2703
    %v2706 = vshll.u32 %v2705, 16
    %v2707 = vadd.s32 %v2706, %v2704
    %vm2708 = vcmp.le.s32.totalorder %v2616, 127
    %vm2709 = vcmp.le.s32.totalorder %v2629, 127
    %vm2710 = vcmp.le.s32.totalorder %v2642, 127
    %vm2711 = vcmp.le.s32.totalorder %v2655, 127
    %vm2712 = vcmp.le.s32.totalorder %v2668, 127
    %vm2713 = vcmp.le.s32.totalorder %v2681, 127
    %vm2714 = vcmp.le.s32.totalorder %v2694, 127
    %vm2715 = vcmp.le.s32.totalorder %v2707, 127
    %v2716 = vsel %vm2708, %v2564, %v2556
    %v2717 = vsel %vm2709, %v2565, %v2557
    %v2718 = vsel %vm2710, %v2566, %v2558
    %v2719 = vsel %vm2711, %v2567, %v2559
    %v2720 = vsel %vm2712, %v2568, %v2560
    %v2721 = vsel %vm2713, %v2569, %v2561
    %v2722 = vsel %vm2714, %v2570, %v2562
    %v2723 = vsel %vm2715, %v2571, %v2563
    %v2724 = vor.u32 %v2716, 32768
    %v2725 = vor.u32 %v2717, 32768
    %v2726 = vor.u32 %v2718, 32768
    %v2727 = vor.u32 %v2719, 32768
    %v2728 = vor.u32 %v2720, 32768
    %v2729 = vor.u32 %v2721, 32768
    %v2730 = vor.u32 %v2722, 32768
    %v2731 = vor.u32 %v2723, 32768
    %vm2732 = vcmp.lt.s32.totalorder %v156, %v2724
    %vm2733 = vcmp.lt.s32.totalorder %v157, %v2724
    %vm2734 = vcmp.lt.s32.totalorder %v158, %v2725
    %vm2735 = vcmp.lt.s32.totalorder %v159, %v2725
    %vm2736 = vcmp.lt.s32.totalorder %v160, %v2726
    %vm2737 = vcmp.lt.s32.totalorder %v161, %v2726
    %vm2738 = vcmp.lt.s32.totalorder %v162, %v2727
    %vm2739 = vcmp.lt.s32.totalorder %v163, %v2727
    %vm2740 = vcmp.lt.s32.totalorder %v164, %v2728
    %vm2741 = vcmp.lt.s32.totalorder %v165, %v2728
    %vm2742 = vcmp.lt.s32.totalorder %v166, %v2729
    %vm2743 = vcmp.lt.s32.totalorder %v167, %v2729
    %vm2744 = vcmp.lt.s32.totalorder %v168, %v2730
    %vm2745 = vcmp.lt.s32.totalorder %v169, %v2730
    %vm2746 = vcmp.lt.s32.totalorder %v170, %v2731
    %vm2747 = vcmp.lt.s32.totalorder %v171, %v2731
    %v2748 = vsel %vm2732, 1, 0
    %v2749 = vsel %vm2733, 1, 0
    %v2750 = vsel %vm2734, 1, 0
    %v2751 = vsel %vm2735, 1, 0
    %v2752 = vsel %vm2736, 1, 0
    %v2753 = vsel %vm2737, 1, 0
    %v2754 = vsel %vm2738, 1, 0
    %v2755 = vsel %vm2739, 1, 0
    %v2756 = vsel %vm2740, 1, 0
    %v2757 = vsel %vm2741, 1, 0
    %v2758 = vsel %vm2742, 1, 0
    %v2759 = vsel %vm2743, 1, 0
    %v2760 = vsel %vm2744, 1, 0
    %v2761 = vsel %vm2745, 1, 0
    %v2762 = vsel %vm2746, 1, 0
    %v2763 = vsel %vm2747, 1, 0
    %v2764 = vadd.s32 %v2748, %v2749
    %v2765 = vand.u32 %v2764, 65535
    %v2766 = vshrl.u32 %v2764, 16
    %v2767 = vcvt.s32.f32 %v2765
    %v2768 = vcvt.s32.f32 %v2766
    %2769 = vadd.xlane.f32.xlu0 %v2767
    %v2770 = vpop.xlane.xlu0 %2769
    %2771 = vadd.xlane.f32.xlu0 %v2768
    %v2772 = vpop.xlane.xlu0 %2771
    %v2773 = vcvt.f32.s32 %v2770
    %v2774 = vcvt.f32.s32 %v2772
    %v2775 = vshll.u32 %v2774, 16
    %v2776 = vadd.s32 %v2775, %v2773
    %v2777 = vadd.s32 %v2750, %v2751
    %v2778 = vand.u32 %v2777, 65535
    %v2779 = vshrl.u32 %v2777, 16
    %v2780 = vcvt.s32.f32 %v2778
    %v2781 = vcvt.s32.f32 %v2779
    %2782 = vadd.xlane.f32.xlu0 %v2780
    %v2783 = vpop.xlane.xlu0 %2782
    %2784 = vadd.xlane.f32.xlu0 %v2781
    %v2785 = vpop.xlane.xlu0 %2784
    %v2786 = vcvt.f32.s32 %v2783
    %v2787 = vcvt.f32.s32 %v2785
    %v2788 = vshll.u32 %v2787, 16
    %v2789 = vadd.s32 %v2788, %v2786
    %v2790 = vadd.s32 %v2752, %v2753
    %v2791 = vand.u32 %v2790, 65535
    %v2792 = vshrl.u32 %v2790, 16
    %v2793 = vcvt.s32.f32 %v2791
    %v2794 = vcvt.s32.f32 %v2792
    %2795 = vadd.xlane.f32.xlu0 %v2793
    %v2796 = vpop.xlane.xlu0 %2795
    %2797 = vadd.xlane.f32.xlu0 %v2794
    %v2798 = vpop.xlane.xlu0 %2797
    %v2799 = vcvt.f32.s32 %v2796
    %v2800 = vcvt.f32.s32 %v2798
    %v2801 = vshll.u32 %v2800, 16
    %v2802 = vadd.s32 %v2801, %v2799
    %v2803 = vadd.s32 %v2754, %v2755
    %v2804 = vand.u32 %v2803, 65535
    %v2805 = vshrl.u32 %v2803, 16
    %v2806 = vcvt.s32.f32 %v2804
    %v2807 = vcvt.s32.f32 %v2805
    %2808 = vadd.xlane.f32.xlu0 %v2806
    %v2809 = vpop.xlane.xlu0 %2808
    %2810 = vadd.xlane.f32.xlu0 %v2807
    %v2811 = vpop.xlane.xlu0 %2810
    %v2812 = vcvt.f32.s32 %v2809
    %v2813 = vcvt.f32.s32 %v2811
    %v2814 = vshll.u32 %v2813, 16
    %v2815 = vadd.s32 %v2814, %v2812
    %v2816 = vadd.s32 %v2756, %v2757
    %v2817 = vand.u32 %v2816, 65535
    %v2818 = vshrl.u32 %v2816, 16
    %v2819 = vcvt.s32.f32 %v2817
    %v2820 = vcvt.s32.f32 %v2818
    %2821 = vadd.xlane.f32.xlu0 %v2819
    %v2822 = vpop.xlane.xlu0 %2821
    %2823 = vadd.xlane.f32.xlu0 %v2820
    %v2824 = vpop.xlane.xlu0 %2823
    %v2825 = vcvt.f32.s32 %v2822
    %v2826 = vcvt.f32.s32 %v2824
    %v2827 = vshll.u32 %v2826, 16
    %v2828 = vadd.s32 %v2827, %v2825
    %v2829 = vadd.s32 %v2758, %v2759
    %v2830 = vand.u32 %v2829, 65535
    %v2831 = vshrl.u32 %v2829, 16
    %v2832 = vcvt.s32.f32 %v2830
    %v2833 = vcvt.s32.f32 %v2831
    %2834 = vadd.xlane.f32.xlu0 %v2832
    %v2835 = vpop.xlane.xlu0 %2834
    %2836 = vadd.xlane.f32.xlu0 %v2833
    %v2837 = vpop.xlane.xlu0 %2836
    %v2838 = vcvt.f32.s32 %v2835
    %v2839 = vcvt.f32.s32 %v2837
    %v2840 = vshll.u32 %v2839, 16
    %v2841 = vadd.s32 %v2840, %v2838
    %v2842 = vadd.s32 %v2760, %v2761
    %v2843 = vand.u32 %v2842, 65535
    %v2844 = vshrl.u32 %v2842, 16
    %v2845 = vcvt.s32.f32 %v2843
    %v2846 = vcvt.s32.f32 %v2844
    %2847 = vadd.xlane.f32.xlu0 %v2845
    %v2848 = vpop.xlane.xlu0 %2847
    %2849 = vadd.xlane.f32.xlu0 %v2846
    %v2850 = vpop.xlane.xlu0 %2849
    %v2851 = vcvt.f32.s32 %v2848
    %v2852 = vcvt.f32.s32 %v2850
    %v2853 = vshll.u32 %v2852, 16
    %v2854 = vadd.s32 %v2853, %v2851
    %v2855 = vadd.s32 %v2762, %v2763
    %v2856 = vand.u32 %v2855, 65535
    %v2857 = vshrl.u32 %v2855, 16
    %v2858 = vcvt.s32.f32 %v2856
    %v2859 = vcvt.s32.f32 %v2857
    %2860 = vadd.xlane.f32.xlu0 %v2858
    %v2861 = vpop.xlane.xlu0 %2860
    %2862 = vadd.xlane.f32.xlu0 %v2859
    %v2863 = vpop.xlane.xlu0 %2862
    %v2864 = vcvt.f32.s32 %v2861
    %v2865 = vcvt.f32.s32 %v2863
    %v2866 = vshll.u32 %v2865, 16
    %v2867 = vadd.s32 %v2866, %v2864
    %vm2868 = vcmp.le.s32.totalorder %v2776, 127
    %vm2869 = vcmp.le.s32.totalorder %v2789, 127
    %vm2870 = vcmp.le.s32.totalorder %v2802, 127
    %vm2871 = vcmp.le.s32.totalorder %v2815, 127
    %vm2872 = vcmp.le.s32.totalorder %v2828, 127
    %vm2873 = vcmp.le.s32.totalorder %v2841, 127
    %vm2874 = vcmp.le.s32.totalorder %v2854, 127
    %vm2875 = vcmp.le.s32.totalorder %v2867, 127
    %v2876 = vsel %vm2868, %v2724, %v2716
    %v2877 = vsel %vm2869, %v2725, %v2717
    %v2878 = vsel %vm2870, %v2726, %v2718
    %v2879 = vsel %vm2871, %v2727, %v2719
    %v2880 = vsel %vm2872, %v2728, %v2720
    %v2881 = vsel %vm2873, %v2729, %v2721
    %v2882 = vsel %vm2874, %v2730, %v2722
    %v2883 = vsel %vm2875, %v2731, %v2723
    %v2884 = vor.u32 %v2876, 16384
    %v2885 = vor.u32 %v2877, 16384
    %v2886 = vor.u32 %v2878, 16384
    %v2887 = vor.u32 %v2879, 16384
    %v2888 = vor.u32 %v2880, 16384
    %v2889 = vor.u32 %v2881, 16384
    %v2890 = vor.u32 %v2882, 16384
    %v2891 = vor.u32 %v2883, 16384
    %vm2892 = vcmp.lt.s32.totalorder %v156, %v2884
    %vm2893 = vcmp.lt.s32.totalorder %v157, %v2884
    %vm2894 = vcmp.lt.s32.totalorder %v158, %v2885
    %vm2895 = vcmp.lt.s32.totalorder %v159, %v2885
    %vm2896 = vcmp.lt.s32.totalorder %v160, %v2886
    %vm2897 = vcmp.lt.s32.totalorder %v161, %v2886
    %vm2898 = vcmp.lt.s32.totalorder %v162, %v2887
    %vm2899 = vcmp.lt.s32.totalorder %v163, %v2887
    %vm2900 = vcmp.lt.s32.totalorder %v164, %v2888
    %vm2901 = vcmp.lt.s32.totalorder %v165, %v2888
    %vm2902 = vcmp.lt.s32.totalorder %v166, %v2889
    %vm2903 = vcmp.lt.s32.totalorder %v167, %v2889
    %vm2904 = vcmp.lt.s32.totalorder %v168, %v2890
    %vm2905 = vcmp.lt.s32.totalorder %v169, %v2890
    %vm2906 = vcmp.lt.s32.totalorder %v170, %v2891
    %vm2907 = vcmp.lt.s32.totalorder %v171, %v2891
    %v2908 = vsel %vm2892, 1, 0
    %v2909 = vsel %vm2893, 1, 0
    %v2910 = vsel %vm2894, 1, 0
    %v2911 = vsel %vm2895, 1, 0
    %v2912 = vsel %vm2896, 1, 0
    %v2913 = vsel %vm2897, 1, 0
    %v2914 = vsel %vm2898, 1, 0
    %v2915 = vsel %vm2899, 1, 0
    %v2916 = vsel %vm2900, 1, 0
    %v2917 = vsel %vm2901, 1, 0
    %v2918 = vsel %vm2902, 1, 0
    %v2919 = vsel %vm2903, 1, 0
    %v2920 = vsel %vm2904, 1, 0
    %v2921 = vsel %vm2905, 1, 0
    %v2922 = vsel %vm2906, 1, 0
    %v2923 = vsel %vm2907, 1, 0
    %v2924 = vadd.s32 %v2908, %v2909
    %v2925 = vand.u32 %v2924, 65535
    %v2926 = vshrl.u32 %v2924, 16
    %v2927 = vcvt.s32.f32 %v2925
    %v2928 = vcvt.s32.f32 %v2926
    %2929 = vadd.xlane.f32.xlu0 %v2927
    %v2930 = vpop.xlane.xlu0 %2929
    %2931 = vadd.xlane.f32.xlu0 %v2928
    %v2932 = vpop.xlane.xlu0 %2931
    %v2933 = vcvt.f32.s32 %v2930
    %v2934 = vcvt.f32.s32 %v2932
    %v2935 = vshll.u32 %v2934, 16
    %v2936 = vadd.s32 %v2935, %v2933
    %v2937 = vadd.s32 %v2910, %v2911
    %v2938 = vand.u32 %v2937, 65535
    %v2939 = vshrl.u32 %v2937, 16
    %v2940 = vcvt.s32.f32 %v2938
    %v2941 = vcvt.s32.f32 %v2939
    %2942 = vadd.xlane.f32.xlu0 %v2940
    %v2943 = vpop.xlane.xlu0 %2942
    %2944 = vadd.xlane.f32.xlu0 %v2941
    %v2945 = vpop.xlane.xlu0 %2944
    %v2946 = vcvt.f32.s32 %v2943
    %v2947 = vcvt.f32.s32 %v2945
    %v2948 = vshll.u32 %v2947, 16
    %v2949 = vadd.s32 %v2948, %v2946
    %v2950 = vadd.s32 %v2912, %v2913
    %v2951 = vand.u32 %v2950, 65535
    %v2952 = vshrl.u32 %v2950, 16
    %v2953 = vcvt.s32.f32 %v2951
    %v2954 = vcvt.s32.f32 %v2952
    %2955 = vadd.xlane.f32.xlu0 %v2953
    %v2956 = vpop.xlane.xlu0 %2955
    %2957 = vadd.xlane.f32.xlu0 %v2954
    %v2958 = vpop.xlane.xlu0 %2957
    %v2959 = vcvt.f32.s32 %v2956
    %v2960 = vcvt.f32.s32 %v2958
    %v2961 = vshll.u32 %v2960, 16
    %v2962 = vadd.s32 %v2961, %v2959
    %v2963 = vadd.s32 %v2914, %v2915
    %v2964 = vand.u32 %v2963, 65535
    %v2965 = vshrl.u32 %v2963, 16
    %v2966 = vcvt.s32.f32 %v2964
    %v2967 = vcvt.s32.f32 %v2965
    %2968 = vadd.xlane.f32.xlu0 %v2966
    %v2969 = vpop.xlane.xlu0 %2968
    %2970 = vadd.xlane.f32.xlu0 %v2967
    %v2971 = vpop.xlane.xlu0 %2970
    %v2972 = vcvt.f32.s32 %v2969
    %v2973 = vcvt.f32.s32 %v2971
    %v2974 = vshll.u32 %v2973, 16
    %v2975 = vadd.s32 %v2974, %v2972
    %v2976 = vadd.s32 %v2916, %v2917
    %v2977 = vand.u32 %v2976, 65535
    %v2978 = vshrl.u32 %v2976, 16
    %v2979 = vcvt.s32.f32 %v2977
    %v2980 = vcvt.s32.f32 %v2978
    %2981 = vadd.xlane.f32.xlu0 %v2979
    %v2982 = vpop.xlane.xlu0 %2981
    %2983 = vadd.xlane.f32.xlu0 %v2980
    %v2984 = vpop.xlane.xlu0 %2983
    %v2985 = vcvt.f32.s32 %v2982
    %v2986 = vcvt.f32.s32 %v2984
    %v2987 = vshll.u32 %v2986, 16
    %v2988 = vadd.s32 %v2987, %v2985
    %v2989 = vadd.s32 %v2918, %v2919
    %v2990 = vand.u32 %v2989, 65535
    %v2991 = vshrl.u32 %v2989, 16
    %v2992 = vcvt.s32.f32 %v2990
    %v2993 = vcvt.s32.f32 %v2991
    %2994 = vadd.xlane.f32.xlu0 %v2992
    %v2995 = vpop.xlane.xlu0 %2994
    %2996 = vadd.xlane.f32.xlu0 %v2993
    %v2997 = vpop.xlane.xlu0 %2996
    %v2998 = vcvt.f32.s32 %v2995
    %v2999 = vcvt.f32.s32 %v2997
    %v3000 = vshll.u32 %v2999, 16
    %v3001 = vadd.s32 %v3000, %v2998
    %v3002 = vadd.s32 %v2920, %v2921
    %v3003 = vand.u32 %v3002, 65535
    %v3004 = vshrl.u32 %v3002, 16
    %v3005 = vcvt.s32.f32 %v3003
    %v3006 = vcvt.s32.f32 %v3004
    %3007 = vadd.xlane.f32.xlu0 %v3005
    %v3008 = vpop.xlane.xlu0 %3007
    %3009 = vadd.xlane.f32.xlu0 %v3006
    %v3010 = vpop.xlane.xlu0 %3009
    %v3011 = vcvt.f32.s32 %v3008
    %v3012 = vcvt.f32.s32 %v3010
    %v3013 = vshll.u32 %v3012, 16
    %v3014 = vadd.s32 %v3013, %v3011
    %v3015 = vadd.s32 %v2922, %v2923
    %v3016 = vand.u32 %v3015, 65535
    %v3017 = vshrl.u32 %v3015, 16
    %v3018 = vcvt.s32.f32 %v3016
    %v3019 = vcvt.s32.f32 %v3017
    %3020 = vadd.xlane.f32.xlu0 %v3018
    %v3021 = vpop.xlane.xlu0 %3020
    %3022 = vadd.xlane.f32.xlu0 %v3019
    %v3023 = vpop.xlane.xlu0 %3022
    %v3024 = vcvt.f32.s32 %v3021
    %v3025 = vcvt.f32.s32 %v3023
    %v3026 = vshll.u32 %v3025, 16
    %v3027 = vadd.s32 %v3026, %v3024
    %vm3028 = vcmp.le.s32.totalorder %v2936, 127
    %vm3029 = vcmp.le.s32.totalorder %v2949, 127
    %vm3030 = vcmp.le.s32.totalorder %v2962, 127
    %vm3031 = vcmp.le.s32.totalorder %v2975, 127
    %vm3032 = vcmp.le.s32.totalorder %v2988, 127
    %vm3033 = vcmp.le.s32.totalorder %v3001, 127
    %vm3034 = vcmp.le.s32.totalorder %v3014, 127
    %vm3035 = vcmp.le.s32.totalorder %v3027, 127
    %v3036 = vsel %vm3028, %v2884, %v2876
    %v3037 = vsel %vm3029, %v2885, %v2877
    %v3038 = vsel %vm3030, %v2886, %v2878
    %v3039 = vsel %vm3031, %v2887, %v2879
    %v3040 = vsel %vm3032, %v2888, %v2880
    %v3041 = vsel %vm3033, %v2889, %v2881
    %v3042 = vsel %vm3034, %v2890, %v2882
    %v3043 = vsel %vm3035, %v2891, %v2883
    %v3044 = vor.u32 %v3036, 8192
    %v3045 = vor.u32 %v3037, 8192
    %v3046 = vor.u32 %v3038, 8192
    %v3047 = vor.u32 %v3039, 8192
    %v3048 = vor.u32 %v3040, 8192
    %v3049 = vor.u32 %v3041, 8192
    %v3050 = vor.u32 %v3042, 8192
    %v3051 = vor.u32 %v3043, 8192
    %vm3052 = vcmp.lt.s32.totalorder %v156, %v3044
    %vm3053 = vcmp.lt.s32.totalorder %v157, %v3044
    %vm3054 = vcmp.lt.s32.totalorder %v158, %v3045
    %vm3055 = vcmp.lt.s32.totalorder %v159, %v3045
    %vm3056 = vcmp.lt.s32.totalorder %v160, %v3046
    %vm3057 = vcmp.lt.s32.totalorder %v161, %v3046
    %vm3058 = vcmp.lt.s32.totalorder %v162, %v3047
    %vm3059 = vcmp.lt.s32.totalorder %v163, %v3047
    %vm3060 = vcmp.lt.s32.totalorder %v164, %v3048
    %vm3061 = vcmp.lt.s32.totalorder %v165, %v3048
    %vm3062 = vcmp.lt.s32.totalorder %v166, %v3049
    %vm3063 = vcmp.lt.s32.totalorder %v167, %v3049
    %vm3064 = vcmp.lt.s32.totalorder %v168, %v3050
    %vm3065 = vcmp.lt.s32.totalorder %v169, %v3050
    %vm3066 = vcmp.lt.s32.totalorder %v170, %v3051
    %vm3067 = vcmp.lt.s32.totalorder %v171, %v3051
    %v3068 = vsel %vm3052, 1, 0
    %v3069 = vsel %vm3053, 1, 0
    %v3070 = vsel %vm3054, 1, 0
    %v3071 = vsel %vm3055, 1, 0
    %v3072 = vsel %vm3056, 1, 0
    %v3073 = vsel %vm3057, 1, 0
    %v3074 = vsel %vm3058, 1, 0
    %v3075 = vsel %vm3059, 1, 0
    %v3076 = vsel %vm3060, 1, 0
    %v3077 = vsel %vm3061, 1, 0
    %v3078 = vsel %vm3062, 1, 0
    %v3079 = vsel %vm3063, 1, 0
    %v3080 = vsel %vm3064, 1, 0
    %v3081 = vsel %vm3065, 1, 0
    %v3082 = vsel %vm3066, 1, 0
    %v3083 = vsel %vm3067, 1, 0
    %v3084 = vadd.s32 %v3068, %v3069
    %v3085 = vand.u32 %v3084, 65535
    %v3086 = vshrl.u32 %v3084, 16
    %v3087 = vcvt.s32.f32 %v3085
    %v3088 = vcvt.s32.f32 %v3086
    %3089 = vadd.xlane.f32.xlu0 %v3087
    %v3090 = vpop.xlane.xlu0 %3089
    %3091 = vadd.xlane.f32.xlu0 %v3088
    %v3092 = vpop.xlane.xlu0 %3091
    %v3093 = vcvt.f32.s32 %v3090
    %v3094 = vcvt.f32.s32 %v3092
    %v3095 = vshll.u32 %v3094, 16
    %v3096 = vadd.s32 %v3095, %v3093
    %v3097 = vadd.s32 %v3070, %v3071
    %v3098 = vand.u32 %v3097, 65535
    %v3099 = vshrl.u32 %v3097, 16
    %v3100 = vcvt.s32.f32 %v3098
    %v3101 = vcvt.s32.f32 %v3099
    %3102 = vadd.xlane.f32.xlu0 %v3100
    %v3103 = vpop.xlane.xlu0 %3102
    %3104 = vadd.xlane.f32.xlu0 %v3101
    %v3105 = vpop.xlane.xlu0 %3104
    %v3106 = vcvt.f32.s32 %v3103
    %v3107 = vcvt.f32.s32 %v3105
    %v3108 = vshll.u32 %v3107, 16
    %v3109 = vadd.s32 %v3108, %v3106
    %v3110 = vadd.s32 %v3072, %v3073
    %v3111 = vand.u32 %v3110, 65535
    %v3112 = vshrl.u32 %v3110, 16
    %v3113 = vcvt.s32.f32 %v3111
    %v3114 = vcvt.s32.f32 %v3112
    %3115 = vadd.xlane.f32.xlu0 %v3113
    %v3116 = vpop.xlane.xlu0 %3115
    %3117 = vadd.xlane.f32.xlu0 %v3114
    %v3118 = vpop.xlane.xlu0 %3117
    %v3119 = vcvt.f32.s32 %v3116
    %v3120 = vcvt.f32.s32 %v3118
    %v3121 = vshll.u32 %v3120, 16
    %v3122 = vadd.s32 %v3121, %v3119
    %v3123 = vadd.s32 %v3074, %v3075
    %v3124 = vand.u32 %v3123, 65535
    %v3125 = vshrl.u32 %v3123, 16
    %v3126 = vcvt.s32.f32 %v3124
    %v3127 = vcvt.s32.f32 %v3125
    %3128 = vadd.xlane.f32.xlu0 %v3126
    %v3129 = vpop.xlane.xlu0 %3128
    %3130 = vadd.xlane.f32.xlu0 %v3127
    %v3131 = vpop.xlane.xlu0 %3130
    %v3132 = vcvt.f32.s32 %v3129
    %v3133 = vcvt.f32.s32 %v3131
    %v3134 = vshll.u32 %v3133, 16
    %v3135 = vadd.s32 %v3134, %v3132
    %v3136 = vadd.s32 %v3076, %v3077
    %v3137 = vand.u32 %v3136, 65535
    %v3138 = vshrl.u32 %v3136, 16
    %v3139 = vcvt.s32.f32 %v3137
    %v3140 = vcvt.s32.f32 %v3138
    %3141 = vadd.xlane.f32.xlu0 %v3139
    %v3142 = vpop.xlane.xlu0 %3141
    %3143 = vadd.xlane.f32.xlu0 %v3140
    %v3144 = vpop.xlane.xlu0 %3143
    %v3145 = vcvt.f32.s32 %v3142
    %v3146 = vcvt.f32.s32 %v3144
    %v3147 = vshll.u32 %v3146, 16
    %v3148 = vadd.s32 %v3147, %v3145
    %v3149 = vadd.s32 %v3078, %v3079
    %v3150 = vand.u32 %v3149, 65535
    %v3151 = vshrl.u32 %v3149, 16
    %v3152 = vcvt.s32.f32 %v3150
    %v3153 = vcvt.s32.f32 %v3151
    %3154 = vadd.xlane.f32.xlu0 %v3152
    %v3155 = vpop.xlane.xlu0 %3154
    %3156 = vadd.xlane.f32.xlu0 %v3153
    %v3157 = vpop.xlane.xlu0 %3156
    %v3158 = vcvt.f32.s32 %v3155
    %v3159 = vcvt.f32.s32 %v3157
    %v3160 = vshll.u32 %v3159, 16
    %v3161 = vadd.s32 %v3160, %v3158
    %v3162 = vadd.s32 %v3080, %v3081
    %v3163 = vand.u32 %v3162, 65535
    %v3164 = vshrl.u32 %v3162, 16
    %v3165 = vcvt.s32.f32 %v3163
    %v3166 = vcvt.s32.f32 %v3164
    %3167 = vadd.xlane.f32.xlu0 %v3165
    %v3168 = vpop.xlane.xlu0 %3167
    %3169 = vadd.xlane.f32.xlu0 %v3166
    %v3170 = vpop.xlane.xlu0 %3169
    %v3171 = vcvt.f32.s32 %v3168
    %v3172 = vcvt.f32.s32 %v3170
    %v3173 = vshll.u32 %v3172, 16
    %v3174 = vadd.s32 %v3173, %v3171
    %v3175 = vadd.s32 %v3082, %v3083
    %v3176 = vand.u32 %v3175, 65535
    %v3177 = vshrl.u32 %v3175, 16
    %v3178 = vcvt.s32.f32 %v3176
    %v3179 = vcvt.s32.f32 %v3177
    %3180 = vadd.xlane.f32.xlu0 %v3178
    %v3181 = vpop.xlane.xlu0 %3180
    %3182 = vadd.xlane.f32.xlu0 %v3179
    %v3183 = vpop.xlane.xlu0 %3182
    %v3184 = vcvt.f32.s32 %v3181
    %v3185 = vcvt.f32.s32 %v3183
    %v3186 = vshll.u32 %v3185, 16
    %v3187 = vadd.s32 %v3186, %v3184
    %vm3188 = vcmp.le.s32.totalorder %v3096, 127
    %vm3189 = vcmp.le.s32.totalorder %v3109, 127
    %vm3190 = vcmp.le.s32.totalorder %v3122, 127
    %vm3191 = vcmp.le.s32.totalorder %v3135, 127
    %vm3192 = vcmp.le.s32.totalorder %v3148, 127
    %vm3193 = vcmp.le.s32.totalorder %v3161, 127
    %vm3194 = vcmp.le.s32.totalorder %v3174, 127
    %vm3195 = vcmp.le.s32.totalorder %v3187, 127
    %v3196 = vsel %vm3188, %v3044, %v3036
    %v3197 = vsel %vm3189, %v3045, %v3037
    %v3198 = vsel %vm3190, %v3046, %v3038
    %v3199 = vsel %vm3191, %v3047, %v3039
    %v3200 = vsel %vm3192, %v3048, %v3040
    %v3201 = vsel %vm3193, %v3049, %v3041
    %v3202 = vsel %vm3194, %v3050, %v3042
    %v3203 = vsel %vm3195, %v3051, %v3043
    %v3204 = vor.u32 %v3196, 4096
    %v3205 = vor.u32 %v3197, 4096
    %v3206 = vor.u32 %v3198, 4096
    %v3207 = vor.u32 %v3199, 4096
    %v3208 = vor.u32 %v3200, 4096
    %v3209 = vor.u32 %v3201, 4096
    %v3210 = vor.u32 %v3202, 4096
    %v3211 = vor.u32 %v3203, 4096
    %vm3212 = vcmp.lt.s32.totalorder %v156, %v3204
    %vm3213 = vcmp.lt.s32.totalorder %v157, %v3204
    %vm3214 = vcmp.lt.s32.totalorder %v158, %v3205
    %vm3215 = vcmp.lt.s32.totalorder %v159, %v3205
    %vm3216 = vcmp.lt.s32.totalorder %v160, %v3206
    %vm3217 = vcmp.lt.s32.totalorder %v161, %v3206
    %vm3218 = vcmp.lt.s32.totalorder %v162, %v3207
    %vm3219 = vcmp.lt.s32.totalorder %v163, %v3207
    %vm3220 = vcmp.lt.s32.totalorder %v164, %v3208
    %vm3221 = vcmp.lt.s32.totalorder %v165, %v3208
    %vm3222 = vcmp.lt.s32.totalorder %v166, %v3209
    %vm3223 = vcmp.lt.s32.totalorder %v167, %v3209
    %vm3224 = vcmp.lt.s32.totalorder %v168, %v3210
    %vm3225 = vcmp.lt.s32.totalorder %v169, %v3210
    %vm3226 = vcmp.lt.s32.totalorder %v170, %v3211
    %vm3227 = vcmp.lt.s32.totalorder %v171, %v3211
    %v3228 = vsel %vm3212, 1, 0
    %v3229 = vsel %vm3213, 1, 0
    %v3230 = vsel %vm3214, 1, 0
    %v3231 = vsel %vm3215, 1, 0
    %v3232 = vsel %vm3216, 1, 0
    %v3233 = vsel %vm3217, 1, 0
    %v3234 = vsel %vm3218, 1, 0
    %v3235 = vsel %vm3219, 1, 0
    %v3236 = vsel %vm3220, 1, 0
    %v3237 = vsel %vm3221, 1, 0
    %v3238 = vsel %vm3222, 1, 0
    %v3239 = vsel %vm3223, 1, 0
    %v3240 = vsel %vm3224, 1, 0
    %v3241 = vsel %vm3225, 1, 0
    %v3242 = vsel %vm3226, 1, 0
    %v3243 = vsel %vm3227, 1, 0
    %v3244 = vadd.s32 %v3228, %v3229
    %v3245 = vand.u32 %v3244, 65535
    %v3246 = vshrl.u32 %v3244, 16
    %v3247 = vcvt.s32.f32 %v3245
    %v3248 = vcvt.s32.f32 %v3246
    %3249 = vadd.xlane.f32.xlu0 %v3247
    %v3250 = vpop.xlane.xlu0 %3249
    %3251 = vadd.xlane.f32.xlu0 %v3248
    %v3252 = vpop.xlane.xlu0 %3251
    %v3253 = vcvt.f32.s32 %v3250
    %v3254 = vcvt.f32.s32 %v3252
    %v3255 = vshll.u32 %v3254, 16
    %v3256 = vadd.s32 %v3255, %v3253
    %v3257 = vadd.s32 %v3230, %v3231
    %v3258 = vand.u32 %v3257, 65535
    %v3259 = vshrl.u32 %v3257, 16
    %v3260 = vcvt.s32.f32 %v3258
    %v3261 = vcvt.s32.f32 %v3259
    %3262 = vadd.xlane.f32.xlu0 %v3260
    %v3263 = vpop.xlane.xlu0 %3262
    %3264 = vadd.xlane.f32.xlu0 %v3261
    %v3265 = vpop.xlane.xlu0 %3264
    %v3266 = vcvt.f32.s32 %v3263
    %v3267 = vcvt.f32.s32 %v3265
    %v3268 = vshll.u32 %v3267, 16
    %v3269 = vadd.s32 %v3268, %v3266
    %v3270 = vadd.s32 %v3232, %v3233
    %v3271 = vand.u32 %v3270, 65535
    %v3272 = vshrl.u32 %v3270, 16
    %v3273 = vcvt.s32.f32 %v3271
    %v3274 = vcvt.s32.f32 %v3272
    %3275 = vadd.xlane.f32.xlu0 %v3273
    %v3276 = vpop.xlane.xlu0 %3275
    %3277 = vadd.xlane.f32.xlu0 %v3274
    %v3278 = vpop.xlane.xlu0 %3277
    %v3279 = vcvt.f32.s32 %v3276
    %v3280 = vcvt.f32.s32 %v3278
    %v3281 = vshll.u32 %v3280, 16
    %v3282 = vadd.s32 %v3281, %v3279
    %v3283 = vadd.s32 %v3234, %v3235
    %v3284 = vand.u32 %v3283, 65535
    %v3285 = vshrl.u32 %v3283, 16
    %v3286 = vcvt.s32.f32 %v3284
    %v3287 = vcvt.s32.f32 %v3285
    %3288 = vadd.xlane.f32.xlu0 %v3286
    %v3289 = vpop.xlane.xlu0 %3288
    %3290 = vadd.xlane.f32.xlu0 %v3287
    %v3291 = vpop.xlane.xlu0 %3290
    %v3292 = vcvt.f32.s32 %v3289
    %v3293 = vcvt.f32.s32 %v3291
    %v3294 = vshll.u32 %v3293, 16
    %v3295 = vadd.s32 %v3294, %v3292
    %v3296 = vadd.s32 %v3236, %v3237
    %v3297 = vand.u32 %v3296, 65535
    %v3298 = vshrl.u32 %v3296, 16
    %v3299 = vcvt.s32.f32 %v3297
    %v3300 = vcvt.s32.f32 %v3298
    %3301 = vadd.xlane.f32.xlu0 %v3299
    %v3302 = vpop.xlane.xlu0 %3301
    %3303 = vadd.xlane.f32.xlu0 %v3300
    %v3304 = vpop.xlane.xlu0 %3303
    %v3305 = vcvt.f32.s32 %v3302
    %v3306 = vcvt.f32.s32 %v3304
    %v3307 = vshll.u32 %v3306, 16
    %v3308 = vadd.s32 %v3307, %v3305
    %v3309 = vadd.s32 %v3238, %v3239
    %v3310 = vand.u32 %v3309, 65535
    %v3311 = vshrl.u32 %v3309, 16
    %v3312 = vcvt.s32.f32 %v3310
    %v3313 = vcvt.s32.f32 %v3311
    %3314 = vadd.xlane.f32.xlu0 %v3312
    %v3315 = vpop.xlane.xlu0 %3314
    %3316 = vadd.xlane.f32.xlu0 %v3313
    %v3317 = vpop.xlane.xlu0 %3316
    %v3318 = vcvt.f32.s32 %v3315
    %v3319 = vcvt.f32.s32 %v3317
    %v3320 = vshll.u32 %v3319, 16
    %v3321 = vadd.s32 %v3320, %v3318
    %v3322 = vadd.s32 %v3240, %v3241
    %v3323 = vand.u32 %v3322, 65535
    %v3324 = vshrl.u32 %v3322, 16
    %v3325 = vcvt.s32.f32 %v3323
    %v3326 = vcvt.s32.f32 %v3324
    %3327 = vadd.xlane.f32.xlu0 %v3325
    %v3328 = vpop.xlane.xlu0 %3327
    %3329 = vadd.xlane.f32.xlu0 %v3326
    %v3330 = vpop.xlane.xlu0 %3329
    %v3331 = vcvt.f32.s32 %v3328
    %v3332 = vcvt.f32.s32 %v3330
    %v3333 = vshll.u32 %v3332, 16
    %v3334 = vadd.s32 %v3333, %v3331
    %v3335 = vadd.s32 %v3242, %v3243
    %v3336 = vand.u32 %v3335, 65535
    %v3337 = vshrl.u32 %v3335, 16
    %v3338 = vcvt.s32.f32 %v3336
    %v3339 = vcvt.s32.f32 %v3337
    %3340 = vadd.xlane.f32.xlu0 %v3338
    %v3341 = vpop.xlane.xlu0 %3340
    %3342 = vadd.xlane.f32.xlu0 %v3339
    %v3343 = vpop.xlane.xlu0 %3342
    %v3344 = vcvt.f32.s32 %v3341
    %v3345 = vcvt.f32.s32 %v3343
    %v3346 = vshll.u32 %v3345, 16
    %v3347 = vadd.s32 %v3346, %v3344
    %vm3348 = vcmp.le.s32.totalorder %v3256, 127
    %vm3349 = vcmp.le.s32.totalorder %v3269, 127
    %vm3350 = vcmp.le.s32.totalorder %v3282, 127
    %vm3351 = vcmp.le.s32.totalorder %v3295, 127
    %vm3352 = vcmp.le.s32.totalorder %v3308, 127
    %vm3353 = vcmp.le.s32.totalorder %v3321, 127
    %vm3354 = vcmp.le.s32.totalorder %v3334, 127
    %vm3355 = vcmp.le.s32.totalorder %v3347, 127
    %v3356 = vsel %vm3348, %v3204, %v3196
    %v3357 = vsel %vm3349, %v3205, %v3197
    %v3358 = vsel %vm3350, %v3206, %v3198
    %v3359 = vsel %vm3351, %v3207, %v3199
    %v3360 = vsel %vm3352, %v3208, %v3200
    %v3361 = vsel %vm3353, %v3209, %v3201
    %v3362 = vsel %vm3354, %v3210, %v3202
    %v3363 = vsel %vm3355, %v3211, %v3203
    %v3364 = vor.u32 %v3356, 2048
    %v3365 = vor.u32 %v3357, 2048
    %v3366 = vor.u32 %v3358, 2048
    %v3367 = vor.u32 %v3359, 2048
    %v3368 = vor.u32 %v3360, 2048
    %v3369 = vor.u32 %v3361, 2048
    %v3370 = vor.u32 %v3362, 2048
    %v3371 = vor.u32 %v3363, 2048
    %vm3372 = vcmp.lt.s32.totalorder %v156, %v3364
    %vm3373 = vcmp.lt.s32.totalorder %v157, %v3364
    %vm3374 = vcmp.lt.s32.totalorder %v158, %v3365
    %vm3375 = vcmp.lt.s32.totalorder %v159, %v3365
    %vm3376 = vcmp.lt.s32.totalorder %v160, %v3366
    %vm3377 = vcmp.lt.s32.totalorder %v161, %v3366
    %vm3378 = vcmp.lt.s32.totalorder %v162, %v3367
    %vm3379 = vcmp.lt.s32.totalorder %v163, %v3367
    %vm3380 = vcmp.lt.s32.totalorder %v164, %v3368
    %vm3381 = vcmp.lt.s32.totalorder %v165, %v3368
    %vm3382 = vcmp.lt.s32.totalorder %v166, %v3369
    %vm3383 = vcmp.lt.s32.totalorder %v167, %v3369
    %vm3384 = vcmp.lt.s32.totalorder %v168, %v3370
    %vm3385 = vcmp.lt.s32.totalorder %v169, %v3370
    %vm3386 = vcmp.lt.s32.totalorder %v170, %v3371
    %vm3387 = vcmp.lt.s32.totalorder %v171, %v3371
    %v3388 = vsel %vm3372, 1, 0
    %v3389 = vsel %vm3373, 1, 0
    %v3390 = vsel %vm3374, 1, 0
    %v3391 = vsel %vm3375, 1, 0
    %v3392 = vsel %vm3376, 1, 0
    %v3393 = vsel %vm3377, 1, 0
    %v3394 = vsel %vm3378, 1, 0
    %v3395 = vsel %vm3379, 1, 0
    %v3396 = vsel %vm3380, 1, 0
    %v3397 = vsel %vm3381, 1, 0
    %v3398 = vsel %vm3382, 1, 0
    %v3399 = vsel %vm3383, 1, 0
    %v3400 = vsel %vm3384, 1, 0
    %v3401 = vsel %vm3385, 1, 0
    %v3402 = vsel %vm3386, 1, 0
    %v3403 = vsel %vm3387, 1, 0
    %v3404 = vadd.s32 %v3388, %v3389
    %v3405 = vand.u32 %v3404, 65535
    %v3406 = vshrl.u32 %v3404, 16
    %v3407 = vcvt.s32.f32 %v3405
    %v3408 = vcvt.s32.f32 %v3406
    %3409 = vadd.xlane.f32.xlu0 %v3407
    %v3410 = vpop.xlane.xlu0 %3409
    %3411 = vadd.xlane.f32.xlu0 %v3408
    %v3412 = vpop.xlane.xlu0 %3411
    %v3413 = vcvt.f32.s32 %v3410
    %v3414 = vcvt.f32.s32 %v3412
    %v3415 = vshll.u32 %v3414, 16
    %v3416 = vadd.s32 %v3415, %v3413
    %v3417 = vadd.s32 %v3390, %v3391
    %v3418 = vand.u32 %v3417, 65535
    %v3419 = vshrl.u32 %v3417, 16
    %v3420 = vcvt.s32.f32 %v3418
    %v3421 = vcvt.s32.f32 %v3419
    %3422 = vadd.xlane.f32.xlu0 %v3420
    %v3423 = vpop.xlane.xlu0 %3422
    %3424 = vadd.xlane.f32.xlu0 %v3421
    %v3425 = vpop.xlane.xlu0 %3424
    %v3426 = vcvt.f32.s32 %v3423
    %v3427 = vcvt.f32.s32 %v3425
    %v3428 = vshll.u32 %v3427, 16
    %v3429 = vadd.s32 %v3428, %v3426
    %v3430 = vadd.s32 %v3392, %v3393
    %v3431 = vand.u32 %v3430, 65535
    %v3432 = vshrl.u32 %v3430, 16
    %v3433 = vcvt.s32.f32 %v3431
    %v3434 = vcvt.s32.f32 %v3432
    %3435 = vadd.xlane.f32.xlu0 %v3433
    %v3436 = vpop.xlane.xlu0 %3435
    %3437 = vadd.xlane.f32.xlu0 %v3434
    %v3438 = vpop.xlane.xlu0 %3437
    %v3439 = vcvt.f32.s32 %v3436
    %v3440 = vcvt.f32.s32 %v3438
    %v3441 = vshll.u32 %v3440, 16
    %v3442 = vadd.s32 %v3441, %v3439
    %v3443 = vadd.s32 %v3394, %v3395
    %v3444 = vand.u32 %v3443, 65535
    %v3445 = vshrl.u32 %v3443, 16
    %v3446 = vcvt.s32.f32 %v3444
    %v3447 = vcvt.s32.f32 %v3445
    %3448 = vadd.xlane.f32.xlu0 %v3446
    %v3449 = vpop.xlane.xlu0 %3448
    %3450 = vadd.xlane.f32.xlu0 %v3447
    %v3451 = vpop.xlane.xlu0 %3450
    %v3452 = vcvt.f32.s32 %v3449
    %v3453 = vcvt.f32.s32 %v3451
    %v3454 = vshll.u32 %v3453, 16
    %v3455 = vadd.s32 %v3454, %v3452
    %v3456 = vadd.s32 %v3396, %v3397
    %v3457 = vand.u32 %v3456, 65535
    %v3458 = vshrl.u32 %v3456, 16
    %v3459 = vcvt.s32.f32 %v3457
    %v3460 = vcvt.s32.f32 %v3458
    %3461 = vadd.xlane.f32.xlu0 %v3459
    %v3462 = vpop.xlane.xlu0 %3461
    %3463 = vadd.xlane.f32.xlu0 %v3460
    %v3464 = vpop.xlane.xlu0 %3463
    %v3465 = vcvt.f32.s32 %v3462
    %v3466 = vcvt.f32.s32 %v3464
    %v3467 = vshll.u32 %v3466, 16
    %v3468 = vadd.s32 %v3467, %v3465
    %v3469 = vadd.s32 %v3398, %v3399
    %v3470 = vand.u32 %v3469, 65535
    %v3471 = vshrl.u32 %v3469, 16
    %v3472 = vcvt.s32.f32 %v3470
    %v3473 = vcvt.s32.f32 %v3471
    %3474 = vadd.xlane.f32.xlu0 %v3472
    %v3475 = vpop.xlane.xlu0 %3474
    %3476 = vadd.xlane.f32.xlu0 %v3473
    %v3477 = vpop.xlane.xlu0 %3476
    %v3478 = vcvt.f32.s32 %v3475
    %v3479 = vcvt.f32.s32 %v3477
    %v3480 = vshll.u32 %v3479, 16
    %v3481 = vadd.s32 %v3480, %v3478
    %v3482 = vadd.s32 %v3400, %v3401
    %v3483 = vand.u32 %v3482, 65535
    %v3484 = vshrl.u32 %v3482, 16
    %v3485 = vcvt.s32.f32 %v3483
    %v3486 = vcvt.s32.f32 %v3484
    %3487 = vadd.xlane.f32.xlu0 %v3485
    %v3488 = vpop.xlane.xlu0 %3487
    %3489 = vadd.xlane.f32.xlu0 %v3486
    %v3490 = vpop.xlane.xlu0 %3489
    %v3491 = vcvt.f32.s32 %v3488
    %v3492 = vcvt.f32.s32 %v3490
    %v3493 = vshll.u32 %v3492, 16
    %v3494 = vadd.s32 %v3493, %v3491
    %v3495 = vadd.s32 %v3402, %v3403
    %v3496 = vand.u32 %v3495, 65535
    %v3497 = vshrl.u32 %v3495, 16
    %v3498 = vcvt.s32.f32 %v3496
    %v3499 = vcvt.s32.f32 %v3497
    %3500 = vadd.xlane.f32.xlu0 %v3498
    %v3501 = vpop.xlane.xlu0 %3500
    %3502 = vadd.xlane.f32.xlu0 %v3499
    %v3503 = vpop.xlane.xlu0 %3502
    %v3504 = vcvt.f32.s32 %v3501
    %v3505 = vcvt.f32.s32 %v3503
    %v3506 = vshll.u32 %v3505, 16
    %v3507 = vadd.s32 %v3506, %v3504
    %vm3508 = vcmp.le.s32.totalorder %v3416, 127
    %vm3509 = vcmp.le.s32.totalorder %v3429, 127
    %vm3510 = vcmp.le.s32.totalorder %v3442, 127
    %vm3511 = vcmp.le.s32.totalorder %v3455, 127
    %vm3512 = vcmp.le.s32.totalorder %v3468, 127
    %vm3513 = vcmp.le.s32.totalorder %v3481, 127
    %vm3514 = vcmp.le.s32.totalorder %v3494, 127
    %vm3515 = vcmp.le.s32.totalorder %v3507, 127
    %v3516 = vsel %vm3508, %v3364, %v3356
    %v3517 = vsel %vm3509, %v3365, %v3357
    %v3518 = vsel %vm3510, %v3366, %v3358
    %v3519 = vsel %vm3511, %v3367, %v3359
    %v3520 = vsel %vm3512, %v3368, %v3360
    %v3521 = vsel %vm3513, %v3369, %v3361
    %v3522 = vsel %vm3514, %v3370, %v3362
    %v3523 = vsel %vm3515, %v3371, %v3363
    %v3524 = vor.u32 %v3516, 1024
    %v3525 = vor.u32 %v3517, 1024
    %v3526 = vor.u32 %v3518, 1024
    %v3527 = vor.u32 %v3519, 1024
    %v3528 = vor.u32 %v3520, 1024
    %v3529 = vor.u32 %v3521, 1024
    %v3530 = vor.u32 %v3522, 1024
    %v3531 = vor.u32 %v3523, 1024
    %vm3532 = vcmp.lt.s32.totalorder %v156, %v3524
    %vm3533 = vcmp.lt.s32.totalorder %v157, %v3524
    %vm3534 = vcmp.lt.s32.totalorder %v158, %v3525
    %vm3535 = vcmp.lt.s32.totalorder %v159, %v3525
    %vm3536 = vcmp.lt.s32.totalorder %v160, %v3526
    %vm3537 = vcmp.lt.s32.totalorder %v161, %v3526
    %vm3538 = vcmp.lt.s32.totalorder %v162, %v3527
    %vm3539 = vcmp.lt.s32.totalorder %v163, %v3527
    %vm3540 = vcmp.lt.s32.totalorder %v164, %v3528
    %vm3541 = vcmp.lt.s32.totalorder %v165, %v3528
    %vm3542 = vcmp.lt.s32.totalorder %v166, %v3529
    %vm3543 = vcmp.lt.s32.totalorder %v167, %v3529
    %vm3544 = vcmp.lt.s32.totalorder %v168, %v3530
    %vm3545 = vcmp.lt.s32.totalorder %v169, %v3530
    %vm3546 = vcmp.lt.s32.totalorder %v170, %v3531
    %vm3547 = vcmp.lt.s32.totalorder %v171, %v3531
    %v3548 = vsel %vm3532, 1, 0
    %v3549 = vsel %vm3533, 1, 0
    %v3550 = vsel %vm3534, 1, 0
    %v3551 = vsel %vm3535, 1, 0
    %v3552 = vsel %vm3536, 1, 0
    %v3553 = vsel %vm3537, 1, 0
    %v3554 = vsel %vm3538, 1, 0
    %v3555 = vsel %vm3539, 1, 0
    %v3556 = vsel %vm3540, 1, 0
    %v3557 = vsel %vm3541, 1, 0
    %v3558 = vsel %vm3542, 1, 0
    %v3559 = vsel %vm3543, 1, 0
    %v3560 = vsel %vm3544, 1, 0
    %v3561 = vsel %vm3545, 1, 0
    %v3562 = vsel %vm3546, 1, 0
    %v3563 = vsel %vm3547, 1, 0
    %v3564 = vadd.s32 %v3548, %v3549
    %v3565 = vand.u32 %v3564, 65535
    %v3566 = vshrl.u32 %v3564, 16
    %v3567 = vcvt.s32.f32 %v3565
    %v3568 = vcvt.s32.f32 %v3566
    %3569 = vadd.xlane.f32.xlu0 %v3567
    %v3570 = vpop.xlane.xlu0 %3569
    %3571 = vadd.xlane.f32.xlu0 %v3568
    %v3572 = vpop.xlane.xlu0 %3571
    %v3573 = vcvt.f32.s32 %v3570
    %v3574 = vcvt.f32.s32 %v3572
    %v3575 = vshll.u32 %v3574, 16
    %v3576 = vadd.s32 %v3575, %v3573
    %v3577 = vadd.s32 %v3550, %v3551
    %v3578 = vand.u32 %v3577, 65535
    %v3579 = vshrl.u32 %v3577, 16
    %v3580 = vcvt.s32.f32 %v3578
    %v3581 = vcvt.s32.f32 %v3579
    %3582 = vadd.xlane.f32.xlu0 %v3580
    %v3583 = vpop.xlane.xlu0 %3582
    %3584 = vadd.xlane.f32.xlu0 %v3581
    %v3585 = vpop.xlane.xlu0 %3584
    %v3586 = vcvt.f32.s32 %v3583
    %v3587 = vcvt.f32.s32 %v3585
    %v3588 = vshll.u32 %v3587, 16
    %v3589 = vadd.s32 %v3588, %v3586
    %v3590 = vadd.s32 %v3552, %v3553
    %v3591 = vand.u32 %v3590, 65535
    %v3592 = vshrl.u32 %v3590, 16
    %v3593 = vcvt.s32.f32 %v3591
    %v3594 = vcvt.s32.f32 %v3592
    %3595 = vadd.xlane.f32.xlu0 %v3593
    %v3596 = vpop.xlane.xlu0 %3595
    %3597 = vadd.xlane.f32.xlu0 %v3594
    %v3598 = vpop.xlane.xlu0 %3597
    %v3599 = vcvt.f32.s32 %v3596
    %v3600 = vcvt.f32.s32 %v3598
    %v3601 = vshll.u32 %v3600, 16
    %v3602 = vadd.s32 %v3601, %v3599
    %v3603 = vadd.s32 %v3554, %v3555
    %v3604 = vand.u32 %v3603, 65535
    %v3605 = vshrl.u32 %v3603, 16
    %v3606 = vcvt.s32.f32 %v3604
    %v3607 = vcvt.s32.f32 %v3605
    %3608 = vadd.xlane.f32.xlu0 %v3606
    %v3609 = vpop.xlane.xlu0 %3608
    %3610 = vadd.xlane.f32.xlu0 %v3607
    %v3611 = vpop.xlane.xlu0 %3610
    %v3612 = vcvt.f32.s32 %v3609
    %v3613 = vcvt.f32.s32 %v3611
    %v3614 = vshll.u32 %v3613, 16
    %v3615 = vadd.s32 %v3614, %v3612
    %v3616 = vadd.s32 %v3556, %v3557
    %v3617 = vand.u32 %v3616, 65535
    %v3618 = vshrl.u32 %v3616, 16
    %v3619 = vcvt.s32.f32 %v3617
    %v3620 = vcvt.s32.f32 %v3618
    %3621 = vadd.xlane.f32.xlu0 %v3619
    %v3622 = vpop.xlane.xlu0 %3621
    %3623 = vadd.xlane.f32.xlu0 %v3620
    %v3624 = vpop.xlane.xlu0 %3623
    %v3625 = vcvt.f32.s32 %v3622
    %v3626 = vcvt.f32.s32 %v3624
    %v3627 = vshll.u32 %v3626, 16
    %v3628 = vadd.s32 %v3627, %v3625
    %v3629 = vadd.s32 %v3558, %v3559
    %v3630 = vand.u32 %v3629, 65535
    %v3631 = vshrl.u32 %v3629, 16
    %v3632 = vcvt.s32.f32 %v3630
    %v3633 = vcvt.s32.f32 %v3631
    %3634 = vadd.xlane.f32.xlu0 %v3632
    %v3635 = vpop.xlane.xlu0 %3634
    %3636 = vadd.xlane.f32.xlu0 %v3633
    %v3637 = vpop.xlane.xlu0 %3636
    %v3638 = vcvt.f32.s32 %v3635
    %v3639 = vcvt.f32.s32 %v3637
    %v3640 = vshll.u32 %v3639, 16
    %v3641 = vadd.s32 %v3640, %v3638
    %v3642 = vadd.s32 %v3560, %v3561
    %v3643 = vand.u32 %v3642, 65535
    %v3644 = vshrl.u32 %v3642, 16
    %v3645 = vcvt.s32.f32 %v3643
    %v3646 = vcvt.s32.f32 %v3644
    %3647 = vadd.xlane.f32.xlu0 %v3645
    %v3648 = vpop.xlane.xlu0 %3647
    %3649 = vadd.xlane.f32.xlu0 %v3646
    %v3650 = vpop.xlane.xlu0 %3649
    %v3651 = vcvt.f32.s32 %v3648
    %v3652 = vcvt.f32.s32 %v3650
    %v3653 = vshll.u32 %v3652, 16
    %v3654 = vadd.s32 %v3653, %v3651
    %v3655 = vadd.s32 %v3562, %v3563
    %v3656 = vand.u32 %v3655, 65535
    %v3657 = vshrl.u32 %v3655, 16
    %v3658 = vcvt.s32.f32 %v3656
    %v3659 = vcvt.s32.f32 %v3657
    %3660 = vadd.xlane.f32.xlu0 %v3658
    %v3661 = vpop.xlane.xlu0 %3660
    %3662 = vadd.xlane.f32.xlu0 %v3659
    %v3663 = vpop.xlane.xlu0 %3662
    %v3664 = vcvt.f32.s32 %v3661
    %v3665 = vcvt.f32.s32 %v3663
    %v3666 = vshll.u32 %v3665, 16
    %v3667 = vadd.s32 %v3666, %v3664
    %vm3668 = vcmp.le.s32.totalorder %v3576, 127
    %vm3669 = vcmp.le.s32.totalorder %v3589, 127
    %vm3670 = vcmp.le.s32.totalorder %v3602, 127
    %vm3671 = vcmp.le.s32.totalorder %v3615, 127
    %vm3672 = vcmp.le.s32.totalorder %v3628, 127
    %vm3673 = vcmp.le.s32.totalorder %v3641, 127
    %vm3674 = vcmp.le.s32.totalorder %v3654, 127
    %vm3675 = vcmp.le.s32.totalorder %v3667, 127
    %v3676 = vsel %vm3668, %v3524, %v3516
    %v3677 = vsel %vm3669, %v3525, %v3517
    %v3678 = vsel %vm3670, %v3526, %v3518
    %v3679 = vsel %vm3671, %v3527, %v3519
    %v3680 = vsel %vm3672, %v3528, %v3520
    %v3681 = vsel %vm3673, %v3529, %v3521
    %v3682 = vsel %vm3674, %v3530, %v3522
    %v3683 = vsel %vm3675, %v3531, %v3523
    %v3684 = vor.u32 %v3676, 512
    %v3685 = vor.u32 %v3677, 512
    %v3686 = vor.u32 %v3678, 512
    %v3687 = vor.u32 %v3679, 512
    %v3688 = vor.u32 %v3680, 512
    %v3689 = vor.u32 %v3681, 512
    %v3690 = vor.u32 %v3682, 512
    %v3691 = vor.u32 %v3683, 512
    %vm3692 = vcmp.lt.s32.totalorder %v156, %v3684
    %vm3693 = vcmp.lt.s32.totalorder %v157, %v3684
    %vm3694 = vcmp.lt.s32.totalorder %v158, %v3685
    %vm3695 = vcmp.lt.s32.totalorder %v159, %v3685
    %vm3696 = vcmp.lt.s32.totalorder %v160, %v3686
    %vm3697 = vcmp.lt.s32.totalorder %v161, %v3686
    %vm3698 = vcmp.lt.s32.totalorder %v162, %v3687
    %vm3699 = vcmp.lt.s32.totalorder %v163, %v3687
    %vm3700 = vcmp.lt.s32.totalorder %v164, %v3688
    %vm3701 = vcmp.lt.s32.totalorder %v165, %v3688
    %vm3702 = vcmp.lt.s32.totalorder %v166, %v3689
    %vm3703 = vcmp.lt.s32.totalorder %v167, %v3689
    %vm3704 = vcmp.lt.s32.totalorder %v168, %v3690
    %vm3705 = vcmp.lt.s32.totalorder %v169, %v3690
    %vm3706 = vcmp.lt.s32.totalorder %v170, %v3691
    %vm3707 = vcmp.lt.s32.totalorder %v171, %v3691
    %v3708 = vsel %vm3692, 1, 0
    %v3709 = vsel %vm3693, 1, 0
    %v3710 = vsel %vm3694, 1, 0
    %v3711 = vsel %vm3695, 1, 0
    %v3712 = vsel %vm3696, 1, 0
    %v3713 = vsel %vm3697, 1, 0
    %v3714 = vsel %vm3698, 1, 0
    %v3715 = vsel %vm3699, 1, 0
    %v3716 = vsel %vm3700, 1, 0
    %v3717 = vsel %vm3701, 1, 0
    %v3718 = vsel %vm3702, 1, 0
    %v3719 = vsel %vm3703, 1, 0
    %v3720 = vsel %vm3704, 1, 0
    %v3721 = vsel %vm3705, 1, 0
    %v3722 = vsel %vm3706, 1, 0
    %v3723 = vsel %vm3707, 1, 0
    %v3724 = vadd.s32 %v3708, %v3709
    %v3725 = vand.u32 %v3724, 65535
    %v3726 = vshrl.u32 %v3724, 16
    %v3727 = vcvt.s32.f32 %v3725
    %v3728 = vcvt.s32.f32 %v3726
    %3729 = vadd.xlane.f32.xlu0 %v3727
    %v3730 = vpop.xlane.xlu0 %3729
    %3731 = vadd.xlane.f32.xlu0 %v3728
    %v3732 = vpop.xlane.xlu0 %3731
    %v3733 = vcvt.f32.s32 %v3730
    %v3734 = vcvt.f32.s32 %v3732
    %v3735 = vshll.u32 %v3734, 16
    %v3736 = vadd.s32 %v3735, %v3733
    %v3737 = vadd.s32 %v3710, %v3711
    %v3738 = vand.u32 %v3737, 65535
    %v3739 = vshrl.u32 %v3737, 16
    %v3740 = vcvt.s32.f32 %v3738
    %v3741 = vcvt.s32.f32 %v3739
    %3742 = vadd.xlane.f32.xlu0 %v3740
    %v3743 = vpop.xlane.xlu0 %3742
    %3744 = vadd.xlane.f32.xlu0 %v3741
    %v3745 = vpop.xlane.xlu0 %3744
    %v3746 = vcvt.f32.s32 %v3743
    %v3747 = vcvt.f32.s32 %v3745
    %v3748 = vshll.u32 %v3747, 16
    %v3749 = vadd.s32 %v3748, %v3746
    %v3750 = vadd.s32 %v3712, %v3713
    %v3751 = vand.u32 %v3750, 65535
    %v3752 = vshrl.u32 %v3750, 16
    %v3753 = vcvt.s32.f32 %v3751
    %v3754 = vcvt.s32.f32 %v3752
    %3755 = vadd.xlane.f32.xlu0 %v3753
    %v3756 = vpop.xlane.xlu0 %3755
    %3757 = vadd.xlane.f32.xlu0 %v3754
    %v3758 = vpop.xlane.xlu0 %3757
    %v3759 = vcvt.f32.s32 %v3756
    %v3760 = vcvt.f32.s32 %v3758
    %v3761 = vshll.u32 %v3760, 16
    %v3762 = vadd.s32 %v3761, %v3759
    %v3763 = vadd.s32 %v3714, %v3715
    %v3764 = vand.u32 %v3763, 65535
    %v3765 = vshrl.u32 %v3763, 16
    %v3766 = vcvt.s32.f32 %v3764
    %v3767 = vcvt.s32.f32 %v3765
    %3768 = vadd.xlane.f32.xlu0 %v3766
    %v3769 = vpop.xlane.xlu0 %3768
    %3770 = vadd.xlane.f32.xlu0 %v3767
    %v3771 = vpop.xlane.xlu0 %3770
    %v3772 = vcvt.f32.s32 %v3769
    %v3773 = vcvt.f32.s32 %v3771
    %v3774 = vshll.u32 %v3773, 16
    %v3775 = vadd.s32 %v3774, %v3772
    %v3776 = vadd.s32 %v3716, %v3717
    %v3777 = vand.u32 %v3776, 65535
    %v3778 = vshrl.u32 %v3776, 16
    %v3779 = vcvt.s32.f32 %v3777
    %v3780 = vcvt.s32.f32 %v3778
    %3781 = vadd.xlane.f32.xlu0 %v3779
    %v3782 = vpop.xlane.xlu0 %3781
    %3783 = vadd.xlane.f32.xlu0 %v3780
    %v3784 = vpop.xlane.xlu0 %3783
    %v3785 = vcvt.f32.s32 %v3782
    %v3786 = vcvt.f32.s32 %v3784
    %v3787 = vshll.u32 %v3786, 16
    %v3788 = vadd.s32 %v3787, %v3785
    %v3789 = vadd.s32 %v3718, %v3719
    %v3790 = vand.u32 %v3789, 65535
    %v3791 = vshrl.u32 %v3789, 16
    %v3792 = vcvt.s32.f32 %v3790
    %v3793 = vcvt.s32.f32 %v3791
    %3794 = vadd.xlane.f32.xlu0 %v3792
    %v3795 = vpop.xlane.xlu0 %3794
    %3796 = vadd.xlane.f32.xlu0 %v3793
    %v3797 = vpop.xlane.xlu0 %3796
    %v3798 = vcvt.f32.s32 %v3795
    %v3799 = vcvt.f32.s32 %v3797
    %v3800 = vshll.u32 %v3799, 16
    %v3801 = vadd.s32 %v3800, %v3798
    %v3802 = vadd.s32 %v3720, %v3721
    %v3803 = vand.u32 %v3802, 65535
    %v3804 = vshrl.u32 %v3802, 16
    %v3805 = vcvt.s32.f32 %v3803
    %v3806 = vcvt.s32.f32 %v3804
    %3807 = vadd.xlane.f32.xlu0 %v3805
    %v3808 = vpop.xlane.xlu0 %3807
    %3809 = vadd.xlane.f32.xlu0 %v3806
    %v3810 = vpop.xlane.xlu0 %3809
    %v3811 = vcvt.f32.s32 %v3808
    %v3812 = vcvt.f32.s32 %v3810
    %v3813 = vshll.u32 %v3812, 16
    %v3814 = vadd.s32 %v3813, %v3811
    %v3815 = vadd.s32 %v3722, %v3723
    %v3816 = vand.u32 %v3815, 65535
    %v3817 = vshrl.u32 %v3815, 16
    %v3818 = vcvt.s32.f32 %v3816
    %v3819 = vcvt.s32.f32 %v3817
    %3820 = vadd.xlane.f32.xlu0 %v3818
    %v3821 = vpop.xlane.xlu0 %3820
    %3822 = vadd.xlane.f32.xlu0 %v3819
    %v3823 = vpop.xlane.xlu0 %3822
    %v3824 = vcvt.f32.s32 %v3821
    %v3825 = vcvt.f32.s32 %v3823
    %v3826 = vshll.u32 %v3825, 16
    %v3827 = vadd.s32 %v3826, %v3824
    %vm3828 = vcmp.le.s32.totalorder %v3736, 127
    %vm3829 = vcmp.le.s32.totalorder %v3749, 127
    %vm3830 = vcmp.le.s32.totalorder %v3762, 127
    %vm3831 = vcmp.le.s32.totalorder %v3775, 127
    %vm3832 = vcmp.le.s32.totalorder %v3788, 127
    %vm3833 = vcmp.le.s32.totalorder %v3801, 127
    %vm3834 = vcmp.le.s32.totalorder %v3814, 127
    %vm3835 = vcmp.le.s32.totalorder %v3827, 127
    %v3836 = vsel %vm3828, %v3684, %v3676
    %v3837 = vsel %vm3829, %v3685, %v3677
    %v3838 = vsel %vm3830, %v3686, %v3678
    %v3839 = vsel %vm3831, %v3687, %v3679
    %v3840 = vsel %vm3832, %v3688, %v3680
    %v3841 = vsel %vm3833, %v3689, %v3681
    %v3842 = vsel %vm3834, %v3690, %v3682
    %v3843 = vsel %vm3835, %v3691, %v3683
    %v3844 = vor.u32 %v3836, 256
    %v3845 = vor.u32 %v3837, 256
    %v3846 = vor.u32 %v3838, 256
    %v3847 = vor.u32 %v3839, 256
    %v3848 = vor.u32 %v3840, 256
    %v3849 = vor.u32 %v3841, 256
    %v3850 = vor.u32 %v3842, 256
    %v3851 = vor.u32 %v3843, 256
    %vm3852 = vcmp.lt.s32.totalorder %v156, %v3844
    %vm3853 = vcmp.lt.s32.totalorder %v157, %v3844
    %vm3854 = vcmp.lt.s32.totalorder %v158, %v3845
    %vm3855 = vcmp.lt.s32.totalorder %v159, %v3845
    %vm3856 = vcmp.lt.s32.totalorder %v160, %v3846
    %vm3857 = vcmp.lt.s32.totalorder %v161, %v3846
    %vm3858 = vcmp.lt.s32.totalorder %v162, %v3847
    %vm3859 = vcmp.lt.s32.totalorder %v163, %v3847
    %vm3860 = vcmp.lt.s32.totalorder %v164, %v3848
    %vm3861 = vcmp.lt.s32.totalorder %v165, %v3848
    %vm3862 = vcmp.lt.s32.totalorder %v166, %v3849
    %vm3863 = vcmp.lt.s32.totalorder %v167, %v3849
    %vm3864 = vcmp.lt.s32.totalorder %v168, %v3850
    %vm3865 = vcmp.lt.s32.totalorder %v169, %v3850
    %vm3866 = vcmp.lt.s32.totalorder %v170, %v3851
    %vm3867 = vcmp.lt.s32.totalorder %v171, %v3851
    %v3868 = vsel %vm3852, 1, 0
    %v3869 = vsel %vm3853, 1, 0
    %v3870 = vsel %vm3854, 1, 0
    %v3871 = vsel %vm3855, 1, 0
    %v3872 = vsel %vm3856, 1, 0
    %v3873 = vsel %vm3857, 1, 0
    %v3874 = vsel %vm3858, 1, 0
    %v3875 = vsel %vm3859, 1, 0
    %v3876 = vsel %vm3860, 1, 0
    %v3877 = vsel %vm3861, 1, 0
    %v3878 = vsel %vm3862, 1, 0
    %v3879 = vsel %vm3863, 1, 0
    %v3880 = vsel %vm3864, 1, 0
    %v3881 = vsel %vm3865, 1, 0
    %v3882 = vsel %vm3866, 1, 0
    %v3883 = vsel %vm3867, 1, 0
    %v3884 = vadd.s32 %v3868, %v3869
    %v3885 = vand.u32 %v3884, 65535
    %v3886 = vshrl.u32 %v3884, 16
    %v3887 = vcvt.s32.f32 %v3885
    %v3888 = vcvt.s32.f32 %v3886
    %3889 = vadd.xlane.f32.xlu0 %v3887
    %v3890 = vpop.xlane.xlu0 %3889
    %3891 = vadd.xlane.f32.xlu0 %v3888
    %v3892 = vpop.xlane.xlu0 %3891
    %v3893 = vcvt.f32.s32 %v3890
    %v3894 = vcvt.f32.s32 %v3892
    %v3895 = vshll.u32 %v3894, 16
    %v3896 = vadd.s32 %v3895, %v3893
    %v3897 = vadd.s32 %v3870, %v3871
    %v3898 = vand.u32 %v3897, 65535
    %v3899 = vshrl.u32 %v3897, 16
    %v3900 = vcvt.s32.f32 %v3898
    %v3901 = vcvt.s32.f32 %v3899
    %3902 = vadd.xlane.f32.xlu0 %v3900
    %v3903 = vpop.xlane.xlu0 %3902
    %3904 = vadd.xlane.f32.xlu0 %v3901
    %v3905 = vpop.xlane.xlu0 %3904
    %v3906 = vcvt.f32.s32 %v3903
    %v3907 = vcvt.f32.s32 %v3905
    %v3908 = vshll.u32 %v3907, 16
    %v3909 = vadd.s32 %v3908, %v3906
    %v3910 = vadd.s32 %v3872, %v3873
    %v3911 = vand.u32 %v3910, 65535
    %v3912 = vshrl.u32 %v3910, 16
    %v3913 = vcvt.s32.f32 %v3911
    %v3914 = vcvt.s32.f32 %v3912
    %3915 = vadd.xlane.f32.xlu0 %v3913
    %v3916 = vpop.xlane.xlu0 %3915
    %3917 = vadd.xlane.f32.xlu0 %v3914
    %v3918 = vpop.xlane.xlu0 %3917
    %v3919 = vcvt.f32.s32 %v3916
    %v3920 = vcvt.f32.s32 %v3918
    %v3921 = vshll.u32 %v3920, 16
    %v3922 = vadd.s32 %v3921, %v3919
    %v3923 = vadd.s32 %v3874, %v3875
    %v3924 = vand.u32 %v3923, 65535
    %v3925 = vshrl.u32 %v3923, 16
    %v3926 = vcvt.s32.f32 %v3924
    %v3927 = vcvt.s32.f32 %v3925
    %3928 = vadd.xlane.f32.xlu0 %v3926
    %v3929 = vpop.xlane.xlu0 %3928
    %3930 = vadd.xlane.f32.xlu0 %v3927
    %v3931 = vpop.xlane.xlu0 %3930
    %v3932 = vcvt.f32.s32 %v3929
    %v3933 = vcvt.f32.s32 %v3931
    %v3934 = vshll.u32 %v3933, 16
    %v3935 = vadd.s32 %v3934, %v3932
    %v3936 = vadd.s32 %v3876, %v3877
    %v3937 = vand.u32 %v3936, 65535
    %v3938 = vshrl.u32 %v3936, 16
    %v3939 = vcvt.s32.f32 %v3937
    %v3940 = vcvt.s32.f32 %v3938
    %3941 = vadd.xlane.f32.xlu0 %v3939
    %v3942 = vpop.xlane.xlu0 %3941
    %3943 = vadd.xlane.f32.xlu0 %v3940
    %v3944 = vpop.xlane.xlu0 %3943
    %v3945 = vcvt.f32.s32 %v3942
    %v3946 = vcvt.f32.s32 %v3944
    %v3947 = vshll.u32 %v3946, 16
    %v3948 = vadd.s32 %v3947, %v3945
    %v3949 = vadd.s32 %v3878, %v3879
    %v3950 = vand.u32 %v3949, 65535
    %v3951 = vshrl.u32 %v3949, 16
    %v3952 = vcvt.s32.f32 %v3950
    %v3953 = vcvt.s32.f32 %v3951
    %3954 = vadd.xlane.f32.xlu0 %v3952
    %v3955 = vpop.xlane.xlu0 %3954
    %3956 = vadd.xlane.f32.xlu0 %v3953
    %v3957 = vpop.xlane.xlu0 %3956
    %v3958 = vcvt.f32.s32 %v3955
    %v3959 = vcvt.f32.s32 %v3957
    %v3960 = vshll.u32 %v3959, 16
    %v3961 = vadd.s32 %v3960, %v3958
    %v3962 = vadd.s32 %v3880, %v3881
    %v3963 = vand.u32 %v3962, 65535
    %v3964 = vshrl.u32 %v3962, 16
    %v3965 = vcvt.s32.f32 %v3963
    %v3966 = vcvt.s32.f32 %v3964
    %3967 = vadd.xlane.f32.xlu0 %v3965
    %v3968 = vpop.xlane.xlu0 %3967
    %3969 = vadd.xlane.f32.xlu0 %v3966
    %v3970 = vpop.xlane.xlu0 %3969
    %v3971 = vcvt.f32.s32 %v3968
    %v3972 = vcvt.f32.s32 %v3970
    %v3973 = vshll.u32 %v3972, 16
    %v3974 = vadd.s32 %v3973, %v3971
    %v3975 = vadd.s32 %v3882, %v3883
    %v3976 = vand.u32 %v3975, 65535
    %v3977 = vshrl.u32 %v3975, 16
    %v3978 = vcvt.s32.f32 %v3976
    %v3979 = vcvt.s32.f32 %v3977
    %3980 = vadd.xlane.f32.xlu0 %v3978
    %v3981 = vpop.xlane.xlu0 %3980
    %3982 = vadd.xlane.f32.xlu0 %v3979
    %v3983 = vpop.xlane.xlu0 %3982
    %v3984 = vcvt.f32.s32 %v3981
    %v3985 = vcvt.f32.s32 %v3983
    %v3986 = vshll.u32 %v3985, 16
    %v3987 = vadd.s32 %v3986, %v3984
    %vm3988 = vcmp.le.s32.totalorder %v3896, 127
    %vm3989 = vcmp.le.s32.totalorder %v3909, 127
    %vm3990 = vcmp.le.s32.totalorder %v3922, 127
    %vm3991 = vcmp.le.s32.totalorder %v3935, 127
    %vm3992 = vcmp.le.s32.totalorder %v3948, 127
    %vm3993 = vcmp.le.s32.totalorder %v3961, 127
    %vm3994 = vcmp.le.s32.totalorder %v3974, 127
    %vm3995 = vcmp.le.s32.totalorder %v3987, 127
    %v3996 = vsel %vm3988, %v3844, %v3836
    %v3997 = vsel %vm3989, %v3845, %v3837
    %v3998 = vsel %vm3990, %v3846, %v3838
    %v3999 = vsel %vm3991, %v3847, %v3839
    %v4000 = vsel %vm3992, %v3848, %v3840
    %v4001 = vsel %vm3993, %v3849, %v3841
    %v4002 = vsel %vm3994, %v3850, %v3842
    %v4003 = vsel %vm3995, %v3851, %v3843
    %v4004 = vor.u32 %v3996, 128
    %v4005 = vor.u32 %v3997, 128
    %v4006 = vor.u32 %v3998, 128
    %v4007 = vor.u32 %v3999, 128
    %v4008 = vor.u32 %v4000, 128
    %v4009 = vor.u32 %v4001, 128
    %v4010 = vor.u32 %v4002, 128
    %v4011 = vor.u32 %v4003, 128
    %vm4012 = vcmp.lt.s32.totalorder %v156, %v4004
    %vm4013 = vcmp.lt.s32.totalorder %v157, %v4004
    %vm4014 = vcmp.lt.s32.totalorder %v158, %v4005
    %vm4015 = vcmp.lt.s32.totalorder %v159, %v4005
    %vm4016 = vcmp.lt.s32.totalorder %v160, %v4006
    %vm4017 = vcmp.lt.s32.totalorder %v161, %v4006
    %vm4018 = vcmp.lt.s32.totalorder %v162, %v4007
    %vm4019 = vcmp.lt.s32.totalorder %v163, %v4007
    %vm4020 = vcmp.lt.s32.totalorder %v164, %v4008
    %vm4021 = vcmp.lt.s32.totalorder %v165, %v4008
    %vm4022 = vcmp.lt.s32.totalorder %v166, %v4009
    %vm4023 = vcmp.lt.s32.totalorder %v167, %v4009
    %vm4024 = vcmp.lt.s32.totalorder %v168, %v4010
    %vm4025 = vcmp.lt.s32.totalorder %v169, %v4010
    %vm4026 = vcmp.lt.s32.totalorder %v170, %v4011
    %vm4027 = vcmp.lt.s32.totalorder %v171, %v4011
    %v4028 = vsel %vm4012, 1, 0
    %v4029 = vsel %vm4013, 1, 0
    %v4030 = vsel %vm4014, 1, 0
    %v4031 = vsel %vm4015, 1, 0
    %v4032 = vsel %vm4016, 1, 0
    %v4033 = vsel %vm4017, 1, 0
    %v4034 = vsel %vm4018, 1, 0
    %v4035 = vsel %vm4019, 1, 0
    %v4036 = vsel %vm4020, 1, 0
    %v4037 = vsel %vm4021, 1, 0
    %v4038 = vsel %vm4022, 1, 0
    %v4039 = vsel %vm4023, 1, 0
    %v4040 = vsel %vm4024, 1, 0
    %v4041 = vsel %vm4025, 1, 0
    %v4042 = vsel %vm4026, 1, 0
    %v4043 = vsel %vm4027, 1, 0
    %v4044 = vadd.s32 %v4028, %v4029
    %v4045 = vand.u32 %v4044, 65535
    %v4046 = vshrl.u32 %v4044, 16
    %v4047 = vcvt.s32.f32 %v4045
    %v4048 = vcvt.s32.f32 %v4046
    %4049 = vadd.xlane.f32.xlu0 %v4047
    %v4050 = vpop.xlane.xlu0 %4049
    %4051 = vadd.xlane.f32.xlu0 %v4048
    %v4052 = vpop.xlane.xlu0 %4051
    %v4053 = vcvt.f32.s32 %v4050
    %v4054 = vcvt.f32.s32 %v4052
    %v4055 = vshll.u32 %v4054, 16
    %v4056 = vadd.s32 %v4055, %v4053
    %v4057 = vadd.s32 %v4030, %v4031
    %v4058 = vand.u32 %v4057, 65535
    %v4059 = vshrl.u32 %v4057, 16
    %v4060 = vcvt.s32.f32 %v4058
    %v4061 = vcvt.s32.f32 %v4059
    %4062 = vadd.xlane.f32.xlu0 %v4060
    %v4063 = vpop.xlane.xlu0 %4062
    %4064 = vadd.xlane.f32.xlu0 %v4061
    %v4065 = vpop.xlane.xlu0 %4064
    %v4066 = vcvt.f32.s32 %v4063
    %v4067 = vcvt.f32.s32 %v4065
    %v4068 = vshll.u32 %v4067, 16
    %v4069 = vadd.s32 %v4068, %v4066
    %v4070 = vadd.s32 %v4032, %v4033
    %v4071 = vand.u32 %v4070, 65535
    %v4072 = vshrl.u32 %v4070, 16
    %v4073 = vcvt.s32.f32 %v4071
    %v4074 = vcvt.s32.f32 %v4072
    %4075 = vadd.xlane.f32.xlu0 %v4073
    %v4076 = vpop.xlane.xlu0 %4075
    %4077 = vadd.xlane.f32.xlu0 %v4074
    %v4078 = vpop.xlane.xlu0 %4077
    %v4079 = vcvt.f32.s32 %v4076
    %v4080 = vcvt.f32.s32 %v4078
    %v4081 = vshll.u32 %v4080, 16
    %v4082 = vadd.s32 %v4081, %v4079
    %v4083 = vadd.s32 %v4034, %v4035
    %v4084 = vand.u32 %v4083, 65535
    %v4085 = vshrl.u32 %v4083, 16
    %v4086 = vcvt.s32.f32 %v4084
    %v4087 = vcvt.s32.f32 %v4085
    %4088 = vadd.xlane.f32.xlu0 %v4086
    %v4089 = vpop.xlane.xlu0 %4088
    %4090 = vadd.xlane.f32.xlu0 %v4087
    %v4091 = vpop.xlane.xlu0 %4090
    %v4092 = vcvt.f32.s32 %v4089
    %v4093 = vcvt.f32.s32 %v4091
    %v4094 = vshll.u32 %v4093, 16
    %v4095 = vadd.s32 %v4094, %v4092
    %v4096 = vadd.s32 %v4036, %v4037
    %v4097 = vand.u32 %v4096, 65535
    %v4098 = vshrl.u32 %v4096, 16
    %v4099 = vcvt.s32.f32 %v4097
    %v4100 = vcvt.s32.f32 %v4098
    %4101 = vadd.xlane.f32.xlu0 %v4099
    %v4102 = vpop.xlane.xlu0 %4101
    %4103 = vadd.xlane.f32.xlu0 %v4100
    %v4104 = vpop.xlane.xlu0 %4103
    %v4105 = vcvt.f32.s32 %v4102
    %v4106 = vcvt.f32.s32 %v4104
    %v4107 = vshll.u32 %v4106, 16
    %v4108 = vadd.s32 %v4107, %v4105
    %v4109 = vadd.s32 %v4038, %v4039
    %v4110 = vand.u32 %v4109, 65535
    %v4111 = vshrl.u32 %v4109, 16
    %v4112 = vcvt.s32.f32 %v4110
    %v4113 = vcvt.s32.f32 %v4111
    %4114 = vadd.xlane.f32.xlu0 %v4112
    %v4115 = vpop.xlane.xlu0 %4114
    %4116 = vadd.xlane.f32.xlu0 %v4113
    %v4117 = vpop.xlane.xlu0 %4116
    %v4118 = vcvt.f32.s32 %v4115
    %v4119 = vcvt.f32.s32 %v4117
    %v4120 = vshll.u32 %v4119, 16
    %v4121 = vadd.s32 %v4120, %v4118
    %v4122 = vadd.s32 %v4040, %v4041
    %v4123 = vand.u32 %v4122, 65535
    %v4124 = vshrl.u32 %v4122, 16
    %v4125 = vcvt.s32.f32 %v4123
    %v4126 = vcvt.s32.f32 %v4124
    %4127 = vadd.xlane.f32.xlu0 %v4125
    %v4128 = vpop.xlane.xlu0 %4127
    %4129 = vadd.xlane.f32.xlu0 %v4126
    %v4130 = vpop.xlane.xlu0 %4129
    %v4131 = vcvt.f32.s32 %v4128
    %v4132 = vcvt.f32.s32 %v4130
    %v4133 = vshll.u32 %v4132, 16
    %v4134 = vadd.s32 %v4133, %v4131
    %v4135 = vadd.s32 %v4042, %v4043
    %v4136 = vand.u32 %v4135, 65535
    %v4137 = vshrl.u32 %v4135, 16
    %v4138 = vcvt.s32.f32 %v4136
    %v4139 = vcvt.s32.f32 %v4137
    %4140 = vadd.xlane.f32.xlu0 %v4138
    %v4141 = vpop.xlane.xlu0 %4140
    %4142 = vadd.xlane.f32.xlu0 %v4139
    %v4143 = vpop.xlane.xlu0 %4142
    %v4144 = vcvt.f32.s32 %v4141
    %v4145 = vcvt.f32.s32 %v4143
    %v4146 = vshll.u32 %v4145, 16
    %v4147 = vadd.s32 %v4146, %v4144
    %vm4148 = vcmp.le.s32.totalorder %v4056, 127
    %vm4149 = vcmp.le.s32.totalorder %v4069, 127
    %vm4150 = vcmp.le.s32.totalorder %v4082, 127
    %vm4151 = vcmp.le.s32.totalorder %v4095, 127
    %vm4152 = vcmp.le.s32.totalorder %v4108, 127
    %vm4153 = vcmp.le.s32.totalorder %v4121, 127
    %vm4154 = vcmp.le.s32.totalorder %v4134, 127
    %vm4155 = vcmp.le.s32.totalorder %v4147, 127
    %v4156 = vsel %vm4148, %v4004, %v3996
    %v4157 = vsel %vm4149, %v4005, %v3997
    %v4158 = vsel %vm4150, %v4006, %v3998
    %v4159 = vsel %vm4151, %v4007, %v3999
    %v4160 = vsel %vm4152, %v4008, %v4000
    %v4161 = vsel %vm4153, %v4009, %v4001
    %v4162 = vsel %vm4154, %v4010, %v4002
    %v4163 = vsel %vm4155, %v4011, %v4003
    %v4164 = vor.u32 %v4156, 64
    %v4165 = vor.u32 %v4157, 64
    %v4166 = vor.u32 %v4158, 64
    %v4167 = vor.u32 %v4159, 64
    %v4168 = vor.u32 %v4160, 64
    %v4169 = vor.u32 %v4161, 64
    %v4170 = vor.u32 %v4162, 64
    %v4171 = vor.u32 %v4163, 64
    %vm4172 = vcmp.lt.s32.totalorder %v156, %v4164
    %vm4173 = vcmp.lt.s32.totalorder %v157, %v4164
    %vm4174 = vcmp.lt.s32.totalorder %v158, %v4165
    %vm4175 = vcmp.lt.s32.totalorder %v159, %v4165
    %vm4176 = vcmp.lt.s32.totalorder %v160, %v4166
    %vm4177 = vcmp.lt.s32.totalorder %v161, %v4166
    %vm4178 = vcmp.lt.s32.totalorder %v162, %v4167
    %vm4179 = vcmp.lt.s32.totalorder %v163, %v4167
    %vm4180 = vcmp.lt.s32.totalorder %v164, %v4168
    %vm4181 = vcmp.lt.s32.totalorder %v165, %v4168
    %vm4182 = vcmp.lt.s32.totalorder %v166, %v4169
    %vm4183 = vcmp.lt.s32.totalorder %v167, %v4169
    %vm4184 = vcmp.lt.s32.totalorder %v168, %v4170
    %vm4185 = vcmp.lt.s32.totalorder %v169, %v4170
    %vm4186 = vcmp.lt.s32.totalorder %v170, %v4171
    %vm4187 = vcmp.lt.s32.totalorder %v171, %v4171
    %v4188 = vsel %vm4172, 1, 0
    %v4189 = vsel %vm4173, 1, 0
    %v4190 = vsel %vm4174, 1, 0
    %v4191 = vsel %vm4175, 1, 0
    %v4192 = vsel %vm4176, 1, 0
    %v4193 = vsel %vm4177, 1, 0
    %v4194 = vsel %vm4178, 1, 0
    %v4195 = vsel %vm4179, 1, 0
    %v4196 = vsel %vm4180, 1, 0
    %v4197 = vsel %vm4181, 1, 0
    %v4198 = vsel %vm4182, 1, 0
    %v4199 = vsel %vm4183, 1, 0
    %v4200 = vsel %vm4184, 1, 0
    %v4201 = vsel %vm4185, 1, 0
    %v4202 = vsel %vm4186, 1, 0
    %v4203 = vsel %vm4187, 1, 0
    %v4204 = vadd.s32 %v4188, %v4189
    %v4205 = vand.u32 %v4204, 65535
    %v4206 = vshrl.u32 %v4204, 16
    %v4207 = vcvt.s32.f32 %v4205
    %v4208 = vcvt.s32.f32 %v4206
    %4209 = vadd.xlane.f32.xlu0 %v4207
    %v4210 = vpop.xlane.xlu0 %4209
    %4211 = vadd.xlane.f32.xlu0 %v4208
    %v4212 = vpop.xlane.xlu0 %4211
    %v4213 = vcvt.f32.s32 %v4210
    %v4214 = vcvt.f32.s32 %v4212
    %v4215 = vshll.u32 %v4214, 16
    %v4216 = vadd.s32 %v4215, %v4213
    %v4217 = vadd.s32 %v4190, %v4191
    %v4218 = vand.u32 %v4217, 65535
    %v4219 = vshrl.u32 %v4217, 16
    %v4220 = vcvt.s32.f32 %v4218
    %v4221 = vcvt.s32.f32 %v4219
    %4222 = vadd.xlane.f32.xlu0 %v4220
    %v4223 = vpop.xlane.xlu0 %4222
    %4224 = vadd.xlane.f32.xlu0 %v4221
    %v4225 = vpop.xlane.xlu0 %4224
    %v4226 = vcvt.f32.s32 %v4223
    %v4227 = vcvt.f32.s32 %v4225
    %v4228 = vshll.u32 %v4227, 16
    %v4229 = vadd.s32 %v4228, %v4226
    %v4230 = vadd.s32 %v4192, %v4193
    %v4231 = vand.u32 %v4230, 65535
    %v4232 = vshrl.u32 %v4230, 16
    %v4233 = vcvt.s32.f32 %v4231
    %v4234 = vcvt.s32.f32 %v4232
    %4235 = vadd.xlane.f32.xlu0 %v4233
    %v4236 = vpop.xlane.xlu0 %4235
    %4237 = vadd.xlane.f32.xlu0 %v4234
    %v4238 = vpop.xlane.xlu0 %4237
    %v4239 = vcvt.f32.s32 %v4236
    %v4240 = vcvt.f32.s32 %v4238
    %v4241 = vshll.u32 %v4240, 16
    %v4242 = vadd.s32 %v4241, %v4239
    %v4243 = vadd.s32 %v4194, %v4195
    %v4244 = vand.u32 %v4243, 65535
    %v4245 = vshrl.u32 %v4243, 16
    %v4246 = vcvt.s32.f32 %v4244
    %v4247 = vcvt.s32.f32 %v4245
    %4248 = vadd.xlane.f32.xlu0 %v4246
    %v4249 = vpop.xlane.xlu0 %4248
    %4250 = vadd.xlane.f32.xlu0 %v4247
    %v4251 = vpop.xlane.xlu0 %4250
    %v4252 = vcvt.f32.s32 %v4249
    %v4253 = vcvt.f32.s32 %v4251
    %v4254 = vshll.u32 %v4253, 16
    %v4255 = vadd.s32 %v4254, %v4252
    %v4256 = vadd.s32 %v4196, %v4197
    %v4257 = vand.u32 %v4256, 65535
    %v4258 = vshrl.u32 %v4256, 16
    %v4259 = vcvt.s32.f32 %v4257
    %v4260 = vcvt.s32.f32 %v4258
    %4261 = vadd.xlane.f32.xlu0 %v4259
    %v4262 = vpop.xlane.xlu0 %4261
    %4263 = vadd.xlane.f32.xlu0 %v4260
    %v4264 = vpop.xlane.xlu0 %4263
    %v4265 = vcvt.f32.s32 %v4262
    %v4266 = vcvt.f32.s32 %v4264
    %v4267 = vshll.u32 %v4266, 16
    %v4268 = vadd.s32 %v4267, %v4265
    %v4269 = vadd.s32 %v4198, %v4199
    %v4270 = vand.u32 %v4269, 65535
    %v4271 = vshrl.u32 %v4269, 16
    %v4272 = vcvt.s32.f32 %v4270
    %v4273 = vcvt.s32.f32 %v4271
    %4274 = vadd.xlane.f32.xlu0 %v4272
    %v4275 = vpop.xlane.xlu0 %4274
    %4276 = vadd.xlane.f32.xlu0 %v4273
    %v4277 = vpop.xlane.xlu0 %4276
    %v4278 = vcvt.f32.s32 %v4275
    %v4279 = vcvt.f32.s32 %v4277
    %v4280 = vshll.u32 %v4279, 16
    %v4281 = vadd.s32 %v4280, %v4278
    %v4282 = vadd.s32 %v4200, %v4201
    %v4283 = vand.u32 %v4282, 65535
    %v4284 = vshrl.u32 %v4282, 16
    %v4285 = vcvt.s32.f32 %v4283
    %v4286 = vcvt.s32.f32 %v4284
    %4287 = vadd.xlane.f32.xlu0 %v4285
    %v4288 = vpop.xlane.xlu0 %4287
    %4289 = vadd.xlane.f32.xlu0 %v4286
    %v4290 = vpop.xlane.xlu0 %4289
    %v4291 = vcvt.f32.s32 %v4288
    %v4292 = vcvt.f32.s32 %v4290
    %v4293 = vshll.u32 %v4292, 16
    %v4294 = vadd.s32 %v4293, %v4291
    %v4295 = vadd.s32 %v4202, %v4203
    %v4296 = vand.u32 %v4295, 65535
    %v4297 = vshrl.u32 %v4295, 16
    %v4298 = vcvt.s32.f32 %v4296
    %v4299 = vcvt.s32.f32 %v4297
    %4300 = vadd.xlane.f32.xlu0 %v4298
    %v4301 = vpop.xlane.xlu0 %4300
    %4302 = vadd.xlane.f32.xlu0 %v4299
    %v4303 = vpop.xlane.xlu0 %4302
    %v4304 = vcvt.f32.s32 %v4301
    %v4305 = vcvt.f32.s32 %v4303
    %v4306 = vshll.u32 %v4305, 16
    %v4307 = vadd.s32 %v4306, %v4304
    %vm4308 = vcmp.le.s32.totalorder %v4216, 127
    %vm4309 = vcmp.le.s32.totalorder %v4229, 127
    %vm4310 = vcmp.le.s32.totalorder %v4242, 127
    %vm4311 = vcmp.le.s32.totalorder %v4255, 127
    %vm4312 = vcmp.le.s32.totalorder %v4268, 127
    %vm4313 = vcmp.le.s32.totalorder %v4281, 127
    %vm4314 = vcmp.le.s32.totalorder %v4294, 127
    %vm4315 = vcmp.le.s32.totalorder %v4307, 127
    %v4316 = vsel %vm4308, %v4164, %v4156
    %v4317 = vsel %vm4309, %v4165, %v4157
    %v4318 = vsel %vm4310, %v4166, %v4158
    %v4319 = vsel %vm4311, %v4167, %v4159
    %v4320 = vsel %vm4312, %v4168, %v4160
    %v4321 = vsel %vm4313, %v4169, %v4161
    %v4322 = vsel %vm4314, %v4170, %v4162
    %v4323 = vsel %vm4315, %v4171, %v4163
    %v4324 = vor.u32 %v4316, 32
    %v4325 = vor.u32 %v4317, 32
    %v4326 = vor.u32 %v4318, 32
    %v4327 = vor.u32 %v4319, 32
    %v4328 = vor.u32 %v4320, 32
    %v4329 = vor.u32 %v4321, 32
    %v4330 = vor.u32 %v4322, 32
    %v4331 = vor.u32 %v4323, 32
    %vm4332 = vcmp.lt.s32.totalorder %v156, %v4324
    %vm4333 = vcmp.lt.s32.totalorder %v157, %v4324
    %vm4334 = vcmp.lt.s32.totalorder %v158, %v4325
    %vm4335 = vcmp.lt.s32.totalorder %v159, %v4325
    %vm4336 = vcmp.lt.s32.totalorder %v160, %v4326
    %vm4337 = vcmp.lt.s32.totalorder %v161, %v4326
    %vm4338 = vcmp.lt.s32.totalorder %v162, %v4327
    %vm4339 = vcmp.lt.s32.totalorder %v163, %v4327
    %vm4340 = vcmp.lt.s32.totalorder %v164, %v4328
    %vm4341 = vcmp.lt.s32.totalorder %v165, %v4328
    %vm4342 = vcmp.lt.s32.totalorder %v166, %v4329
    %vm4343 = vcmp.lt.s32.totalorder %v167, %v4329
    %vm4344 = vcmp.lt.s32.totalorder %v168, %v4330
    %vm4345 = vcmp.lt.s32.totalorder %v169, %v4330
    %vm4346 = vcmp.lt.s32.totalorder %v170, %v4331
    %vm4347 = vcmp.lt.s32.totalorder %v171, %v4331
    %v4348 = vsel %vm4332, 1, 0
    %v4349 = vsel %vm4333, 1, 0
    %v4350 = vsel %vm4334, 1, 0
    %v4351 = vsel %vm4335, 1, 0
    %v4352 = vsel %vm4336, 1, 0
    %v4353 = vsel %vm4337, 1, 0
    %v4354 = vsel %vm4338, 1, 0
    %v4355 = vsel %vm4339, 1, 0
    %v4356 = vsel %vm4340, 1, 0
    %v4357 = vsel %vm4341, 1, 0
    %v4358 = vsel %vm4342, 1, 0
    %v4359 = vsel %vm4343, 1, 0
    %v4360 = vsel %vm4344, 1, 0
    %v4361 = vsel %vm4345, 1, 0
    %v4362 = vsel %vm4346, 1, 0
    %v4363 = vsel %vm4347, 1, 0
    %v4364 = vadd.s32 %v4348, %v4349
    %v4365 = vand.u32 %v4364, 65535
    %v4366 = vshrl.u32 %v4364, 16
    %v4367 = vcvt.s32.f32 %v4365
    %v4368 = vcvt.s32.f32 %v4366
    %4369 = vadd.xlane.f32.xlu0 %v4367
    %v4370 = vpop.xlane.xlu0 %4369
    %4371 = vadd.xlane.f32.xlu0 %v4368
    %v4372 = vpop.xlane.xlu0 %4371
    %v4373 = vcvt.f32.s32 %v4370
    %v4374 = vcvt.f32.s32 %v4372
    %v4375 = vshll.u32 %v4374, 16
    %v4376 = vadd.s32 %v4375, %v4373
    %v4377 = vadd.s32 %v4350, %v4351
    %v4378 = vand.u32 %v4377, 65535
    %v4379 = vshrl.u32 %v4377, 16
    %v4380 = vcvt.s32.f32 %v4378
    %v4381 = vcvt.s32.f32 %v4379
    %4382 = vadd.xlane.f32.xlu0 %v4380
    %v4383 = vpop.xlane.xlu0 %4382
    %4384 = vadd.xlane.f32.xlu0 %v4381
    %v4385 = vpop.xlane.xlu0 %4384
    %v4386 = vcvt.f32.s32 %v4383
    %v4387 = vcvt.f32.s32 %v4385
    %v4388 = vshll.u32 %v4387, 16
    %v4389 = vadd.s32 %v4388, %v4386
    %v4390 = vadd.s32 %v4352, %v4353
    %v4391 = vand.u32 %v4390, 65535
    %v4392 = vshrl.u32 %v4390, 16
    %v4393 = vcvt.s32.f32 %v4391
    %v4394 = vcvt.s32.f32 %v4392
    %4395 = vadd.xlane.f32.xlu0 %v4393
    %v4396 = vpop.xlane.xlu0 %4395
    %4397 = vadd.xlane.f32.xlu0 %v4394
    %v4398 = vpop.xlane.xlu0 %4397
    %v4399 = vcvt.f32.s32 %v4396
    %v4400 = vcvt.f32.s32 %v4398
    %v4401 = vshll.u32 %v4400, 16
    %v4402 = vadd.s32 %v4401, %v4399
    %v4403 = vadd.s32 %v4354, %v4355
    %v4404 = vand.u32 %v4403, 65535
    %v4405 = vshrl.u32 %v4403, 16
    %v4406 = vcvt.s32.f32 %v4404
    %v4407 = vcvt.s32.f32 %v4405
    %4408 = vadd.xlane.f32.xlu0 %v4406
    %v4409 = vpop.xlane.xlu0 %4408
    %4410 = vadd.xlane.f32.xlu0 %v4407
    %v4411 = vpop.xlane.xlu0 %4410
    %v4412 = vcvt.f32.s32 %v4409
    %v4413 = vcvt.f32.s32 %v4411
    %v4414 = vshll.u32 %v4413, 16
    %v4415 = vadd.s32 %v4414, %v4412
    %v4416 = vadd.s32 %v4356, %v4357
    %v4417 = vand.u32 %v4416, 65535
    %v4418 = vshrl.u32 %v4416, 16
    %v4419 = vcvt.s32.f32 %v4417
    %v4420 = vcvt.s32.f32 %v4418
    %4421 = vadd.xlane.f32.xlu0 %v4419
    %v4422 = vpop.xlane.xlu0 %4421
    %4423 = vadd.xlane.f32.xlu0 %v4420
    %v4424 = vpop.xlane.xlu0 %4423
    %v4425 = vcvt.f32.s32 %v4422
    %v4426 = vcvt.f32.s32 %v4424
    %v4427 = vshll.u32 %v4426, 16
    %v4428 = vadd.s32 %v4427, %v4425
    %v4429 = vadd.s32 %v4358, %v4359
    %v4430 = vand.u32 %v4429, 65535
    %v4431 = vshrl.u32 %v4429, 16
    %v4432 = vcvt.s32.f32 %v4430
    %v4433 = vcvt.s32.f32 %v4431
    %4434 = vadd.xlane.f32.xlu0 %v4432
    %v4435 = vpop.xlane.xlu0 %4434
    %4436 = vadd.xlane.f32.xlu0 %v4433
    %v4437 = vpop.xlane.xlu0 %4436
    %v4438 = vcvt.f32.s32 %v4435
    %v4439 = vcvt.f32.s32 %v4437
    %v4440 = vshll.u32 %v4439, 16
    %v4441 = vadd.s32 %v4440, %v4438
    %v4442 = vadd.s32 %v4360, %v4361
    %v4443 = vand.u32 %v4442, 65535
    %v4444 = vshrl.u32 %v4442, 16
    %v4445 = vcvt.s32.f32 %v4443
    %v4446 = vcvt.s32.f32 %v4444
    %4447 = vadd.xlane.f32.xlu0 %v4445
    %v4448 = vpop.xlane.xlu0 %4447
    %4449 = vadd.xlane.f32.xlu0 %v4446
    %v4450 = vpop.xlane.xlu0 %4449
    %v4451 = vcvt.f32.s32 %v4448
    %v4452 = vcvt.f32.s32 %v4450
    %v4453 = vshll.u32 %v4452, 16
    %v4454 = vadd.s32 %v4453, %v4451
    %v4455 = vadd.s32 %v4362, %v4363
    %v4456 = vand.u32 %v4455, 65535
    %v4457 = vshrl.u32 %v4455, 16
    %v4458 = vcvt.s32.f32 %v4456
    %v4459 = vcvt.s32.f32 %v4457
    %4460 = vadd.xlane.f32.xlu0 %v4458
    %v4461 = vpop.xlane.xlu0 %4460
    %4462 = vadd.xlane.f32.xlu0 %v4459
    %v4463 = vpop.xlane.xlu0 %4462
    %v4464 = vcvt.f32.s32 %v4461
    %v4465 = vcvt.f32.s32 %v4463
    %v4466 = vshll.u32 %v4465, 16
    %v4467 = vadd.s32 %v4466, %v4464
    %vm4468 = vcmp.le.s32.totalorder %v4376, 127
    %vm4469 = vcmp.le.s32.totalorder %v4389, 127
    %vm4470 = vcmp.le.s32.totalorder %v4402, 127
    %vm4471 = vcmp.le.s32.totalorder %v4415, 127
    %vm4472 = vcmp.le.s32.totalorder %v4428, 127
    %vm4473 = vcmp.le.s32.totalorder %v4441, 127
    %vm4474 = vcmp.le.s32.totalorder %v4454, 127
    %vm4475 = vcmp.le.s32.totalorder %v4467, 127
    %v4476 = vsel %vm4468, %v4324, %v4316
    %v4477 = vsel %vm4469, %v4325, %v4317
    %v4478 = vsel %vm4470, %v4326, %v4318
    %v4479 = vsel %vm4471, %v4327, %v4319
    %v4480 = vsel %vm4472, %v4328, %v4320
    %v4481 = vsel %vm4473, %v4329, %v4321
    %v4482 = vsel %vm4474, %v4330, %v4322
    %v4483 = vsel %vm4475, %v4331, %v4323
    %v4484 = vor.u32 %v4476, 16
    %v4485 = vor.u32 %v4477, 16
    %v4486 = vor.u32 %v4478, 16
    %v4487 = vor.u32 %v4479, 16
    %v4488 = vor.u32 %v4480, 16
    %v4489 = vor.u32 %v4481, 16
    %v4490 = vor.u32 %v4482, 16
    %v4491 = vor.u32 %v4483, 16
    %vm4492 = vcmp.lt.s32.totalorder %v156, %v4484
    %vm4493 = vcmp.lt.s32.totalorder %v157, %v4484
    %vm4494 = vcmp.lt.s32.totalorder %v158, %v4485
    %vm4495 = vcmp.lt.s32.totalorder %v159, %v4485
    %vm4496 = vcmp.lt.s32.totalorder %v160, %v4486
    %vm4497 = vcmp.lt.s32.totalorder %v161, %v4486
    %vm4498 = vcmp.lt.s32.totalorder %v162, %v4487
    %vm4499 = vcmp.lt.s32.totalorder %v163, %v4487
    %vm4500 = vcmp.lt.s32.totalorder %v164, %v4488
    %vm4501 = vcmp.lt.s32.totalorder %v165, %v4488
    %vm4502 = vcmp.lt.s32.totalorder %v166, %v4489
    %vm4503 = vcmp.lt.s32.totalorder %v167, %v4489
    %vm4504 = vcmp.lt.s32.totalorder %v168, %v4490
    %vm4505 = vcmp.lt.s32.totalorder %v169, %v4490
    %vm4506 = vcmp.lt.s32.totalorder %v170, %v4491
    %vm4507 = vcmp.lt.s32.totalorder %v171, %v4491
    %v4508 = vsel %vm4492, 1, 0
    %v4509 = vsel %vm4493, 1, 0
    %v4510 = vsel %vm4494, 1, 0
    %v4511 = vsel %vm4495, 1, 0
    %v4512 = vsel %vm4496, 1, 0
    %v4513 = vsel %vm4497, 1, 0
    %v4514 = vsel %vm4498, 1, 0
    %v4515 = vsel %vm4499, 1, 0
    %v4516 = vsel %vm4500, 1, 0
    %v4517 = vsel %vm4501, 1, 0
    %v4518 = vsel %vm4502, 1, 0
    %v4519 = vsel %vm4503, 1, 0
    %v4520 = vsel %vm4504, 1, 0
    %v4521 = vsel %vm4505, 1, 0
    %v4522 = vsel %vm4506, 1, 0
    %v4523 = vsel %vm4507, 1, 0
    %v4524 = vadd.s32 %v4508, %v4509
    %v4525 = vand.u32 %v4524, 65535
    %v4526 = vshrl.u32 %v4524, 16
    %v4527 = vcvt.s32.f32 %v4525
    %v4528 = vcvt.s32.f32 %v4526
    %4529 = vadd.xlane.f32.xlu0 %v4527
    %v4530 = vpop.xlane.xlu0 %4529
    %4531 = vadd.xlane.f32.xlu0 %v4528
    %v4532 = vpop.xlane.xlu0 %4531
    %v4533 = vcvt.f32.s32 %v4530
    %v4534 = vcvt.f32.s32 %v4532
    %v4535 = vshll.u32 %v4534, 16
    %v4536 = vadd.s32 %v4535, %v4533
    %v4537 = vadd.s32 %v4510, %v4511
    %v4538 = vand.u32 %v4537, 65535
    %v4539 = vshrl.u32 %v4537, 16
    %v4540 = vcvt.s32.f32 %v4538
    %v4541 = vcvt.s32.f32 %v4539
    %4542 = vadd.xlane.f32.xlu0 %v4540
    %v4543 = vpop.xlane.xlu0 %4542
    %4544 = vadd.xlane.f32.xlu0 %v4541
    %v4545 = vpop.xlane.xlu0 %4544
    %v4546 = vcvt.f32.s32 %v4543
    %v4547 = vcvt.f32.s32 %v4545
    %v4548 = vshll.u32 %v4547, 16
    %v4549 = vadd.s32 %v4548, %v4546
    %v4550 = vadd.s32 %v4512, %v4513
    %v4551 = vand.u32 %v4550, 65535
    %v4552 = vshrl.u32 %v4550, 16
    %v4553 = vcvt.s32.f32 %v4551
    %v4554 = vcvt.s32.f32 %v4552
    %4555 = vadd.xlane.f32.xlu0 %v4553
    %v4556 = vpop.xlane.xlu0 %4555
    %4557 = vadd.xlane.f32.xlu0 %v4554
    %v4558 = vpop.xlane.xlu0 %4557
    %v4559 = vcvt.f32.s32 %v4556
    %v4560 = vcvt.f32.s32 %v4558
    %v4561 = vshll.u32 %v4560, 16
    %v4562 = vadd.s32 %v4561, %v4559
    %v4563 = vadd.s32 %v4514, %v4515
    %v4564 = vand.u32 %v4563, 65535
    %v4565 = vshrl.u32 %v4563, 16
    %v4566 = vcvt.s32.f32 %v4564
    %v4567 = vcvt.s32.f32 %v4565
    %4568 = vadd.xlane.f32.xlu0 %v4566
    %v4569 = vpop.xlane.xlu0 %4568
    %4570 = vadd.xlane.f32.xlu0 %v4567
    %v4571 = vpop.xlane.xlu0 %4570
    %v4572 = vcvt.f32.s32 %v4569
    %v4573 = vcvt.f32.s32 %v4571
    %v4574 = vshll.u32 %v4573, 16
    %v4575 = vadd.s32 %v4574, %v4572
    %v4576 = vadd.s32 %v4516, %v4517
    %v4577 = vand.u32 %v4576, 65535
    %v4578 = vshrl.u32 %v4576, 16
    %v4579 = vcvt.s32.f32 %v4577
    %v4580 = vcvt.s32.f32 %v4578
    %4581 = vadd.xlane.f32.xlu0 %v4579
    %v4582 = vpop.xlane.xlu0 %4581
    %4583 = vadd.xlane.f32.xlu0 %v4580
    %v4584 = vpop.xlane.xlu0 %4583
    %v4585 = vcvt.f32.s32 %v4582
    %v4586 = vcvt.f32.s32 %v4584
    %v4587 = vshll.u32 %v4586, 16
    %v4588 = vadd.s32 %v4587, %v4585
    %v4589 = vadd.s32 %v4518, %v4519
    %v4590 = vand.u32 %v4589, 65535
    %v4591 = vshrl.u32 %v4589, 16
    %v4592 = vcvt.s32.f32 %v4590
    %v4593 = vcvt.s32.f32 %v4591
    %4594 = vadd.xlane.f32.xlu0 %v4592
    %v4595 = vpop.xlane.xlu0 %4594
    %4596 = vadd.xlane.f32.xlu0 %v4593
    %v4597 = vpop.xlane.xlu0 %4596
    %v4598 = vcvt.f32.s32 %v4595
    %v4599 = vcvt.f32.s32 %v4597
    %v4600 = vshll.u32 %v4599, 16
    %v4601 = vadd.s32 %v4600, %v4598
    %v4602 = vadd.s32 %v4520, %v4521
    %v4603 = vand.u32 %v4602, 65535
    %v4604 = vshrl.u32 %v4602, 16
    %v4605 = vcvt.s32.f32 %v4603
    %v4606 = vcvt.s32.f32 %v4604
    %4607 = vadd.xlane.f32.xlu0 %v4605
    %v4608 = vpop.xlane.xlu0 %4607
    %4609 = vadd.xlane.f32.xlu0 %v4606
    %v4610 = vpop.xlane.xlu0 %4609
    %v4611 = vcvt.f32.s32 %v4608
    %v4612 = vcvt.f32.s32 %v4610
    %v4613 = vshll.u32 %v4612, 16
    %v4614 = vadd.s32 %v4613, %v4611
    %v4615 = vadd.s32 %v4522, %v4523
    %v4616 = vand.u32 %v4615, 65535
    %v4617 = vshrl.u32 %v4615, 16
    %v4618 = vcvt.s32.f32 %v4616
    %v4619 = vcvt.s32.f32 %v4617
    %4620 = vadd.xlane.f32.xlu0 %v4618
    %v4621 = vpop.xlane.xlu0 %4620
    %4622 = vadd.xlane.f32.xlu0 %v4619
    %v4623 = vpop.xlane.xlu0 %4622
    %v4624 = vcvt.f32.s32 %v4621
    %v4625 = vcvt.f32.s32 %v4623
    %v4626 = vshll.u32 %v4625, 16
    %v4627 = vadd.s32 %v4626, %v4624
    %vm4628 = vcmp.le.s32.totalorder %v4536, 127
    %vm4629 = vcmp.le.s32.totalorder %v4549, 127
    %vm4630 = vcmp.le.s32.totalorder %v4562, 127
    %vm4631 = vcmp.le.s32.totalorder %v4575, 127
    %vm4632 = vcmp.le.s32.totalorder %v4588, 127
    %vm4633 = vcmp.le.s32.totalorder %v4601, 127
    %vm4634 = vcmp.le.s32.totalorder %v4614, 127
    %vm4635 = vcmp.le.s32.totalorder %v4627, 127
    %v4636 = vsel %vm4628, %v4484, %v4476
    %v4637 = vsel %vm4629, %v4485, %v4477
    %v4638 = vsel %vm4630, %v4486, %v4478
    %v4639 = vsel %vm4631, %v4487, %v4479
    %v4640 = vsel %vm4632, %v4488, %v4480
    %v4641 = vsel %vm4633, %v4489, %v4481
    %v4642 = vsel %vm4634, %v4490, %v4482
    %v4643 = vsel %vm4635, %v4491, %v4483
    %v4644 = vor.u32 %v4636, 8
    %v4645 = vor.u32 %v4637, 8
    %v4646 = vor.u32 %v4638, 8
    %v4647 = vor.u32 %v4639, 8
    %v4648 = vor.u32 %v4640, 8
    %v4649 = vor.u32 %v4641, 8
    %v4650 = vor.u32 %v4642, 8
    %v4651 = vor.u32 %v4643, 8
    %vm4652 = vcmp.lt.s32.totalorder %v156, %v4644
    %vm4653 = vcmp.lt.s32.totalorder %v157, %v4644
    %vm4654 = vcmp.lt.s32.totalorder %v158, %v4645
    %vm4655 = vcmp.lt.s32.totalorder %v159, %v4645
    %vm4656 = vcmp.lt.s32.totalorder %v160, %v4646
    %vm4657 = vcmp.lt.s32.totalorder %v161, %v4646
    %vm4658 = vcmp.lt.s32.totalorder %v162, %v4647
    %vm4659 = vcmp.lt.s32.totalorder %v163, %v4647
    %vm4660 = vcmp.lt.s32.totalorder %v164, %v4648
    %vm4661 = vcmp.lt.s32.totalorder %v165, %v4648
    %vm4662 = vcmp.lt.s32.totalorder %v166, %v4649
    %vm4663 = vcmp.lt.s32.totalorder %v167, %v4649
    %vm4664 = vcmp.lt.s32.totalorder %v168, %v4650
    %vm4665 = vcmp.lt.s32.totalorder %v169, %v4650
    %vm4666 = vcmp.lt.s32.totalorder %v170, %v4651
    %vm4667 = vcmp.lt.s32.totalorder %v171, %v4651
    %v4668 = vsel %vm4652, 1, 0
    %v4669 = vsel %vm4653, 1, 0
    %v4670 = vsel %vm4654, 1, 0
    %v4671 = vsel %vm4655, 1, 0
    %v4672 = vsel %vm4656, 1, 0
    %v4673 = vsel %vm4657, 1, 0
    %v4674 = vsel %vm4658, 1, 0
    %v4675 = vsel %vm4659, 1, 0
    %v4676 = vsel %vm4660, 1, 0
    %v4677 = vsel %vm4661, 1, 0
    %v4678 = vsel %vm4662, 1, 0
    %v4679 = vsel %vm4663, 1, 0
    %v4680 = vsel %vm4664, 1, 0
    %v4681 = vsel %vm4665, 1, 0
    %v4682 = vsel %vm4666, 1, 0
    %v4683 = vsel %vm4667, 1, 0
    %v4684 = vadd.s32 %v4668, %v4669
    %v4685 = vand.u32 %v4684, 65535
    %v4686 = vshrl.u32 %v4684, 16
    %v4687 = vcvt.s32.f32 %v4685
    %v4688 = vcvt.s32.f32 %v4686
    %4689 = vadd.xlane.f32.xlu0 %v4687
    %v4690 = vpop.xlane.xlu0 %4689
    %4691 = vadd.xlane.f32.xlu0 %v4688
    %v4692 = vpop.xlane.xlu0 %4691
    %v4693 = vcvt.f32.s32 %v4690
    %v4694 = vcvt.f32.s32 %v4692
    %v4695 = vshll.u32 %v4694, 16
    %v4696 = vadd.s32 %v4695, %v4693
    %v4697 = vadd.s32 %v4670, %v4671
    %v4698 = vand.u32 %v4697, 65535
    %v4699 = vshrl.u32 %v4697, 16
    %v4700 = vcvt.s32.f32 %v4698
    %v4701 = vcvt.s32.f32 %v4699
    %4702 = vadd.xlane.f32.xlu0 %v4700
    %v4703 = vpop.xlane.xlu0 %4702
    %4704 = vadd.xlane.f32.xlu0 %v4701
    %v4705 = vpop.xlane.xlu0 %4704
    %v4706 = vcvt.f32.s32 %v4703
    %v4707 = vcvt.f32.s32 %v4705
    %v4708 = vshll.u32 %v4707, 16
    %v4709 = vadd.s32 %v4708, %v4706
    %v4710 = vadd.s32 %v4672, %v4673
    %v4711 = vand.u32 %v4710, 65535
    %v4712 = vshrl.u32 %v4710, 16
    %v4713 = vcvt.s32.f32 %v4711
    %v4714 = vcvt.s32.f32 %v4712
    %4715 = vadd.xlane.f32.xlu0 %v4713
    %v4716 = vpop.xlane.xlu0 %4715
    %4717 = vadd.xlane.f32.xlu0 %v4714
    %v4718 = vpop.xlane.xlu0 %4717
    %v4719 = vcvt.f32.s32 %v4716
    %v4720 = vcvt.f32.s32 %v4718
    %v4721 = vshll.u32 %v4720, 16
    %v4722 = vadd.s32 %v4721, %v4719
    %v4723 = vadd.s32 %v4674, %v4675
    %v4724 = vand.u32 %v4723, 65535
    %v4725 = vshrl.u32 %v4723, 16
    %v4726 = vcvt.s32.f32 %v4724
    %v4727 = vcvt.s32.f32 %v4725
    %4728 = vadd.xlane.f32.xlu0 %v4726
    %v4729 = vpop.xlane.xlu0 %4728
    %4730 = vadd.xlane.f32.xlu0 %v4727
    %v4731 = vpop.xlane.xlu0 %4730
    %v4732 = vcvt.f32.s32 %v4729
    %v4733 = vcvt.f32.s32 %v4731
    %v4734 = vshll.u32 %v4733, 16
    %v4735 = vadd.s32 %v4734, %v4732
    %v4736 = vadd.s32 %v4676, %v4677
    %v4737 = vand.u32 %v4736, 65535
    %v4738 = vshrl.u32 %v4736, 16
    %v4739 = vcvt.s32.f32 %v4737
    %v4740 = vcvt.s32.f32 %v4738
    %4741 = vadd.xlane.f32.xlu0 %v4739
    %v4742 = vpop.xlane.xlu0 %4741
    %4743 = vadd.xlane.f32.xlu0 %v4740
    %v4744 = vpop.xlane.xlu0 %4743
    %v4745 = vcvt.f32.s32 %v4742
    %v4746 = vcvt.f32.s32 %v4744
    %v4747 = vshll.u32 %v4746, 16
    %v4748 = vadd.s32 %v4747, %v4745
    %v4749 = vadd.s32 %v4678, %v4679
    %v4750 = vand.u32 %v4749, 65535
    %v4751 = vshrl.u32 %v4749, 16
    %v4752 = vcvt.s32.f32 %v4750
    %v4753 = vcvt.s32.f32 %v4751
    %4754 = vadd.xlane.f32.xlu0 %v4752
    %v4755 = vpop.xlane.xlu0 %4754
    %4756 = vadd.xlane.f32.xlu0 %v4753
    %v4757 = vpop.xlane.xlu0 %4756
    %v4758 = vcvt.f32.s32 %v4755
    %v4759 = vcvt.f32.s32 %v4757
    %v4760 = vshll.u32 %v4759, 16
    %v4761 = vadd.s32 %v4760, %v4758
    %v4762 = vadd.s32 %v4680, %v4681
    %v4763 = vand.u32 %v4762, 65535
    %v4764 = vshrl.u32 %v4762, 16
    %v4765 = vcvt.s32.f32 %v4763
    %v4766 = vcvt.s32.f32 %v4764
    %4767 = vadd.xlane.f32.xlu0 %v4765
    %v4768 = vpop.xlane.xlu0 %4767
    %4769 = vadd.xlane.f32.xlu0 %v4766
    %v4770 = vpop.xlane.xlu0 %4769
    %v4771 = vcvt.f32.s32 %v4768
    %v4772 = vcvt.f32.s32 %v4770
    %v4773 = vshll.u32 %v4772, 16
    %v4774 = vadd.s32 %v4773, %v4771
    %v4775 = vadd.s32 %v4682, %v4683
    %v4776 = vand.u32 %v4775, 65535
    %v4777 = vshrl.u32 %v4775, 16
    %v4778 = vcvt.s32.f32 %v4776
    %v4779 = vcvt.s32.f32 %v4777
    %4780 = vadd.xlane.f32.xlu0 %v4778
    %v4781 = vpop.xlane.xlu0 %4780
    %4782 = vadd.xlane.f32.xlu0 %v4779
    %v4783 = vpop.xlane.xlu0 %4782
    %v4784 = vcvt.f32.s32 %v4781
    %v4785 = vcvt.f32.s32 %v4783
    %v4786 = vshll.u32 %v4785, 16
    %v4787 = vadd.s32 %v4786, %v4784
    %vm4788 = vcmp.le.s32.totalorder %v4696, 127
    %vm4789 = vcmp.le.s32.totalorder %v4709, 127
    %vm4790 = vcmp.le.s32.totalorder %v4722, 127
    %vm4791 = vcmp.le.s32.totalorder %v4735, 127
    %vm4792 = vcmp.le.s32.totalorder %v4748, 127
    %vm4793 = vcmp.le.s32.totalorder %v4761, 127
    %vm4794 = vcmp.le.s32.totalorder %v4774, 127
    %vm4795 = vcmp.le.s32.totalorder %v4787, 127
    %v4796 = vsel %vm4788, %v4644, %v4636
    %v4797 = vsel %vm4789, %v4645, %v4637
    %v4798 = vsel %vm4790, %v4646, %v4638
    %v4799 = vsel %vm4791, %v4647, %v4639
    %v4800 = vsel %vm4792, %v4648, %v4640
    %v4801 = vsel %vm4793, %v4649, %v4641
    %v4802 = vsel %vm4794, %v4650, %v4642
    %v4803 = vsel %vm4795, %v4651, %v4643
    %v4804 = vor.u32 %v4796, 4
    %v4805 = vor.u32 %v4797, 4
    %v4806 = vor.u32 %v4798, 4
    %v4807 = vor.u32 %v4799, 4
    %v4808 = vor.u32 %v4800, 4
    %v4809 = vor.u32 %v4801, 4
    %v4810 = vor.u32 %v4802, 4
    %v4811 = vor.u32 %v4803, 4
    %vm4812 = vcmp.lt.s32.totalorder %v156, %v4804
    %vm4813 = vcmp.lt.s32.totalorder %v157, %v4804
    %vm4814 = vcmp.lt.s32.totalorder %v158, %v4805
    %vm4815 = vcmp.lt.s32.totalorder %v159, %v4805
    %vm4816 = vcmp.lt.s32.totalorder %v160, %v4806
    %vm4817 = vcmp.lt.s32.totalorder %v161, %v4806
    %vm4818 = vcmp.lt.s32.totalorder %v162, %v4807
    %vm4819 = vcmp.lt.s32.totalorder %v163, %v4807
    %vm4820 = vcmp.lt.s32.totalorder %v164, %v4808
    %vm4821 = vcmp.lt.s32.totalorder %v165, %v4808
    %vm4822 = vcmp.lt.s32.totalorder %v166, %v4809
    %vm4823 = vcmp.lt.s32.totalorder %v167, %v4809
    %vm4824 = vcmp.lt.s32.totalorder %v168, %v4810
    %vm4825 = vcmp.lt.s32.totalorder %v169, %v4810
    %vm4826 = vcmp.lt.s32.totalorder %v170, %v4811
    %vm4827 = vcmp.lt.s32.totalorder %v171, %v4811
    %v4828 = vsel %vm4812, 1, 0
    %v4829 = vsel %vm4813, 1, 0
    %v4830 = vsel %vm4814, 1, 0
    %v4831 = vsel %vm4815, 1, 0
    %v4832 = vsel %vm4816, 1, 0
    %v4833 = vsel %vm4817, 1, 0
    %v4834 = vsel %vm4818, 1, 0
    %v4835 = vsel %vm4819, 1, 0
    %v4836 = vsel %vm4820, 1, 0
    %v4837 = vsel %vm4821, 1, 0
    %v4838 = vsel %vm4822, 1, 0
    %v4839 = vsel %vm4823, 1, 0
    %v4840 = vsel %vm4824, 1, 0
    %v4841 = vsel %vm4825, 1, 0
    %v4842 = vsel %vm4826, 1, 0
    %v4843 = vsel %vm4827, 1, 0
    %v4844 = vadd.s32 %v4828, %v4829
    %v4845 = vand.u32 %v4844, 65535
    %v4846 = vshrl.u32 %v4844, 16
    %v4847 = vcvt.s32.f32 %v4845
    %v4848 = vcvt.s32.f32 %v4846
    %4849 = vadd.xlane.f32.xlu0 %v4847
    %v4850 = vpop.xlane.xlu0 %4849
    %4851 = vadd.xlane.f32.xlu0 %v4848
    %v4852 = vpop.xlane.xlu0 %4851
    %v4853 = vcvt.f32.s32 %v4850
    %v4854 = vcvt.f32.s32 %v4852
    %v4855 = vshll.u32 %v4854, 16
    %v4856 = vadd.s32 %v4855, %v4853
    %v4857 = vadd.s32 %v4830, %v4831
    %v4858 = vand.u32 %v4857, 65535
    %v4859 = vshrl.u32 %v4857, 16
    %v4860 = vcvt.s32.f32 %v4858
    %v4861 = vcvt.s32.f32 %v4859
    %4862 = vadd.xlane.f32.xlu0 %v4860
    %v4863 = vpop.xlane.xlu0 %4862
    %4864 = vadd.xlane.f32.xlu0 %v4861
    %v4865 = vpop.xlane.xlu0 %4864
    %v4866 = vcvt.f32.s32 %v4863
    %v4867 = vcvt.f32.s32 %v4865
    %v4868 = vshll.u32 %v4867, 16
    %v4869 = vadd.s32 %v4868, %v4866
    %v4870 = vadd.s32 %v4832, %v4833
    %v4871 = vand.u32 %v4870, 65535
    %v4872 = vshrl.u32 %v4870, 16
    %v4873 = vcvt.s32.f32 %v4871
    %v4874 = vcvt.s32.f32 %v4872
    %4875 = vadd.xlane.f32.xlu0 %v4873
    %v4876 = vpop.xlane.xlu0 %4875
    %4877 = vadd.xlane.f32.xlu0 %v4874
    %v4878 = vpop.xlane.xlu0 %4877
    %v4879 = vcvt.f32.s32 %v4876
    %v4880 = vcvt.f32.s32 %v4878
    %v4881 = vshll.u32 %v4880, 16
    %v4882 = vadd.s32 %v4881, %v4879
    %v4883 = vadd.s32 %v4834, %v4835
    %v4884 = vand.u32 %v4883, 65535
    %v4885 = vshrl.u32 %v4883, 16
    %v4886 = vcvt.s32.f32 %v4884
    %v4887 = vcvt.s32.f32 %v4885
    %4888 = vadd.xlane.f32.xlu0 %v4886
    %v4889 = vpop.xlane.xlu0 %4888
    %4890 = vadd.xlane.f32.xlu0 %v4887
    %v4891 = vpop.xlane.xlu0 %4890
    %v4892 = vcvt.f32.s32 %v4889
    %v4893 = vcvt.f32.s32 %v4891
    %v4894 = vshll.u32 %v4893, 16
    %v4895 = vadd.s32 %v4894, %v4892
    %v4896 = vadd.s32 %v4836, %v4837
    %v4897 = vand.u32 %v4896, 65535
    %v4898 = vshrl.u32 %v4896, 16
    %v4899 = vcvt.s32.f32 %v4897
    %v4900 = vcvt.s32.f32 %v4898
    %4901 = vadd.xlane.f32.xlu0 %v4899
    %v4902 = vpop.xlane.xlu0 %4901
    %4903 = vadd.xlane.f32.xlu0 %v4900
    %v4904 = vpop.xlane.xlu0 %4903
    %v4905 = vcvt.f32.s32 %v4902
    %v4906 = vcvt.f32.s32 %v4904
    %v4907 = vshll.u32 %v4906, 16
    %v4908 = vadd.s32 %v4907, %v4905
    %v4909 = vadd.s32 %v4838, %v4839
    %v4910 = vand.u32 %v4909, 65535
    %v4911 = vshrl.u32 %v4909, 16
    %v4912 = vcvt.s32.f32 %v4910
    %v4913 = vcvt.s32.f32 %v4911
    %4914 = vadd.xlane.f32.xlu0 %v4912
    %v4915 = vpop.xlane.xlu0 %4914
    %4916 = vadd.xlane.f32.xlu0 %v4913
    %v4917 = vpop.xlane.xlu0 %4916
    %v4918 = vcvt.f32.s32 %v4915
    %v4919 = vcvt.f32.s32 %v4917
    %v4920 = vshll.u32 %v4919, 16
    %v4921 = vadd.s32 %v4920, %v4918
    %v4922 = vadd.s32 %v4840, %v4841
    %v4923 = vand.u32 %v4922, 65535
    %v4924 = vshrl.u32 %v4922, 16
    %v4925 = vcvt.s32.f32 %v4923
    %v4926 = vcvt.s32.f32 %v4924
    %4927 = vadd.xlane.f32.xlu0 %v4925
    %v4928 = vpop.xlane.xlu0 %4927
    %4929 = vadd.xlane.f32.xlu0 %v4926
    %v4930 = vpop.xlane.xlu0 %4929
    %v4931 = vcvt.f32.s32 %v4928
    %v4932 = vcvt.f32.s32 %v4930
    %v4933 = vshll.u32 %v4932, 16
    %v4934 = vadd.s32 %v4933, %v4931
    %v4935 = vadd.s32 %v4842, %v4843
    %v4936 = vand.u32 %v4935, 65535
    %v4937 = vshrl.u32 %v4935, 16
    %v4938 = vcvt.s32.f32 %v4936
    %v4939 = vcvt.s32.f32 %v4937
    %4940 = vadd.xlane.f32.xlu0 %v4938
    %v4941 = vpop.xlane.xlu0 %4940
    %4942 = vadd.xlane.f32.xlu0 %v4939
    %v4943 = vpop.xlane.xlu0 %4942
    %v4944 = vcvt.f32.s32 %v4941
    %v4945 = vcvt.f32.s32 %v4943
    %v4946 = vshll.u32 %v4945, 16
    %v4947 = vadd.s32 %v4946, %v4944
    %vm4948 = vcmp.le.s32.totalorder %v4856, 127
    %vm4949 = vcmp.le.s32.totalorder %v4869, 127
    %vm4950 = vcmp.le.s32.totalorder %v4882, 127
    %vm4951 = vcmp.le.s32.totalorder %v4895, 127
    %vm4952 = vcmp.le.s32.totalorder %v4908, 127
    %vm4953 = vcmp.le.s32.totalorder %v4921, 127
    %vm4954 = vcmp.le.s32.totalorder %v4934, 127
    %vm4955 = vcmp.le.s32.totalorder %v4947, 127
    %v4956 = vsel %vm4948, %v4804, %v4796
    %v4957 = vsel %vm4949, %v4805, %v4797
    %v4958 = vsel %vm4950, %v4806, %v4798
    %v4959 = vsel %vm4951, %v4807, %v4799
    %v4960 = vsel %vm4952, %v4808, %v4800
    %v4961 = vsel %vm4953, %v4809, %v4801
    %v4962 = vsel %vm4954, %v4810, %v4802
    %v4963 = vsel %vm4955, %v4811, %v4803
    %v4964 = vor.u32 %v4956, 2
    %v4965 = vor.u32 %v4957, 2
    %v4966 = vor.u32 %v4958, 2
    %v4967 = vor.u32 %v4959, 2
    %v4968 = vor.u32 %v4960, 2
    %v4969 = vor.u32 %v4961, 2
    %v4970 = vor.u32 %v4962, 2
    %v4971 = vor.u32 %v4963, 2
    %vm4972 = vcmp.lt.s32.totalorder %v156, %v4964
    %vm4973 = vcmp.lt.s32.totalorder %v157, %v4964
    %vm4974 = vcmp.lt.s32.totalorder %v158, %v4965
    %vm4975 = vcmp.lt.s32.totalorder %v159, %v4965
    %vm4976 = vcmp.lt.s32.totalorder %v160, %v4966
    %vm4977 = vcmp.lt.s32.totalorder %v161, %v4966
    %vm4978 = vcmp.lt.s32.totalorder %v162, %v4967
    %vm4979 = vcmp.lt.s32.totalorder %v163, %v4967
    %vm4980 = vcmp.lt.s32.totalorder %v164, %v4968
    %vm4981 = vcmp.lt.s32.totalorder %v165, %v4968
    %vm4982 = vcmp.lt.s32.totalorder %v166, %v4969
    %vm4983 = vcmp.lt.s32.totalorder %v167, %v4969
    %vm4984 = vcmp.lt.s32.totalorder %v168, %v4970
    %vm4985 = vcmp.lt.s32.totalorder %v169, %v4970
    %vm4986 = vcmp.lt.s32.totalorder %v170, %v4971
    %vm4987 = vcmp.lt.s32.totalorder %v171, %v4971
    %v4988 = vsel %vm4972, 1, 0
    %v4989 = vsel %vm4973, 1, 0
    %v4990 = vsel %vm4974, 1, 0
    %v4991 = vsel %vm4975, 1, 0
    %v4992 = vsel %vm4976, 1, 0
    %v4993 = vsel %vm4977, 1, 0
    %v4994 = vsel %vm4978, 1, 0
    %v4995 = vsel %vm4979, 1, 0
    %v4996 = vsel %vm4980, 1, 0
    %v4997 = vsel %vm4981, 1, 0
    %v4998 = vsel %vm4982, 1, 0
    %v4999 = vsel %vm4983, 1, 0
    %v5000 = vsel %vm4984, 1, 0
    %v5001 = vsel %vm4985, 1, 0
    %v5002 = vsel %vm4986, 1, 0
    %v5003 = vsel %vm4987, 1, 0
    %v5004 = vadd.s32 %v4988, %v4989
    %v5005 = vand.u32 %v5004, 65535
    %v5006 = vshrl.u32 %v5004, 16
    %v5007 = vcvt.s32.f32 %v5005
    %v5008 = vcvt.s32.f32 %v5006
    %5009 = vadd.xlane.f32.xlu0 %v5007
    %v5010 = vpop.xlane.xlu0 %5009
    %5011 = vadd.xlane.f32.xlu0 %v5008
    %v5012 = vpop.xlane.xlu0 %5011
    %v5013 = vcvt.f32.s32 %v5010
    %v5014 = vcvt.f32.s32 %v5012
    %v5015 = vshll.u32 %v5014, 16
    %v5016 = vadd.s32 %v5015, %v5013
    %v5017 = vadd.s32 %v4990, %v4991
    %v5018 = vand.u32 %v5017, 65535
    %v5019 = vshrl.u32 %v5017, 16
    %v5020 = vcvt.s32.f32 %v5018
    %v5021 = vcvt.s32.f32 %v5019
    %5022 = vadd.xlane.f32.xlu0 %v5020
    %v5023 = vpop.xlane.xlu0 %5022
    %5024 = vadd.xlane.f32.xlu0 %v5021
    %v5025 = vpop.xlane.xlu0 %5024
    %v5026 = vcvt.f32.s32 %v5023
    %v5027 = vcvt.f32.s32 %v5025
    %v5028 = vshll.u32 %v5027, 16
    %v5029 = vadd.s32 %v5028, %v5026
    %v5030 = vadd.s32 %v4992, %v4993
    %v5031 = vand.u32 %v5030, 65535
    %v5032 = vshrl.u32 %v5030, 16
    %v5033 = vcvt.s32.f32 %v5031
    %v5034 = vcvt.s32.f32 %v5032
    %5035 = vadd.xlane.f32.xlu0 %v5033
    %v5036 = vpop.xlane.xlu0 %5035
    %5037 = vadd.xlane.f32.xlu0 %v5034
    %v5038 = vpop.xlane.xlu0 %5037
    %v5039 = vcvt.f32.s32 %v5036
    %v5040 = vcvt.f32.s32 %v5038
    %v5041 = vshll.u32 %v5040, 16
    %v5042 = vadd.s32 %v5041, %v5039
    %v5043 = vadd.s32 %v4994, %v4995
    %v5044 = vand.u32 %v5043, 65535
    %v5045 = vshrl.u32 %v5043, 16
    %v5046 = vcvt.s32.f32 %v5044
    %v5047 = vcvt.s32.f32 %v5045
    %5048 = vadd.xlane.f32.xlu0 %v5046
    %v5049 = vpop.xlane.xlu0 %5048
    %5050 = vadd.xlane.f32.xlu0 %v5047
    %v5051 = vpop.xlane.xlu0 %5050
    %v5052 = vcvt.f32.s32 %v5049
    %v5053 = vcvt.f32.s32 %v5051
    %v5054 = vshll.u32 %v5053, 16
    %v5055 = vadd.s32 %v5054, %v5052
    %v5056 = vadd.s32 %v4996, %v4997
    %v5057 = vand.u32 %v5056, 65535
    %v5058 = vshrl.u32 %v5056, 16
    %v5059 = vcvt.s32.f32 %v5057
    %v5060 = vcvt.s32.f32 %v5058
    %5061 = vadd.xlane.f32.xlu0 %v5059
    %v5062 = vpop.xlane.xlu0 %5061
    %5063 = vadd.xlane.f32.xlu0 %v5060
    %v5064 = vpop.xlane.xlu0 %5063
    %v5065 = vcvt.f32.s32 %v5062
    %v5066 = vcvt.f32.s32 %v5064
    %v5067 = vshll.u32 %v5066, 16
    %v5068 = vadd.s32 %v5067, %v5065
    %v5069 = vadd.s32 %v4998, %v4999
    %v5070 = vand.u32 %v5069, 65535
    %v5071 = vshrl.u32 %v5069, 16
    %v5072 = vcvt.s32.f32 %v5070
    %v5073 = vcvt.s32.f32 %v5071
    %5074 = vadd.xlane.f32.xlu0 %v5072
    %v5075 = vpop.xlane.xlu0 %5074
    %5076 = vadd.xlane.f32.xlu0 %v5073
    %v5077 = vpop.xlane.xlu0 %5076
    %v5078 = vcvt.f32.s32 %v5075
    %v5079 = vcvt.f32.s32 %v5077
    %v5080 = vshll.u32 %v5079, 16
    %v5081 = vadd.s32 %v5080, %v5078
    %v5082 = vadd.s32 %v5000, %v5001
    %v5083 = vand.u32 %v5082, 65535
    %v5084 = vshrl.u32 %v5082, 16
    %v5085 = vcvt.s32.f32 %v5083
    %v5086 = vcvt.s32.f32 %v5084
    %5087 = vadd.xlane.f32.xlu0 %v5085
    %v5088 = vpop.xlane.xlu0 %5087
    %5089 = vadd.xlane.f32.xlu0 %v5086
    %v5090 = vpop.xlane.xlu0 %5089
    %v5091 = vcvt.f32.s32 %v5088
    %v5092 = vcvt.f32.s32 %v5090
    %v5093 = vshll.u32 %v5092, 16
    %v5094 = vadd.s32 %v5093, %v5091
    %v5095 = vadd.s32 %v5002, %v5003
    %v5096 = vand.u32 %v5095, 65535
    %v5097 = vshrl.u32 %v5095, 16
    %v5098 = vcvt.s32.f32 %v5096
    %v5099 = vcvt.s32.f32 %v5097
    %5100 = vadd.xlane.f32.xlu0 %v5098
    %v5101 = vpop.xlane.xlu0 %5100
    %5102 = vadd.xlane.f32.xlu0 %v5099
    %v5103 = vpop.xlane.xlu0 %5102
    %v5104 = vcvt.f32.s32 %v5101
    %v5105 = vcvt.f32.s32 %v5103
    %v5106 = vshll.u32 %v5105, 16
    %v5107 = vadd.s32 %v5106, %v5104
    %vm5108 = vcmp.le.s32.totalorder %v5016, 127
    %vm5109 = vcmp.le.s32.totalorder %v5029, 127
    %vm5110 = vcmp.le.s32.totalorder %v5042, 127
    %vm5111 = vcmp.le.s32.totalorder %v5055, 127
    %vm5112 = vcmp.le.s32.totalorder %v5068, 127
    %vm5113 = vcmp.le.s32.totalorder %v5081, 127
    %vm5114 = vcmp.le.s32.totalorder %v5094, 127
    %vm5115 = vcmp.le.s32.totalorder %v5107, 127
    %v5116 = vsel %vm5108, %v4964, %v4956
    %v5117 = vsel %vm5109, %v4965, %v4957
    %v5118 = vsel %vm5110, %v4966, %v4958
    %v5119 = vsel %vm5111, %v4967, %v4959
    %v5120 = vsel %vm5112, %v4968, %v4960
    %v5121 = vsel %vm5113, %v4969, %v4961
    %v5122 = vsel %vm5114, %v4970, %v4962
    %v5123 = vsel %vm5115, %v4971, %v4963
    %v5124 = vor.u32 %v5116, 1
    %v5125 = vor.u32 %v5117, 1
    %v5126 = vor.u32 %v5118, 1
    %v5127 = vor.u32 %v5119, 1
    %v5128 = vor.u32 %v5120, 1
    %v5129 = vor.u32 %v5121, 1
    %v5130 = vor.u32 %v5122, 1
    %v5131 = vor.u32 %v5123, 1
    %vm5132 = vcmp.lt.s32.totalorder %v156, %v5124
    %vm5133 = vcmp.lt.s32.totalorder %v157, %v5124
    %vm5134 = vcmp.lt.s32.totalorder %v158, %v5125
    %vm5135 = vcmp.lt.s32.totalorder %v159, %v5125
    %vm5136 = vcmp.lt.s32.totalorder %v160, %v5126
    %vm5137 = vcmp.lt.s32.totalorder %v161, %v5126
    %vm5138 = vcmp.lt.s32.totalorder %v162, %v5127
    %vm5139 = vcmp.lt.s32.totalorder %v163, %v5127
    %vm5140 = vcmp.lt.s32.totalorder %v164, %v5128
    %vm5141 = vcmp.lt.s32.totalorder %v165, %v5128
    %vm5142 = vcmp.lt.s32.totalorder %v166, %v5129
    %vm5143 = vcmp.lt.s32.totalorder %v167, %v5129
    %vm5144 = vcmp.lt.s32.totalorder %v168, %v5130
    %vm5145 = vcmp.lt.s32.totalorder %v169, %v5130
    %vm5146 = vcmp.lt.s32.totalorder %v170, %v5131
    %vm5147 = vcmp.lt.s32.totalorder %v171, %v5131
    %v5148 = vsel %vm5132, 1, 0
    %v5149 = vsel %vm5133, 1, 0
    %v5150 = vsel %vm5134, 1, 0
    %v5151 = vsel %vm5135, 1, 0
    %v5152 = vsel %vm5136, 1, 0
    %v5153 = vsel %vm5137, 1, 0
    %v5154 = vsel %vm5138, 1, 0
    %v5155 = vsel %vm5139, 1, 0
    %v5156 = vsel %vm5140, 1, 0
    %v5157 = vsel %vm5141, 1, 0
    %v5158 = vsel %vm5142, 1, 0
    %v5159 = vsel %vm5143, 1, 0
    %v5160 = vsel %vm5144, 1, 0
    %v5161 = vsel %vm5145, 1, 0
    %v5162 = vsel %vm5146, 1, 0
    %v5163 = vsel %vm5147, 1, 0
    %v5164 = vadd.s32 %v5148, %v5149
    %v5165 = vand.u32 %v5164, 65535
    %v5166 = vshrl.u32 %v5164, 16
    %v5167 = vcvt.s32.f32 %v5165
    %v5168 = vcvt.s32.f32 %v5166
    %5169 = vadd.xlane.f32.xlu0 %v5167
    %v5170 = vpop.xlane.xlu0 %5169
    %5171 = vadd.xlane.f32.xlu0 %v5168
    %v5172 = vpop.xlane.xlu0 %5171
    %v5173 = vcvt.f32.s32 %v5170
    %v5174 = vcvt.f32.s32 %v5172
    %v5175 = vshll.u32 %v5174, 16
    %v5176 = vadd.s32 %v5175, %v5173
    %v5177 = vadd.s32 %v5150, %v5151
    %v5178 = vand.u32 %v5177, 65535
    %v5179 = vshrl.u32 %v5177, 16
    %v5180 = vcvt.s32.f32 %v5178
    %v5181 = vcvt.s32.f32 %v5179
    %5182 = vadd.xlane.f32.xlu0 %v5180
    %v5183 = vpop.xlane.xlu0 %5182
    %5184 = vadd.xlane.f32.xlu0 %v5181
    %v5185 = vpop.xlane.xlu0 %5184
    %v5186 = vcvt.f32.s32 %v5183
    %v5187 = vcvt.f32.s32 %v5185
    %v5188 = vshll.u32 %v5187, 16
    %v5189 = vadd.s32 %v5188, %v5186
    %v5190 = vadd.s32 %v5152, %v5153
    %v5191 = vand.u32 %v5190, 65535
    %v5192 = vshrl.u32 %v5190, 16
    %v5193 = vcvt.s32.f32 %v5191
    %v5194 = vcvt.s32.f32 %v5192
    %5195 = vadd.xlane.f32.xlu0 %v5193
    %v5196 = vpop.xlane.xlu0 %5195
    %5197 = vadd.xlane.f32.xlu0 %v5194
    %v5198 = vpop.xlane.xlu0 %5197
    %v5199 = vcvt.f32.s32 %v5196
    %v5200 = vcvt.f32.s32 %v5198
    %v5201 = vshll.u32 %v5200, 16
    %v5202 = vadd.s32 %v5201, %v5199
    %v5203 = vadd.s32 %v5154, %v5155
    %v5204 = vand.u32 %v5203, 65535
    %v5205 = vshrl.u32 %v5203, 16
    %v5206 = vcvt.s32.f32 %v5204
    %v5207 = vcvt.s32.f32 %v5205
    %5208 = vadd.xlane.f32.xlu0 %v5206
    %v5209 = vpop.xlane.xlu0 %5208
    %5210 = vadd.xlane.f32.xlu0 %v5207
    %v5211 = vpop.xlane.xlu0 %5210
    %v5212 = vcvt.f32.s32 %v5209
    %v5213 = vcvt.f32.s32 %v5211
    %v5214 = vshll.u32 %v5213, 16
    %v5215 = vadd.s32 %v5214, %v5212
    %v5216 = vadd.s32 %v5156, %v5157
    %v5217 = vand.u32 %v5216, 65535
    %v5218 = vshrl.u32 %v5216, 16
    %v5219 = vcvt.s32.f32 %v5217
    %v5220 = vcvt.s32.f32 %v5218
    %5221 = vadd.xlane.f32.xlu0 %v5219
    %v5222 = vpop.xlane.xlu0 %5221
    %5223 = vadd.xlane.f32.xlu0 %v5220
    %v5224 = vpop.xlane.xlu0 %5223
    %v5225 = vcvt.f32.s32 %v5222
    %v5226 = vcvt.f32.s32 %v5224
    %v5227 = vshll.u32 %v5226, 16
    %v5228 = vadd.s32 %v5227, %v5225
    %v5229 = vadd.s32 %v5158, %v5159
    %v5230 = vand.u32 %v5229, 65535
    %v5231 = vshrl.u32 %v5229, 16
    %v5232 = vcvt.s32.f32 %v5230
    %v5233 = vcvt.s32.f32 %v5231
    %5234 = vadd.xlane.f32.xlu0 %v5232
    %v5235 = vpop.xlane.xlu0 %5234
    %5236 = vadd.xlane.f32.xlu0 %v5233
    %v5237 = vpop.xlane.xlu0 %5236
    %v5238 = vcvt.f32.s32 %v5235
    %v5239 = vcvt.f32.s32 %v5237
    %v5240 = vshll.u32 %v5239, 16
    %v5241 = vadd.s32 %v5240, %v5238
    %v5242 = vadd.s32 %v5160, %v5161
    %v5243 = vand.u32 %v5242, 65535
    %v5244 = vshrl.u32 %v5242, 16
    %v5245 = vcvt.s32.f32 %v5243
    %v5246 = vcvt.s32.f32 %v5244
    %5247 = vadd.xlane.f32.xlu0 %v5245
    %v5248 = vpop.xlane.xlu0 %5247
    %5249 = vadd.xlane.f32.xlu0 %v5246
    %v5250 = vpop.xlane.xlu0 %5249
    %v5251 = vcvt.f32.s32 %v5248
    %v5252 = vcvt.f32.s32 %v5250
    %v5253 = vshll.u32 %v5252, 16
    %v5254 = vadd.s32 %v5253, %v5251
    %v5255 = vadd.s32 %v5162, %v5163
    %v5256 = vand.u32 %v5255, 65535
    %v5257 = vshrl.u32 %v5255, 16
    %v5258 = vcvt.s32.f32 %v5256
    %v5259 = vcvt.s32.f32 %v5257
    %5260 = vadd.xlane.f32.xlu0 %v5258
    %v5261 = vpop.xlane.xlu0 %5260
    %5262 = vadd.xlane.f32.xlu0 %v5259
    %v5263 = vpop.xlane.xlu0 %5262
    %v5264 = vcvt.f32.s32 %v5261
    %v5265 = vcvt.f32.s32 %v5263
    %v5266 = vshll.u32 %v5265, 16
    %v5267 = vadd.s32 %v5266, %v5264
    %vm5268 = vcmp.le.s32.totalorder %v5176, 127
    %vm5269 = vcmp.le.s32.totalorder %v5189, 127
    %vm5270 = vcmp.le.s32.totalorder %v5202, 127
    %vm5271 = vcmp.le.s32.totalorder %v5215, 127
    %vm5272 = vcmp.le.s32.totalorder %v5228, 127
    %vm5273 = vcmp.le.s32.totalorder %v5241, 127
    %vm5274 = vcmp.le.s32.totalorder %v5254, 127
    %vm5275 = vcmp.le.s32.totalorder %v5267, 127
    %v5276 = vsel %vm5268, %v5124, %v5116
    %v5277 = vsel %vm5269, %v5125, %v5117
    %v5278 = vsel %vm5270, %v5126, %v5118
    %v5279 = vsel %vm5271, %v5127, %v5119
    %v5280 = vsel %vm5272, %v5128, %v5120
    %v5281 = vsel %vm5273, %v5129, %v5121
    %v5282 = vsel %vm5274, %v5130, %v5122
    %v5283 = vsel %vm5275, %v5131, %v5123
    %vm5284 = vcmp.eq.s32.totalorder %v156, %v5276
    %vm5285 = vcmp.eq.s32.totalorder %v157, %v5276
    %vm5286 = vcmp.eq.s32.totalorder %v158, %v5277
    %vm5287 = vcmp.eq.s32.totalorder %v159, %v5277
    %vm5288 = vcmp.eq.s32.totalorder %v160, %v5278
    %vm5289 = vcmp.eq.s32.totalorder %v161, %v5278
    %vm5290 = vcmp.eq.s32.totalorder %v162, %v5279
    %vm5291 = vcmp.eq.s32.totalorder %v163, %v5279
    %vm5292 = vcmp.eq.s32.totalorder %v164, %v5280
    %vm5293 = vcmp.eq.s32.totalorder %v165, %v5280
    %vm5294 = vcmp.eq.s32.totalorder %v166, %v5281
    %vm5295 = vcmp.eq.s32.totalorder %v167, %v5281
    %vm5296 = vcmp.eq.s32.totalorder %v168, %v5282
    %vm5297 = vcmp.eq.s32.totalorder %v169, %v5282
    %vm5298 = vcmp.eq.s32.totalorder %v170, %v5283
    %vm5299 = vcmp.eq.s32.totalorder %v171, %v5283
    %v5300 = vsel %vm5284, %v35, -inf
    %v5301 = vsel %vm5285, %v36, -inf
    %v5302 = vsel %vm5286, %v37, -inf
    %v5303 = vsel %vm5287, %v38, -inf
    %v5304 = vsel %vm5288, %v39, -inf
    %v5305 = vsel %vm5289, %v40, -inf
    %v5306 = vsel %vm5290, %v41, -inf
    %v5307 = vsel %vm5291, %v42, -inf
    %v5308 = vsel %vm5292, %v43, -inf
    %v5309 = vsel %vm5293, %v44, -inf
    %v5310 = vsel %vm5294, %v45, -inf
    %v5311 = vsel %vm5295, %v46, -inf
    %v5312 = vsel %vm5296, %v47, -inf
    %v5313 = vsel %vm5297, %v48, -inf
    %v5314 = vsel %vm5298, %v49, -inf
    %v5315 = vsel %vm5299, %v50, -inf
    %v5316 = vmax.f32 %v5300, %v5301
    %5317 = vmax.xlane.f32.xlu0 %v5316
    %v5318 = vpop.xlane.xlu0 %5317
    %v5319 = vmax.f32 %v5302, %v5303
    %5320 = vmax.xlane.f32.xlu0 %v5319
    %v5321 = vpop.xlane.xlu0 %5320
    %v5322 = vmax.f32 %v5304, %v5305
    %5323 = vmax.xlane.f32.xlu0 %v5322
    %v5324 = vpop.xlane.xlu0 %5323
    %v5325 = vmax.f32 %v5306, %v5307
    %5326 = vmax.xlane.f32.xlu0 %v5325
    %v5327 = vpop.xlane.xlu0 %5326
    %v5328 = vmax.f32 %v5308, %v5309
    %5329 = vmax.xlane.f32.xlu0 %v5328
    %v5330 = vpop.xlane.xlu0 %5329
    %v5331 = vmax.f32 %v5310, %v5311
    %5332 = vmax.xlane.f32.xlu0 %v5331
    %v5333 = vpop.xlane.xlu0 %5332
    %v5334 = vmax.f32 %v5312, %v5313
    %5335 = vmax.xlane.f32.xlu0 %v5334
    %v5336 = vpop.xlane.xlu0 %5335
    %v5337 = vmax.f32 %v5314, %v5315
    %5338 = vmax.xlane.f32.xlu0 %v5337
    %v5339 = vpop.xlane.xlu0 %5338
    %v5340 = vld [vmem:[%s1] sm:$0xff]
    %v5341 = vld [vmem:[%s1 + $0x8] sm:$0xff]
    %v5342 = vld [vmem:[%s1 + $0x10] sm:$0xff]
    %v5343 = vld [vmem:[%s1 + $0x18] sm:$0xff]
    %v5344 = vld [vmem:[%s2] sm:$0x1]
    %v5346 = vlaneseq
    %v5347 = vshrl.u32 %v5346, 7
    %v5348 = vsub.s32 0, %v5347
    %v5349 = vrot.slane %v5344, %v5348
    %v5359 = vlaneseq
    %v5360 = vand.u32 %v5359, 127
    %v5361 = vlaneseq
    %v5362 = vshrl.u32 %v5361, 7
    %v5363 = vsub.s32 %v5360, %v5362
    %v5364 = vrot.slane %v76, %v5363
    %v5365 = vadd.s32 %v5360, 4294967288
    %v5366 = vlaneseq
    %v5367 = vshrl.u32 %v5366, 7
    %v5368 = vsub.s32 %v5365, %v5367
    %v5369 = vrot.slane %v77, %v5368
    %vm5370 = vcmask 130112
    %v5371 = vsel %vm5370, %v5369, %v5364
    %v5372 = vadd.s32 %v5360, 4294967280
    %v5373 = vlaneseq
    %v5374 = vshrl.u32 %v5373, 7
    %v5375 = vsub.s32 %v5372, %v5374
    %v5376 = vrot.slane %v78, %v5375
    %vm5377 = vcmask 195712
    %v5378 = vsel %vm5377, %v5376, %v5371
    %v5379 = vadd.s32 %v5360, 4294967272
    %v5380 = vlaneseq
    %v5381 = vshrl.u32 %v5380, 7
    %v5382 = vsub.s32 %v5379, %v5381
    %v5383 = vrot.slane %v79, %v5382
    %vm5384 = vcmask 261312
    %v5385 = vsel %vm5384, %v5383, %v5378
    %v5386 = vlaneseq
    %v5387 = vshrl.u32 %v5386, 7
    %v5388 = vsub.s32 %v5360, %v5387
    %v5389 = vrot.slane %v80, %v5388
    %v5390 = vlaneseq
    %v5391 = vshrl.u32 %v5390, 7
    %v5392 = vsub.s32 %v5365, %v5391
    %v5393 = vrot.slane %v81, %v5392
    %v5394 = vsel %vm5370, %v5393, %v5389
    %v5395 = vlaneseq
    %v5396 = vshrl.u32 %v5395, 7
    %v5397 = vsub.s32 %v5372, %v5396
    %v5398 = vrot.slane %v82, %v5397
    %v5399 = vsel %vm5377, %v5398, %v5394
    %v5400 = vlaneseq
    %v5401 = vshrl.u32 %v5400, 7
    %v5402 = vsub.s32 %v5379, %v5401
    %v5403 = vrot.slane %v83, %v5402
    %v5404 = vsel %vm5384, %v5403, %v5399
    %vm5405 = vcmask 1041409
    %v5406 = vsel %vm5405, %v5404, %v5385
    %vm5407 = vcmask 261120
    %v5408 = vsel %vm5407, %v5406, 0
    %5410 = vmatprep.subr.mxu0 0.0
    %5411 = vmatpush1.msra.mxu0 %v5340
    %5412 = vmatprep.subr.mxu0 0.0
    %5413 = vmatpush1.msra.mxu0 %v5341
    %5414 = vmatprep.subr.mxu0 0.0
    %5415 = vmatpush1.msra.mxu0 %v5342
    %5416 = vmatprep.subr.mxu0 0.0
    %5417 = vmatpush1.msra.mxu0 %v5343
    %5418 = vmatprep.subr.mxu0 0.0
    %5419 = vmatpush1.msra.mxu0 0.0
    %5420 = vmatprep.subr.mxu0 0.0
    %5421 = vmatpush1.msra.mxu0 0.0
    %5422 = vmatprep.subr.mxu0 0.0
    %5423 = vmatpush1.msra.mxu0 0.0
    %5424 = vmatprep.subr.mxu0 0.0
    %5425 = vmatpush1.msra.mxu0 0.0
    %5426 = vmatprep.subr.mxu0 0.0
    %5427 = vmatpush1.msra.mxu0 0.0
    %5428 = vmatprep.subr.mxu0 0.0
    %5429 = vmatpush1.msra.mxu0 0.0
    %5430 = vmatprep.subr.mxu0 0.0
    %5431 = vmatpush1.msra.mxu0 0.0
    %5432 = vmatprep.subr.mxu0 0.0
    %5433 = vmatpush1.msra.mxu0 0.0
    %5434 = vmatprep.subr.mxu0 0.0
    %5435 = vmatpush1.msra.mxu0 0.0
    %5436 = vmatprep.subr.mxu0 0.0
    %5437 = vmatpush1.msra.mxu0 0.0
    %5438 = vmatprep.subr.mxu0 0.0
    %5439 = vmatpush1.msra.mxu0 0.0
    %5440 = vmatprep.subr.mxu0 0.0
    %5441 = vmatpush1.msra.mxu0 0.0
    %5442 = vmatprep.subr.mxu0 0.0
    %5443 = vmatpush1.msra.mxu0 0.0
    %5444 = vmatprep.subr.mxu0 0.0
    %5445 = vmatpush1.msra.mxu0 0.0
    %5446 = vmatprep.subr.mxu0 0.0
    %5447 = vmatpush1.msra.mxu0 0.0
    %5448 = vmatprep.subr.mxu0 0.0
    %5449 = vmatpush1.msra.mxu0 0.0
    %5450 = vmatprep.subr.mxu0 0.0
    %5451 = vmatpush1.msra.mxu0 0.0
    %5452 = vmatprep.subr.mxu0 0.0
    %5453 = vmatpush1.msra.mxu0 0.0
    %5454 = vmatprep.subr.mxu0 0.0
    %5455 = vmatpush1.msra.mxu0 0.0
    %5456 = vmatprep.subr.mxu0 0.0
    %5457 = vmatpush1.msra.mxu0 0.0
    %5458 = vmatprep.subr.mxu0 0.0
    %5459 = vmatpush1.msra.mxu0 0.0
    %5460 = vmatprep.subr.mxu0 0.0
    %5461 = vmatpush1.msra.mxu0 0.0
    %5462 = vmatprep.subr.mxu0 0.0
    %5463 = vmatpush1.msra.mxu0 0.0
    %5464 = vmatprep.subr.mxu0 0.0
    %5465 = vmatpush1.msra.mxu0 0.0
    %5466 = vmatprep.subr.mxu0 0.0
    %5467 = vmatpush1.msra.mxu0 0.0
    %5468 = vmatprep.subr.mxu0 0.0
    %5469 = vmatpush1.msra.mxu0 0.0
    %5470 = vmatprep.subr.mxu0 0.0
    %5471 = vmatpush1.msra.mxu0 0.0
    %5472 = vmatprep.subr.mxu0 0.0
    %5473 = vmatpush1.msra.mxu0 0.0
    %5474 = vmatprep.mubr.f32.mxu0 0.0
    %5475 = vmatmul.mubr.f32.gmra.mrb[0].mxu0 %v5408
    %v5476 = vpop.f32.mrb[0].mxu0
    %v5477 = vadd.f32 %v5349, %v5476
    %v5478 = vpop.f32.mrb[0].mxu0
    %5479 = vdwg.mxu0
    %v5480 = vmax.f32 %v5477, 0.0
    %v5489 = vlaneseq
    %v5490 = vshrl.u32 %v5489, 7
    %v5491 = vsub.s32 %v5360, %v5490
    %v5492 = vrot.slane %v86, %v5491
    %v5493 = vlaneseq
    %v5494 = vshrl.u32 %v5493, 7
    %v5495 = vsub.s32 %v5365, %v5494
    %v5496 = vrot.slane %v89, %v5495
    %v5497 = vsel %vm5370, %v5496, %v5492
    %v5498 = vlaneseq
    %v5499 = vshrl.u32 %v5498, 7
    %v5500 = vsub.s32 %v5372, %v5499
    %v5501 = vrot.slane %v92, %v5500
    %v5502 = vsel %vm5377, %v5501, %v5497
    %v5503 = vlaneseq
    %v5504 = vshrl.u32 %v5503, 7
    %v5505 = vsub.s32 %v5379, %v5504
    %v5506 = vrot.slane %v95, %v5505
    %v5507 = vsel %vm5384, %v5506, %v5502
    %v5508 = vlaneseq
    %v5509 = vshrl.u32 %v5508, 7
    %v5510 = vsub.s32 %v5360, %v5509
    %v5511 = vrot.slane %v98, %v5510
    %v5512 = vlaneseq
    %v5513 = vshrl.u32 %v5512, 7
    %v5514 = vsub.s32 %v5365, %v5513
    %v5515 = vrot.slane %v101, %v5514
    %v5516 = vsel %vm5370, %v5515, %v5511
    %v5517 = vlaneseq
    %v5518 = vshrl.u32 %v5517, 7
    %v5519 = vsub.s32 %v5372, %v5518
    %v5520 = vrot.slane %v104, %v5519
    %v5521 = vsel %vm5377, %v5520, %v5516
    %v5522 = vlaneseq
    %v5523 = vshrl.u32 %v5522, 7
    %v5524 = vsub.s32 %v5379, %v5523
    %v5525 = vrot.slane %v107, %v5524
    %v5526 = vsel %vm5384, %v5525, %v5521
    %v5527 = vsel %vm5405, %v5526, %v5507
    %v5528 = vsel %vm5407, %v5527, 0
    %5530 = vmatprep.subr.mxu0 0.0
    %5531 = vmatpush1.msra.mxu0 %v5340
    %5532 = vmatprep.subr.mxu0 0.0
    %5533 = vmatpush1.msra.mxu0 %v5341
    %5534 = vmatprep.subr.mxu0 0.0
    %5535 = vmatpush1.msra.mxu0 %v5342
    %5536 = vmatprep.subr.mxu0 0.0
    %5537 = vmatpush1.msra.mxu0 %v5343
    %5538 = vmatprep.subr.mxu0 0.0
    %5539 = vmatpush1.msra.mxu0 0.0
    %5540 = vmatprep.subr.mxu0 0.0
    %5541 = vmatpush1.msra.mxu0 0.0
    %5542 = vmatprep.subr.mxu0 0.0
    %5543 = vmatpush1.msra.mxu0 0.0
    %5544 = vmatprep.subr.mxu0 0.0
    %5545 = vmatpush1.msra.mxu0 0.0
    %5546 = vmatprep.subr.mxu0 0.0
    %5547 = vmatpush1.msra.mxu0 0.0
    %5548 = vmatprep.subr.mxu0 0.0
    %5549 = vmatpush1.msra.mxu0 0.0
    %5550 = vmatprep.subr.mxu0 0.0
    %5551 = vmatpush1.msra.mxu0 0.0
    %5552 = vmatprep.subr.mxu0 0.0
    %5553 = vmatpush1.msra.mxu0 0.0
    %5554 = vmatprep.subr.mxu0 0.0
    %5555 = vmatpush1.msra.mxu0 0.0
    %5556 = vmatprep.subr.mxu0 0.0
    %5557 = vmatpush1.msra.mxu0 0.0
    %5558 = vmatprep.subr.mxu0 0.0
    %5559 = vmatpush1.msra.mxu0 0.0
    %5560 = vmatprep.subr.mxu0 0.0
    %5561 = vmatpush1.msra.mxu0 0.0
    %5562 = vmatprep.subr.mxu0 0.0
    %5563 = vmatpush1.msra.mxu0 0.0
    %5564 = vmatprep.subr.mxu0 0.0
    %5565 = vmatpush1.msra.mxu0 0.0
    %5566 = vmatprep.subr.mxu0 0.0
    %5567 = vmatpush1.msra.mxu0 0.0
    %5568 = vmatprep.subr.mxu0 0.0
    %5569 = vmatpush1.msra.mxu0 0.0
    %5570 = vmatprep.subr.mxu0 0.0
    %5571 = vmatpush1.msra.mxu0 0.0
    %5572 = vmatprep.subr.mxu0 0.0
    %5573 = vmatpush1.msra.mxu0 0.0
    %5574 = vmatprep.subr.mxu0 0.0
    %5575 = vmatpush1.msra.mxu0 0.0
    %5576 = vmatprep.subr.mxu0 0.0
    %5577 = vmatpush1.msra.mxu0 0.0
    %5578 = vmatprep.subr.mxu0 0.0
    %5579 = vmatpush1.msra.mxu0 0.0
    %5580 = vmatprep.subr.mxu0 0.0
    %5581 = vmatpush1.msra.mxu0 0.0
    %5582 = vmatprep.subr.mxu0 0.0
    %5583 = vmatpush1.msra.mxu0 0.0
    %5584 = vmatprep.subr.mxu0 0.0
    %5585 = vmatpush1.msra.mxu0 0.0
    %5586 = vmatprep.subr.mxu0 0.0
    %5587 = vmatpush1.msra.mxu0 0.0
    %5588 = vmatprep.subr.mxu0 0.0
    %5589 = vmatpush1.msra.mxu0 0.0
    %5590 = vmatprep.subr.mxu0 0.0
    %5591 = vmatpush1.msra.mxu0 0.0
    %5592 = vmatprep.subr.mxu0 0.0
    %5593 = vmatpush1.msra.mxu0 0.0
    %5594 = vmatprep.mubr.f32.mxu0 0.0
    %5595 = vmatmul.mubr.f32.gmra.mrb[0].mxu0 %v5528
    %v5596 = vpop.f32.mrb[0].mxu0
    %v5597 = vadd.f32 %v5349, %v5596
    %v5598 = vpop.f32.mrb[0].mxu0
    %5599 = vdwg.mxu0
    %v5600 = vmax.f32 %v5597, 0.0
    %v5601 = vadd.f32 %v5480, %v5600
    %v5610 = vlaneseq
    %v5611 = vshrl.u32 %v5610, 7
    %v5612 = vsub.s32 %v5360, %v5611
    %v5613 = vrot.slane %v5318, %v5612
    %v5614 = vlaneseq
    %v5615 = vshrl.u32 %v5614, 7
    %v5616 = vsub.s32 %v5365, %v5615
    %v5617 = vrot.slane %v5321, %v5616
    %v5618 = vsel %vm5370, %v5617, %v5613
    %v5619 = vlaneseq
    %v5620 = vshrl.u32 %v5619, 7
    %v5621 = vsub.s32 %v5372, %v5620
    %v5622 = vrot.slane %v5324, %v5621
    %v5623 = vsel %vm5377, %v5622, %v5618
    %v5624 = vlaneseq
    %v5625 = vshrl.u32 %v5624, 7
    %v5626 = vsub.s32 %v5379, %v5625
    %v5627 = vrot.slane %v5327, %v5626
    %v5628 = vsel %vm5384, %v5627, %v5623
    %v5629 = vlaneseq
    %v5630 = vshrl.u32 %v5629, 7
    %v5631 = vsub.s32 %v5360, %v5630
    %v5632 = vrot.slane %v5330, %v5631
    %v5633 = vlaneseq
    %v5634 = vshrl.u32 %v5633, 7
    %v5635 = vsub.s32 %v5365, %v5634
    %v5636 = vrot.slane %v5333, %v5635
    %v5637 = vsel %vm5370, %v5636, %v5632
    %v5638 = vlaneseq
    %v5639 = vshrl.u32 %v5638, 7
    %v5640 = vsub.s32 %v5372, %v5639
    %v5641 = vrot.slane %v5336, %v5640
    %v5642 = vsel %vm5377, %v5641, %v5637
    %v5643 = vlaneseq
    %v5644 = vshrl.u32 %v5643, 7
    %v5645 = vsub.s32 %v5379, %v5644
    %v5646 = vrot.slane %v5339, %v5645
    %v5647 = vsel %vm5384, %v5646, %v5642
    %v5648 = vsel %vm5405, %v5647, %v5628
    %v5649 = vsel %vm5407, %v5648, 0
    %5651 = vmatprep.subr.mxu0 0.0
    %5652 = vmatpush1.msra.mxu0 %v5340
    %5653 = vmatprep.subr.mxu0 0.0
    %5654 = vmatpush1.msra.mxu0 %v5341
    %5655 = vmatprep.subr.mxu0 0.0
    %5656 = vmatpush1.msra.mxu0 %v5342
    %5657 = vmatprep.subr.mxu0 0.0
    %5658 = vmatpush1.msra.mxu0 %v5343
    %5659 = vmatprep.subr.mxu0 0.0
    %5660 = vmatpush1.msra.mxu0 0.0
    %5661 = vmatprep.subr.mxu0 0.0
    %5662 = vmatpush1.msra.mxu0 0.0
    %5663 = vmatprep.subr.mxu0 0.0
    %5664 = vmatpush1.msra.mxu0 0.0
    %5665 = vmatprep.subr.mxu0 0.0
    %5666 = vmatpush1.msra.mxu0 0.0
    %5667 = vmatprep.subr.mxu0 0.0
    %5668 = vmatpush1.msra.mxu0 0.0
    %5669 = vmatprep.subr.mxu0 0.0
    %5670 = vmatpush1.msra.mxu0 0.0
    %5671 = vmatprep.subr.mxu0 0.0
    %5672 = vmatpush1.msra.mxu0 0.0
    %5673 = vmatprep.subr.mxu0 0.0
    %5674 = vmatpush1.msra.mxu0 0.0
    %5675 = vmatprep.subr.mxu0 0.0
    %5676 = vmatpush1.msra.mxu0 0.0
    %5677 = vmatprep.subr.mxu0 0.0
    %5678 = vmatpush1.msra.mxu0 0.0
    %5679 = vmatprep.subr.mxu0 0.0
    %5680 = vmatpush1.msra.mxu0 0.0
    %5681 = vmatprep.subr.mxu0 0.0
    %5682 = vmatpush1.msra.mxu0 0.0
    %5683 = vmatprep.subr.mxu0 0.0
    %5684 = vmatpush1.msra.mxu0 0.0
    %5685 = vmatprep.subr.mxu0 0.0
    %5686 = vmatpush1.msra.mxu0 0.0
    %5687 = vmatprep.subr.mxu0 0.0
    %5688 = vmatpush1.msra.mxu0 0.0
    %5689 = vmatprep.subr.mxu0 0.0
    %5690 = vmatpush1.msra.mxu0 0.0
    %5691 = vmatprep.subr.mxu0 0.0
    %5692 = vmatpush1.msra.mxu0 0.0
    %5693 = vmatprep.subr.mxu0 0.0
    %5694 = vmatpush1.msra.mxu0 0.0
    %5695 = vmatprep.subr.mxu0 0.0
    %5696 = vmatpush1.msra.mxu0 0.0
    %5697 = vmatprep.subr.mxu0 0.0
    %5698 = vmatpush1.msra.mxu0 0.0
    %5699 = vmatprep.subr.mxu0 0.0
    %5700 = vmatpush1.msra.mxu0 0.0
    %5701 = vmatprep.subr.mxu0 0.0
    %5702 = vmatpush1.msra.mxu0 0.0
    %5703 = vmatprep.subr.mxu0 0.0
    %5704 = vmatpush1.msra.mxu0 0.0
    %5705 = vmatprep.subr.mxu0 0.0
    %5706 = vmatpush1.msra.mxu0 0.0
    %5707 = vmatprep.subr.mxu0 0.0
    %5708 = vmatpush1.msra.mxu0 0.0
    %5709 = vmatprep.subr.mxu0 0.0
    %5710 = vmatpush1.msra.mxu0 0.0
    %5711 = vmatprep.subr.mxu0 0.0
    %5712 = vmatpush1.msra.mxu0 0.0
    %5713 = vmatprep.subr.mxu0 0.0
    %5714 = vmatpush1.msra.mxu0 0.0
    %5715 = vmatprep.mubr.f32.mxu0 0.0
    %5716 = vmatmul.mubr.f32.gmra.mrb[0].mxu0 %v5649
    %v5717 = vpop.f32.mrb[0].mxu0
    %v5718 = vadd.f32 %v5349, %v5717
    %v5719 = vpop.f32.mrb[0].mxu0
    %5720 = vdwg.mxu0
    %v5721 = vmax.f32 %v5718, 0.0
    %v5722 = vadd.f32 %v5601, %v5721
    %v5723 = vld [vmem:[%s3] sm:$0x3]
    %v5724 = vld [vmem:[%s4] sm:$0x1]
    %v5725 = vmul.f32 %v5724, 3.0
    %v5727 = vlaneseq
    %v5728 = vshrl.u32 %v5727, 7
    %v5729 = vsub.s32 0, %v5728
    %v5730 = vrot.slane %v5725, %v5729
    %vm5732 = vcmask 15360
    %v5734 = vsel %vm5732, %v5722, 0
    %vm5736 = vcmask 1041408
    %v5738 = vsel %vm5736, %v5723, 0
    %5740 = vmatprep.subr.mxu0 0.0
    %5741 = vmatpush1.msra.mxu0 %v5738
    %5742 = vmatprep.subr.mxu0 0.0
    %5743 = vmatpush1.msra.mxu0 0.0
    %5744 = vmatprep.subr.mxu0 0.0
    %5745 = vmatpush1.msra.mxu0 0.0
    %5746 = vmatprep.subr.mxu0 0.0
    %5747 = vmatpush1.msra.mxu0 0.0
    %5748 = vmatprep.subr.mxu0 0.0
    %5749 = vmatpush1.msra.mxu0 0.0
    %5750 = vmatprep.subr.mxu0 0.0
    %5751 = vmatpush1.msra.mxu0 0.0
    %5752 = vmatprep.subr.mxu0 0.0
    %5753 = vmatpush1.msra.mxu0 0.0
    %5754 = vmatprep.subr.mxu0 0.0
    %5755 = vmatpush1.msra.mxu0 0.0
    %5756 = vmatprep.subr.mxu0 0.0
    %5757 = vmatpush1.msra.mxu0 0.0
    %5758 = vmatprep.subr.mxu0 0.0
    %5759 = vmatpush1.msra.mxu0 0.0
    %5760 = vmatprep.subr.mxu0 0.0
    %5761 = vmatpush1.msra.mxu0 0.0
    %5762 = vmatprep.subr.mxu0 0.0
    %5763 = vmatpush1.msra.mxu0 0.0
    %5764 = vmatprep.subr.mxu0 0.0
    %5765 = vmatpush1.msra.mxu0 0.0
    %5766 = vmatprep.subr.mxu0 0.0
    %5767 = vmatpush1.msra.mxu0 0.0
    %5768 = vmatprep.subr.mxu0 0.0
    %5769 = vmatpush1.msra.mxu0 0.0
    %5770 = vmatprep.subr.mxu0 0.0
    %5771 = vmatpush1.msra.mxu0 0.0
    %5772 = vmatprep.subr.mxu0 0.0
    %5773 = vmatpush1.msra.mxu0 0.0
    %5774 = vmatprep.subr.mxu0 0.0
    %5775 = vmatpush1.msra.mxu0 0.0
    %5776 = vmatprep.subr.mxu0 0.0
    %5777 = vmatpush1.msra.mxu0 0.0
    %5778 = vmatprep.subr.mxu0 0.0
    %5779 = vmatpush1.msra.mxu0 0.0
    %5780 = vmatprep.subr.mxu0 0.0
    %5781 = vmatpush1.msra.mxu0 0.0
    %5782 = vmatprep.subr.mxu0 0.0
    %5783 = vmatpush1.msra.mxu0 0.0
    %5784 = vmatprep.subr.mxu0 0.0
    %5785 = vmatpush1.msra.mxu0 0.0
    %5786 = vmatprep.subr.mxu0 0.0
    %5787 = vmatpush1.msra.mxu0 0.0
    %5788 = vmatprep.subr.mxu0 0.0
    %5789 = vmatpush1.msra.mxu0 0.0
    %5790 = vmatprep.subr.mxu0 0.0
    %5791 = vmatpush1.msra.mxu0 0.0
    %5792 = vmatprep.subr.mxu0 0.0
    %5793 = vmatpush1.msra.mxu0 0.0
    %5794 = vmatprep.subr.mxu0 0.0
    %5795 = vmatpush1.msra.mxu0 0.0
    %5796 = vmatprep.subr.mxu0 0.0
    %5797 = vmatpush1.msra.mxu0 0.0
    %5798 = vmatprep.subr.mxu0 0.0
    %5799 = vmatpush1.msra.mxu0 0.0
    %5800 = vmatprep.subr.mxu0 0.0
    %5801 = vmatpush1.msra.mxu0 0.0
    %5802 = vmatprep.subr.mxu0 0.0
    %5803 = vmatpush1.msra.mxu0 0.0
    %5804 = vmatprep.mubr.f32.mxu0 0.0
    %5805 = vmatmul.mubr.f32.gmra.mrb[0].mxu0 %v5734
    %v5806 = vpop.f32.mrb[0].mxu0
    %v5807 = vadd.f32 %v5730, %v5806
    %v5808 = vpop.f32.mrb[0].mxu0
    %5809 = vdwg.mxu0
    %v5810 = vxor.u32 %v5807, 2147483648
    %v5811 = vmul.f32 %v5810, 1.442695
    %v5812 = vpow.pop %v5811
    %v5813 = vadd.f32 %v5812, 1.0
    %v5814 = vrcp.pop %v5813
    %v5815 = vmul.f32 1.0, %v5814
    %v5818 = vunpack.c.l.s4 1966171168
    %v5819 = vunpack.c.0.s8 %v5818
    %v5820 = vlaneseq
    %v5821 = vshrl.u32 %v5820, 7
    %v5822 = vsub.s32 %v5819, %v5821
    %v5823 = vrot.slane %v5815, %v5822
    %v5824 = vcombine.high %v5823, %v5823
    %v5826 = vunpack.c.l.s4 1966171168
    %v5827 = vunpack.c.0.s8 %v5826
    %v5828 = vlaneseq
    %v5829 = vshrl.u32 %v5828, 7
    %v5830 = vsub.s32 %v5827, %v5829
    %v5831 = vrot.slane %v5823, %v5830
    %v5833 = vunpack.c.l.s4 1966171168
    %v5834 = vunpack.c.0.s8 %v5833
    %v5835 = vlaneseq
    %v5836 = vshrl.u32 %v5835, 7
    %v5837 = vsub.s32 %v5834, %v5836
    %v5838 = vrot.slane %v5824, %v5837
    %vm5841 = vcmask 253952
    %5842 = vst.msk [vmem:[#allocation5] sm:$0x1] %vm5841, %v5831
    %5843 = vst.msk [vmem:[#allocation5 + $0x1] sm:$0x1] %vm5841, %v5838
    // Predicated region
    $region26: #{tpu_custom_call.1} parent=1 // pred_check
      _
    $region27: #{tpu_custom_call.1} parent=1 // pred_check_branch
      %5845 = sbr.rel (0) target = $region29
    $region28: #{tpu_custom_call.1} parent=1 // pred_region
      %s5847 = ssub.s32 32, 32
      %5848 = vsyncadd [#allocation4], %s5847
      %s5849 = sshll.u32 [#allocation5], 4
      %s5850 = int_to_ptr.vmem [resolvable:$true] %s5849
      %5855 = dma.vmem_to_hbm [thread:$0]  %s5850, 32, %s5, [#allocation4], 16, 16, 1
    $region29: #{tpu_custom_call.1} parent=1 // pred_fallthru
      _
    // Predicated region
    $region30: #{tpu_custom_call.1} parent=1 // pred_check
      _
    $region31: #{tpu_custom_call.1} parent=1 // pred_check_branch
      %5857 = sbr.rel (0) target = $region33
    $region32: #{tpu_custom_call.1} parent=1 // pred_region
      %5858 = dma.done [#allocation4], 32
    $region33: #{tpu_custom_call.1} parent=1 // pred_fallthru
      _
    %5859 = vsyncpa [#allocation3], 1
    %5860 = vsyncpa [#allocation4], 1

</llo_original>
